<compile_context>
chip_gen: v6e
topology: v6e:2x2x1
jax: 0.10.0
libtpu: 0.0.40
codegen_flags: <defaults>
</compile_context>

<pallas_src>
import jax
import jax.numpy as jnp
from jax.experimental import pallas as pl
from jax.experimental.pallas import tpu as pltpu

DIM = 64          # channels (forced by the module's rearrange h=8, s=8)
NUM_HEADS = 8
HEAD_DIM = DIM // NUM_HEADS
SCALE = HEAD_DIM ** (-0.5)


def _attention_kernel(x_ref, wqkv_ref, wproj_ref, bproj_ref, o_ref):
    # x_ref    : (1, C, N)  channel-major tokens of ONE batch element
    # wqkv_ref : (3C, C)    qkv weight, PyTorch (out, in) layout, q rows pre-scaled
    # wproj_ref: (C, C)     proj weight, PyTorch (out, in) layout
    # bproj_ref: (C, 1)     proj bias (column, broadcast over tokens)
    # o_ref    : (1, C, N)  channel-major output for this batch element
    xt = x_ref[0]                                                  # (C, N)
    N = xt.shape[1]

    # QKV projection: one channel-major MXU matmul (M=3C, K=C).  qkv_bias=False.
    qkvt = jnp.dot(wqkv_ref[...], xt,
                   preferred_element_type=jnp.float32)             # (3C, N)

    # q / k / v and head splits: sublane slices + free reshapes (no lane slicing).
    qt = qkvt[0:DIM].reshape(NUM_HEADS, HEAD_DIM, N)               # (H, hd, N), pre-scaled
    kt = qkvt[DIM:2 * DIM].reshape(NUM_HEADS, HEAD_DIM, N)         # (H, hd, N)
    vt = qkvt[2 * DIM:3 * DIM].reshape(NUM_HEADS, HEAD_DIM, N)     # (H, hd, N)

    # Scores for all heads: contract over head_dim on the leading (sublane) axis,
    # i.e. the transpose is folded into the MXU operand — no swapaxes relayout.
    s = jnp.einsum('hdn,hdm->hnm', qt, kt,
                   preferred_element_type=jnp.float32)             # (H, N, N)

    # Softmax over keys, kept in f32; reciprocal goes to the EUP slot.
    s_max = jnp.max(s, axis=-1, keepdims=True)
    p = jnp.exp(s - s_max)
    denom = jnp.sum(p, axis=-1, keepdims=True)
    p = p * pl.reciprocal(denom, approx=True)
    # attn_drop is identity (p=0.0 / eval mode).

    # PV for all heads at once, produced directly in channel-major layout.
    ot = jnp.einsum('hdm,hnm->hdn', vt, p,
                    preferred_element_type=jnp.float32)            # (H, hd, N)

    # Merge heads back onto the channel (sublane) axis — free reshape, no concat.
    ctx = ot.reshape(DIM, N)                                       # (C, N)

    # Output projection + bias.  proj_drop is identity.
    out = jnp.dot(wproj_ref[...], ctx,
                  preferred_element_type=jnp.float32) + bproj_ref[...]
    o_ref[0] = out.astype(o_ref.dtype)


def make_attention(w_qkv, w_proj, b_proj):
    """One-time parameter prep (hoisted out of the per-call path); returns a
    jitted function x_nchw -> y_nchw matching the PyTorch module's forward."""
    assert w_qkv.shape == (3 * DIM, DIM) and w_proj.shape == (DIM, DIM)

    # Fold the softmax scale into the q rows of the qkv weight (done ONCE here,
    # not per call).  PyTorch (out, in) weights are used untransposed because
    # the kernel matmuls are channel-major (W @ X^T).
    wqkv_s = jnp.concatenate([w_qkv[:DIM] * SCALE, w_qkv[DIM:]], axis=0)  # (3C, C)
    bproj_col = b_proj.reshape(DIM, 1)                                    # (C, 1)

    @jax.jit
    def attention(x_nchw):
        B, C, H, W = x_nchw.shape
        assert C == DIM, "module hard-codes 8 heads x head_dim 8 => C must be 64"
        N = H * W

        # (B, C, H, W) is already channel-major per batch element: free reshape,
        # no HBM transpose on either side of the pallas_call.
        x = x_nchw.reshape(B, C, N)

        out = pl.pallas_call(
            _attention_kernel,
            out_shape=jax.ShapeDtypeStruct((B, C, N), x_nchw.dtype),
            grid_spec=pltpu.PrefetchScalarGridSpec(
                num_scalar_prefetch=0,
                grid=(B,),                                   # one step per batch element
                in_specs=[
                    pl.BlockSpec((1, C, N), lambda b: (b, 0, 0)),
                    pl.BlockSpec((3 * C, C), lambda b: (0, 0)),   # weights stay resident
                    pl.BlockSpec((C, C), lambda b: (0, 0)),
                    pl.BlockSpec((C, 1), lambda b: (0, 0)),
                ],
                out_specs=pl.BlockSpec((1, C, N), lambda b: (b, 0, 0)),
            ),
            compiler_params=pltpu.CompilerParams(
                dimension_semantics=("parallel",)),          # v7x: shard batch over 2 TCs
        )(x, wqkv_s, w_proj, bproj_col)

        return out.reshape(B, C, H, W)

    return attention


def attention_ref(x_nchw, w_qkv, w_proj, b_proj):
    """Pure-JAX reference mirroring the PyTorch forward."""
    B, C, H, W = x_nchw.shape
    N = H * W
    x = jnp.transpose(x_nchw, (0, 2, 3, 1)).reshape(B, N, C)
    qkv = x @ w_qkv.T                                             # (B, N, 3C)
    qkv = qkv.reshape(B, N, 3, NUM_HEADS, HEAD_DIM).transpose(2, 0, 3, 1, 4)
    q, k, v = qkv[0], qkv[1], qkv[2]                              # (B, h, N, hd)
    attn = jnp.einsum('bhnd,bhmd->bhnm', q, k) * SCALE
    attn = jax.nn.softmax(attn, axis=-1)
    y = jnp.einsum('bhnm,bhmd->bhnd', attn, v)                    # (B, h, N, hd)
    y = y.transpose(0, 2, 1, 3).reshape(B, N, C)
    y = y @ w_proj.T + b_proj
    return jnp.transpose(y.reshape(B, H, W, C), (0, 3, 1, 2))


if __name__ == "__main__":
    key = jax.random.PRNGKey(0)
    kx, kq, kp, kb = jax.random.split(key, 4)

    B, C, H, W = 2, DIM, 8, 8            # dim=64 forced by the module; spatial 8x8
    x = jax.random.normal(kx, (B, C, H, W), dtype=jnp.float32)

    # Deterministic parameter init (PyTorch shapes: (out, in) weights).
    w_qkv = jax.random.normal(kq, (3 * DIM, DIM), dtype=jnp.float32) * 0.05
    w_proj = jax.random.normal(kp, (DIM, DIM), dtype=jnp.float32) * 0.05
    b_proj = jax.random.normal(kb, (DIM,), dtype=jnp.float32) * 0.05

    attention = make_attention(w_qkv, w_proj, b_proj)   # one-time param prep

    out = attention(x)
    out = jax.block_until_ready(out)

    ref = attention_ref(x, w_qkv, w_proj, b_proj)
    assert out.shape == (B, C, H, W)
    assert jnp.all(jnp.isfinite(out))
    assert jnp.allclose(out, ref, atol=1e-2, rtol=1e-2)

    print("KERNEL_OK")
</pallas_src>

<mosaic_0001>
module attributes {stable_mosaic.version = 11 : i64} {
  func.func @_attention_kernel(%arg0: i32, %arg1: memref<1x64x64xf32, #tpu.memory_space<vmem>>, %arg2: memref<192x64xf32, #tpu.memory_space<vmem>>, %arg3: memref<64x64xf32, #tpu.memory_space<vmem>>, %arg4: memref<64x1xf32, #tpu.memory_space<vmem>>, %arg5: memref<1x64x64xf32, #tpu.memory_space<vmem>>) attributes {dimension_semantics = [#tpu.dimension_semantics<parallel>], iteration_bounds = array<i64: 2>, scalar_prefetch = 0 : i64, scratch_operands = 0 : i64, tpu.core_type = #tpu.core_type<tc>, window_params = [{transform_indices = @transform_0, window_bounds = array<i64: 1, 64, 64>}, {pipeline_mode = #tpu.pipeline_mode<synchronous>, transform_indices = @transform_1, window_bounds = array<i64: 192, 64>}, {pipeline_mode = #tpu.pipeline_mode<synchronous>, transform_indices = @transform_2, window_bounds = array<i64: 64, 64>}, {pipeline_mode = #tpu.pipeline_mode<synchronous>, transform_indices = @transform_3, window_bounds = array<i64: 64, 1>}, {transform_indices = @transform_4, window_bounds = array<i64: 1, 64, 64>}]} {
    %c0 = arith.constant 0 : index
    %c0_0 = arith.constant 0 : index
    %c0_1 = arith.constant 0 : index
    %0 = vector.load %arg1[%c0, %c0_0, %c0_1] : memref<1x64x64xf32, #tpu.memory_space<vmem>>, vector<1x64x64xf32>
    %1 = vector.shape_cast %0 : vector<1x64x64xf32> to vector<64x64xf32>
    %c0_2 = arith.constant 0 : index
    %c0_3 = arith.constant 0 : index
    %2 = vector.load %arg2[%c0_2, %c0_3] : memref<192x64xf32, #tpu.memory_space<vmem>>, vector<192x64xf32>
    %cst = arith.constant dense<0.000000e+00> : vector<192x64xf32>
    %3 = tpu.matmul %2, %1, %cst {dimension_numbers = #tpu.dot_dimension_numbers<[1], [0], [0], [1], [0, 0, 1, 1], [], []>} : vector<192x64xf32>, vector<64x64xf32>, vector<192x64xf32> -> vector<192x64xf32>
    %4 = vector.extract_strided_slice %3 {offsets = [0, 0], sizes = [64, 64], strides = [1, 1]} : vector<192x64xf32> to vector<64x64xf32>
    %5 = vector.shape_cast %4 : vector<64x64xf32> to vector<8x8x64xf32>
    %6 = vector.extract_strided_slice %3 {offsets = [64, 0], sizes = [64, 64], strides = [1, 1]} : vector<192x64xf32> to vector<64x64xf32>
    %7 = vector.shape_cast %6 : vector<64x64xf32> to vector<8x8x64xf32>
    %8 = vector.extract_strided_slice %3 {offsets = [128, 0], sizes = [64, 64], strides = [1, 1]} : vector<192x64xf32> to vector<64x64xf32>
    %9 = vector.shape_cast %8 : vector<64x64xf32> to vector<8x8x64xf32>
    "tpu.trace_start"() <{level = 10 : i32, message = "hdn,hdm->hnm"}> : () -> ()
    %cst_4 = arith.constant dense<0.000000e+00> : vector<8x64x64xf32>
    %10 = tpu.matmul %5, %7, %cst_4 {dimension_numbers = #tpu.dot_dimension_numbers<[1], [1], [2], [2], [0, 0, 0, 2, 1, 2], [0], [0]>} : vector<8x8x64xf32>, vector<8x8x64xf32>, vector<8x64x64xf32> -> vector<8x64x64xf32>
    "tpu.trace_stop"() : () -> ()
    %cst_5 = arith.constant dense<0xFF800000> : vector<8x64xf32>
    %11 = vector.multi_reduction <maximumf>, %10, %cst_5 [2] : vector<8x64x64xf32> to vector<8x64xf32>
    %12 = vector.shape_cast %11 : vector<8x64xf32> to vector<8x64x1xf32>
    %13 = vector.broadcast %12 : vector<8x64x1xf32> to vector<8x64x64xf32>
    %14 = arith.subf %10, %13 : vector<8x64x64xf32>
    %15 = math.exp %14 : vector<8x64x64xf32>
    %cst_6 = arith.constant dense<0.000000e+00> : vector<8x64xf32>
    %16 = vector.multi_reduction <add>, %15, %cst_6 [2] : vector<8x64x64xf32> to vector<8x64xf32>
    %17 = vector.shape_cast %16 : vector<8x64xf32> to vector<8x64x1xf32>
    %18 = tpu.reciprocal %17 {approx = true} : vector<8x64x1xf32> -> vector<8x64x1xf32>
    %19 = vector.broadcast %18 : vector<8x64x1xf32> to vector<8x64x64xf32>
    %20 = arith.mulf %15, %19 : vector<8x64x64xf32>
    "tpu.trace_start"() <{level = 10 : i32, message = "hdm,hnm->hdn"}> : () -> ()
    %cst_7 = arith.constant dense<0.000000e+00> : vector<8x8x64xf32>
    %21 = tpu.matmul %9, %20, %cst_7 {dimension_numbers = #tpu.dot_dimension_numbers<[2], [2], [1], [1], [0, 0, 0, 1, 1, 1], [0], [0]>} : vector<8x8x64xf32>, vector<8x64x64xf32>, vector<8x8x64xf32> -> vector<8x8x64xf32>
    "tpu.trace_stop"() : () -> ()
    %22 = vector.shape_cast %21 : vector<8x8x64xf32> to vector<64x64xf32>
    %c0_8 = arith.constant 0 : index
    %c0_9 = arith.constant 0 : index
    %23 = vector.load %arg3[%c0_8, %c0_9] : memref<64x64xf32, #tpu.memory_space<vmem>>, vector<64x64xf32>
    %cst_10 = arith.constant dense<0.000000e+00> : vector<64x64xf32>
    %24 = tpu.matmul %23, %22, %cst_10 {dimension_numbers = #tpu.dot_dimension_numbers<[1], [0], [0], [1], [0, 0, 1, 1], [], []>} : vector<64x64xf32>, vector<64x64xf32>, vector<64x64xf32> -> vector<64x64xf32>
    %c0_11 = arith.constant 0 : index
    %c0_12 = arith.constant 0 : index
    %25 = vector.load %arg4[%c0_11, %c0_12] : memref<64x1xf32, #tpu.memory_space<vmem>>, vector<64x1xf32>
    %26 = vector.broadcast %25 : vector<64x1xf32> to vector<64x64xf32>
    %27 = arith.addf %24, %26 : vector<64x64xf32>
    %c0_13 = arith.constant 0 : index
    %c0_14 = arith.constant 0 : index
    %c0_15 = arith.constant 0 : index
    %28 = vector.load %arg5[%c0_13, %c0_14, %c0_15] : memref<1x64x64xf32, #tpu.memory_space<vmem>>, vector<1x64x64xf32>
    %29 = vector.shape_cast %28 : vector<1x64x64xf32> to vector<64x64xf32>
    %30 = vector.shape_cast %27 : vector<64x64xf32> to vector<1x64x64xf32>
    tpu.vector_store %arg5[%c0_13, %c0_14, %c0_15], %30 {strides = array<i32>} : memref<1x64x64xf32, #tpu.memory_space<vmem>>, vector<1x64x64xf32>,
    return
  }
  func.func @transform_0(%arg0: i32) -> (i32, i32, i32) {
    %c0_i32 = arith.constant 0 : i32
    %c0_i32_0 = arith.constant 0 : i32
    %c0_i32_1 = arith.constant 0 : i32
    return %arg0, %c0_i32, %c0_i32_0 : i32, i32, i32
  }
  func.func @transform_1(%arg0: i32) -> (i32, i32) {
    %c0_i32 = arith.constant 0 : i32
    %c0_i32_0 = arith.constant 0 : i32
    %c0_i32_1 = arith.constant 0 : i32
    return %c0_i32, %c0_i32_0 : i32, i32
  }
  func.func @transform_2(%arg0: i32) -> (i32, i32) {
    %c0_i32 = arith.constant 0 : i32
    %c0_i32_0 = arith.constant 0 : i32
    %c0_i32_1 = arith.constant 0 : i32
    return %c0_i32, %c0_i32_0 : i32, i32
  }
  func.func @transform_3(%arg0: i32) -> (i32, i32) {
    %c0_i32 = arith.constant 0 : i32
    %c0_i32_0 = arith.constant 0 : i32
    %c0_i32_1 = arith.constant 0 : i32
    return %c0_i32, %c0_i32_0 : i32, i32
  }
  func.func @transform_4(%arg0: i32) -> (i32, i32, i32) {
    %c0_i32 = arith.constant 0 : i32
    %c0_i32_0 = arith.constant 0 : i32
    %c0_i32_1 = arith.constant 0 : i32
    return %arg0, %c0_i32, %c0_i32_0 : i32, i32, i32
  }
}

</mosaic_0001>

<llo_original>
// kernel: attention.1
$region0: #{attention.1}
  #allocation0 [shape = 'u32[]', space=smem, size = 0x4, offset = 0x4, fixed_abs, tag = 'smem constant byte address 0x4 - core index']
  #allocation1 [shape = 'u32[144,128]{1,0:T(1,128)}', space=vmem, size = 0x12000, scoped, tag = 'internal scratch']
  %s0 = inlined_call_operand.vmem [shape: f32[2,64,64], index: 0, kind: input, shape index: {}]
  %s1 = inlined_call_operand.vmem [shape: f32[192,64], index: 1, kind: input, shape index: {}]
  %s2 = inlined_call_operand.hbm [shape: f32[64,64], index: 2, kind: input, shape index: {}]
  %s3 = inlined_call_operand.vmem [shape: f32[64,1], index: 3, kind: input, shape index: {}]
  %s4 = inlined_call_operand.vmem [shape: f32[2,64,64], index: 4, kind: output, shape index: {}]
  %s5 = sld [smem:[#allocation0]]
  $region53: #{attention.1} parent=0
    _
  %s7 = ssub.s32 1, %s5
  %s8 = scalar_select 0, %s7, %s5
  $region1: #{attention.1} parent=0
    #allocation2 [shape = 'u8[32768]{0}', space=vmem, size = 0x8000, scoped, tag = 'input window, operand 2, single buffered']
    #allocation3 [shape = 's32[2]{0}', space=sflag, size = 0x8, scoped, tag = 'scoped memory for attention.1']
    %9 = vsyncpa [#allocation3], 0
    loop: start=0, step=1, limit=4
    $region2: #{attention.1} parent=1 // loop_pre_header
      _
    $region3: #{attention.1} parent=1 // loop_header
      %s11 = sphi 0, %s15
      %p12 = scmp.ge.s32.totalorder %s11, 4
      %s21 = sphi 0, %s23
      %s24 = sphi 0, %s21
      %s25 = sphi 0, %s24
      %s41 = sphi 0, %s25
      %s45 = sphi 0, %s45
      %s47 = sphi 0, %s45
      %s48 = sphi 0, %s47
      %s62 = sphi 0, %s48
      %s66 = sphi 0, %s66
      %s68 = sphi 0, %s66
      %s69 = sphi 0, %s68
      %s83 = sphi 0, %s69
      %s87 = sphi 0, %s87
      %s89 = sphi 0, %s87
      %s90 = sphi 0, %s89
      %s104 = sphi 0, %s90
      %s110 = sphi 0, %s112
      %s113 = sphi 0, %s110
      %s114 = sphi 0, %s113
      %s130 = sphi 0, %s114
    $region4: #{attention.1} parent=1 // loop_header_branch
      %14 = sbr.rel (%p12) target = $region8
    $region5: #{attention.1} parent=1 // loop_body
      %s16 = ssub.s32 %s11, 1
      %s17 = ssub.s32 %s11, 2
      %s18 = sadd.s32 %s11, 1
      %s19 = ssub.s32 %s11, %s18
      %p20 = scmp.eq.s32.totalorder %s19, 0
      %s22 = sadd.s32 %s21, 1
      %s23 = scalar_select %p20, %s21, %s22
      %p26 = pneg %p20
      %p27 = scmp.eq.s32.totalorder %s11, 1
      %p28 = por %p26, %p27
      %p29 = scmp.ne.s32.totalorder %s21, %s24
      %p30 = scmp.eq.s32.totalorder %s11, 0
      %p31 = por %p29, %p30
      %p32 = scmp.ne.s32.totalorder %s21, %s24
      %p33 = scmp.eq.s32.totalorder %s16, 1
      %p34 = por %p32, %p33
      %p35 = scmp.ne.s32.totalorder %s24, %s25
      %p36 = scmp.eq.s32.totalorder %s16, 0
      %p37 = por %p35, %p36
      %p38 = scmp.ne.s32.totalorder %s24, %s25
      %p39 = scmp.eq.s32.totalorder %s17, 1
      %p40 = por %p38, %p39
      %p42 = scmp.ne.s32.totalorder %s25, %s41
      %p43 = scmp.eq.s32.totalorder %s17, 0
      %p44 = por %p42, %p43
      %s46 = sadd.s32 %s45, 1
      %p49 = scmp.eq.s32.totalorder %s11, 1
      %p50 = scmp.ne.s32.totalorder %s45, %s47
      %p51 = scmp.eq.s32.totalorder %s11, 0
      %p52 = por %p50, %p51
      %p53 = scmp.ne.s32.totalorder %s45, %s47
      %p54 = scmp.eq.s32.totalorder %s16, 1
      %p55 = por %p53, %p54
      %p56 = scmp.ne.s32.totalorder %s47, %s48
      %p57 = scmp.eq.s32.totalorder %s16, 0
      %p58 = por %p56, %p57
      %p59 = scmp.ne.s32.totalorder %s47, %s48
      %p60 = scmp.eq.s32.totalorder %s17, 1
      %p61 = por %p59, %p60
      %p63 = scmp.ne.s32.totalorder %s48, %s62
      %p64 = scmp.eq.s32.totalorder %s17, 0
      %p65 = por %p63, %p64
      %s67 = sadd.s32 %s66, 1
      %p70 = scmp.eq.s32.totalorder %s11, 1
      %p71 = scmp.ne.s32.totalorder %s66, %s68
      %p72 = scmp.eq.s32.totalorder %s11, 0
      %p73 = por %p71, %p72
      %p74 = scmp.ne.s32.totalorder %s66, %s68
      %p75 = scmp.eq.s32.totalorder %s16, 1
      %p76 = por %p74, %p75
      %p77 = scmp.ne.s32.totalorder %s68, %s69
      %p78 = scmp.eq.s32.totalorder %s16, 0
      %p79 = por %p77, %p78
      %p80 = scmp.ne.s32.totalorder %s68, %s69
      %p81 = scmp.eq.s32.totalorder %s17, 1
      %p82 = por %p80, %p81
      %p84 = scmp.ne.s32.totalorder %s69, %s83
      %p85 = scmp.eq.s32.totalorder %s17, 0
      %p86 = por %p84, %p85
      %s88 = sadd.s32 %s87, 1
      %p91 = scmp.eq.s32.totalorder %s11, 1
      %p92 = scmp.ne.s32.totalorder %s87, %s89
      %p93 = scmp.eq.s32.totalorder %s11, 0
      %p94 = por %p92, %p93
      %p95 = scmp.ne.s32.totalorder %s87, %s89
      %p96 = scmp.eq.s32.totalorder %s16, 1
      %p97 = por %p95, %p96
      %p98 = scmp.ne.s32.totalorder %s89, %s90
      %p99 = scmp.eq.s32.totalorder %s16, 0
      %p100 = por %p98, %p99
      %p101 = scmp.ne.s32.totalorder %s89, %s90
      %p102 = scmp.eq.s32.totalorder %s17, 1
      %p103 = por %p101, %p102
      %p105 = scmp.ne.s32.totalorder %s90, %s104
      %p106 = scmp.eq.s32.totalorder %s17, 0
      %p107 = por %p105, %p106
      %s108 = ssub.s32 %s11, %s18
      %p109 = scmp.eq.s32.totalorder %s108, 0
      %s111 = sadd.s32 %s110, 1
      %s112 = scalar_select %p109, %s110, %s111
      %p115 = pneg %p109
      %p116 = scmp.eq.s32.totalorder %s11, 1
      %p117 = por %p115, %p116
      %p118 = scmp.ne.s32.totalorder %s110, %s113
      %p119 = scmp.eq.s32.totalorder %s11, 0
      %p120 = por %p118, %p119
      %p121 = scmp.ne.s32.totalorder %s110, %s113
      %p122 = scmp.eq.s32.totalorder %s16, 1
      %p123 = por %p121, %p122
      %p124 = scmp.ne.s32.totalorder %s113, %s114
      %p125 = scmp.eq.s32.totalorder %s16, 0
      %p126 = por %p124, %p125
      %p127 = scmp.ne.s32.totalorder %s113, %s114
      %p128 = scmp.eq.s32.totalorder %s17, 1
      %p129 = por %p127, %p128
      %p131 = scmp.ne.s32.totalorder %s114, %s130
      %p132 = scmp.eq.s32.totalorder %s17, 0
      %p133 = por %p131, %p132
      %p134 = scmp.le.s32.totalorder 1, %s11
      %p135 = scmp.lt.s32.totalorder %s11, 3
      %p136 = pnand %p134, %p135
      %p137 = pneg %p136
      // Predicated region
      $region9: #{attention.1} parent=5 // pred_check
        _
      $region10: #{attention.1} parent=5 // pred_check_branch
        %139 = sbr.rel (%p136) target = $region12
      $region11: #{attention.1} parent=5 // pred_region
        %s140 = ssub.s32 %s11, 1
        // Predicated region
        $region13: #{attention.1} parent=11 // pred_check
          %p141 = pneg %p58
        $region14: #{attention.1} parent=11 // pred_check_branch
          %143 = sbr.rel (%p141) target = $region16
        $region15: #{attention.1} parent=11 // pred_region
          _
        $region16: #{attention.1} parent=11 // pred_fallthru
          _
        // Predicated region
        $region17: #{attention.1} parent=11 // pred_check
          %p144 = pneg %p79
        $region18: #{attention.1} parent=11 // pred_check_branch
          %146 = sbr.rel (%p144) target = $region20
        $region19: #{attention.1} parent=11 // pred_region
          %s148 = ssub.s32 1024, 1024
          %149 = vsyncadd [#allocation3], %s148
          %s150 = sshll.u32 [#allocation2], 4
          %s151 = int_to_ptr.vmem [resolvable:$true] %s150
          %156 = dma.hbm_to_vmem [thread:$0]  %s2, 1024, %s151, [#allocation3], 128, 128, 8
        $region20: #{attention.1} parent=11 // pred_fallthru
          _
        // Predicated region
        $region21: #{attention.1} parent=11 // pred_check
          %p157 = pneg %p100
        $region22: #{attention.1} parent=11 // pred_check_branch
          %159 = sbr.rel (%p157) target = $region24
        $region23: #{attention.1} parent=11 // pred_region
          _
        $region24: #{attention.1} parent=11 // pred_fallthru
          _
      $region12: #{attention.1} parent=5 // pred_fallthru
        _
      %p160 = scmp.lt.s32.totalorder %s11, 2
      // Predicated region
      $region25: #{attention.1} parent=5 // pred_check
        %p161 = pneg %p160
      $region26: #{attention.1} parent=5 // pred_check_branch
        %163 = sbr.rel (%p161) target = $region28
      $region27: #{attention.1} parent=5 // pred_region
        // Predicated region
        $region29: #{attention.1} parent=27 // pred_check
          %p164 = pneg %p31
        $region30: #{attention.1} parent=27 // pred_check_branch
          %166 = sbr.rel (%p164) target = $region32
        $region31: #{attention.1} parent=27 // pred_region
          %p167 = scmp.lt.s32.totalorder %s11, 1
          %s168 = scalar_select %p167, %s11, 1
          %s169 = smul.addr %s168, 8
          %s170 = smul.addr %s169, 8
          %s171 = scalar_lea.vmem %s0, %s170
        $region32: #{attention.1} parent=27 // pred_fallthru
          _
      $region28: #{attention.1} parent=5 // pred_fallthru
        _
      %p172 = scmp.le.s32.totalorder 1, %s11
      %p173 = scmp.lt.s32.totalorder %s11, 3
      %p174 = pnand %p172, %p173
      %p175 = pneg %p174
      // Predicated region
      $region33: #{attention.1} parent=5 // pred_check
        _
      $region34: #{attention.1} parent=5 // pred_check_branch
        %177 = sbr.rel (%p174) target = $region36
      $region35: #{attention.1} parent=5 // pred_region
        %s178 = ssub.s32 %s11, 1
        // Predicated region
        $region37: #{attention.1} parent=35 // pred_check
          %p179 = pneg %p79
        $region38: #{attention.1} parent=35 // pred_check_branch
          %181 = sbr.rel (%p179) target = $region40
        $region39: #{attention.1} parent=35 // pred_region
          %182 = dma.done [#allocation3], 1024
        $region40: #{attention.1} parent=35 // pred_fallthru
          _
        %p183 = scmp.lt.s32.totalorder %s16, 1
        %s184 = scalar_select %p183, %s16, 1
        %s185 = smul.addr %s184, 8
        %s186 = smul.addr %s185, 8
        %s187 = scalar_lea.vmem %s0, %s186
        %p188 = pneg %p37
        %p189 = pneg %p34
        %p190 = pneg %p58
        %p191 = pneg %p55
        %p192 = pneg %p79
        %p193 = pneg %p76
        %p194 = pneg %p100
        %p195 = pneg %p97
        %p196 = pneg %p126
        %p197 = pneg %p123
        %p198 = scmp.lt.s32.totalorder %s16, 1
        %s199 = scalar_select %p198, %s16, 1
        %s200 = smul.addr %s199, 8
        %s201 = smul.addr %s200, 8
        %s202 = scalar_lea.vmem %s4, %s201
        %p203 = scmp.lt.s32.totalorder %s16, 1
        %s204 = scalar_select %p203, %s16, 1
        %s205 = smul.addr %s204, 8
        %s206 = smul.addr %s205, 8
        %s207 = scalar_lea.vmem %s0, %s206
        %p208 = scmp.lt.s32.totalorder %s16, 1
        %s209 = scalar_select %p208, %s16, 1
        %s210 = smul.addr %s209, 8
        %s211 = smul.addr %s210, 8
        %s212 = scalar_lea.vmem %s4, %s211
        %v213 = vld [vmem:[%s207] sm:$0xff]
        %v214 = vld [vmem:[%s207 + $0x8] sm:$0xff]
        %v215 = vld [vmem:[%s207 + $0x10] sm:$0xff]
        %v216 = vld [vmem:[%s207 + $0x18] sm:$0xff]
        %v217 = vld [vmem:[%s207 + $0x20] sm:$0xff]
        %v218 = vld [vmem:[%s207 + $0x28] sm:$0xff]
        %v219 = vld [vmem:[%s207 + $0x30] sm:$0xff]
        %v220 = vld [vmem:[%s207 + $0x38] sm:$0xff]
        %v221 = vld [vmem:[%s1] sm:$0xff]
        %v222 = vld [vmem:[%s1 + $0x8] sm:$0xff]
        %v223 = vld [vmem:[%s1 + $0x10] sm:$0xff]
        %v224 = vld [vmem:[%s1 + $0x18] sm:$0xff]
        %v225 = vld [vmem:[%s1 + $0x20] sm:$0xff]
        %v226 = vld [vmem:[%s1 + $0x28] sm:$0xff]
        %v227 = vld [vmem:[%s1 + $0x30] sm:$0xff]
        %v228 = vld [vmem:[%s1 + $0x38] sm:$0xff]
        %v229 = vld [vmem:[%s1 + $0x40] sm:$0xff]
        %v230 = vld [vmem:[%s1 + $0x48] sm:$0xff]
        %v231 = vld [vmem:[%s1 + $0x50] sm:$0xff]
        %v232 = vld [vmem:[%s1 + $0x58] sm:$0xff]
        %v233 = vld [vmem:[%s1 + $0x60] sm:$0xff]
        %v234 = vld [vmem:[%s1 + $0x68] sm:$0xff]
        %v235 = vld [vmem:[%s1 + $0x70] sm:$0xff]
        %v236 = vld [vmem:[%s1 + $0x78] sm:$0xff]
        %v237 = vld [vmem:[%s1 + $0x80] sm:$0xff]
        %v238 = vld [vmem:[%s1 + $0x88] sm:$0xff]
        %v239 = vld [vmem:[%s1 + $0x90] sm:$0xff]
        %v240 = vld [vmem:[%s1 + $0x98] sm:$0xff]
        %v241 = vld [vmem:[%s1 + $0xa0] sm:$0xff]
        %v242 = vld [vmem:[%s1 + $0xa8] sm:$0xff]
        %v243 = vld [vmem:[%s1 + $0xb0] sm:$0xff]
        %v244 = vld [vmem:[%s1 + $0xb8] sm:$0xff]
        %vm245 = vcmask 523264
        %v247 = vsel %vm245, %v221, 0
        %v250 = vsel %vm245, %v222, 0
        %v253 = vsel %vm245, %v223, 0
        %v256 = vsel %vm245, %v224, 0
        %v259 = vsel %vm245, %v225, 0
        %v262 = vsel %vm245, %v226, 0
        %v265 = vsel %vm245, %v227, 0
        %v268 = vsel %vm245, %v228, 0
        %v271 = vsel %vm245, %v229, 0
        %v274 = vsel %vm245, %v230, 0
        %v277 = vsel %vm245, %v231, 0
        %v280 = vsel %vm245, %v232, 0
        %v283 = vsel %vm245, %v233, 0
        %v286 = vsel %vm245, %v234, 0
        %v289 = vsel %vm245, %v235, 0
        %v292 = vsel %vm245, %v236, 0
        %v295 = vsel %vm245, %v237, 0
        %v298 = vsel %vm245, %v238, 0
        %v301 = vsel %vm245, %v239, 0
        %v304 = vsel %vm245, %v240, 0
        %v307 = vsel %vm245, %v241, 0
        %v310 = vsel %vm245, %v242, 0
        %v313 = vsel %vm245, %v243, 0
        %v316 = vsel %vm245, %v244, 0
        %318 = vmatprep.subr.mxu0 0.0
        %319 = vmatpush1.msra.mxu0 0.0
        %320 = vmatprep.subr.mxu0 0.0
        %321 = vmatpush1.msra.mxu0 0.0
        %322 = vmatprep.subr.mxu0 0.0
        %323 = vmatpush1.msra.mxu0 0.0
        %324 = vmatprep.subr.mxu0 0.0
        %325 = vmatpush1.msra.mxu0 0.0
        %326 = vmatprep.subr.mxu0 0.0
        %327 = vmatpush1.msra.mxu0 0.0
        %328 = vmatprep.subr.mxu0 0.0
        %329 = vmatpush1.msra.mxu0 0.0
        %330 = vmatprep.subr.mxu0 0.0
        %331 = vmatpush1.msra.mxu0 0.0
        %332 = vmatprep.subr.mxu0 0.0
        %333 = vmatpush1.msra.mxu0 0.0
        %334 = vmatprep.subr.mxu0 0.0
        %335 = vmatpush1.msra.mxu0 %v220
        %336 = vmatprep.subr.mxu0 0.0
        %337 = vmatpush1.msra.mxu0 %v219
        %338 = vmatprep.subr.mxu0 0.0
        %339 = vmatpush1.msra.mxu0 %v218
        %340 = vmatprep.subr.mxu0 0.0
        %341 = vmatpush1.msra.mxu0 %v217
        %342 = vmatprep.subr.mxu0 0.0
        %343 = vmatpush1.msra.mxu0 %v216
        %344 = vmatprep.subr.mxu0 0.0
        %345 = vmatpush1.msra.mxu0 %v215
        %346 = vmatprep.subr.mxu0 0.0
        %347 = vmatpush1.msra.mxu0 %v214
        %348 = vmatprep.subr.mxu0 0.0
        %349 = vmatpush1.msra.mxu0 %v213
        %350 = vmatprep.subr.mxu0 0.0
        %351 = vmatpush2.msra.mxu0 0.0
        %352 = vmatprep.subr.mxu0 0.0
        %353 = vmatpush2.msra.mxu0 0.0
        %354 = vmatprep.subr.mxu0 0.0
        %355 = vmatpush2.msra.mxu0 0.0
        %356 = vmatprep.subr.mxu0 0.0
        %357 = vmatpush2.msra.mxu0 0.0
        %358 = vmatprep.subr.mxu0 0.0
        %359 = vmatpush2.msra.mxu0 0.0
        %360 = vmatprep.subr.mxu0 0.0
        %361 = vmatpush2.msra.mxu0 0.0
        %362 = vmatprep.subr.mxu0 0.0
        %363 = vmatpush2.msra.mxu0 0.0
        %364 = vmatprep.subr.mxu0 0.0
        %365 = vmatpush2.msra.mxu0 0.0
        %366 = vmatprep.subr.mxu0 0.0
        %367 = vmatpush2.msra.mxu0 0.0
        %368 = vmatprep.subr.mxu0 0.0
        %369 = vmatpush2.msra.mxu0 0.0
        %370 = vmatprep.subr.mxu0 0.0
        %371 = vmatpush2.msra.mxu0 0.0
        %372 = vmatprep.subr.mxu0 0.0
        %373 = vmatpush2.msra.mxu0 0.0
        %374 = vmatprep.subr.mxu0 0.0
        %375 = vmatpush2.msra.mxu0 0.0
        %376 = vmatprep.subr.mxu0 0.0
        %377 = vmatpush2.msra.mxu0 0.0
        %378 = vmatprep.subr.mxu0 0.0
        %379 = vmatpush2.msra.mxu0 0.0
        %380 = vmatprep.subr.mxu0 0.0
        %381 = vmatpush2.msra.mxu0 0.0
        %382 = vmatprep.mubr.f32.mxu0 0.0
        %383 = vmatmul.mubr.f32.gmra.mxu0 %v247
        %v384 = vpop.f32.mrf.mxu0
        %v385 = vadd.f32 0.0, %v384
        %v386 = vpop.f32.mrf.mxu0
        %387 = vmatprep.mubr.f32.mxu0 0.0
        %388 = vmatmul.mubr.f32.gmra.mxu0 %v250
        %v389 = vpop.f32.mrf.mxu0
        %v390 = vadd.f32 0.0, %v389
        %v391 = vpop.f32.mrf.mxu0
        %392 = vmatprep.mubr.f32.mxu0 0.0
        %393 = vmatmul.mubr.f32.gmra.mxu0 %v253
        %v394 = vpop.f32.mrf.mxu0
        %v395 = vadd.f32 0.0, %v394
        %v396 = vpop.f32.mrf.mxu0
        %397 = vmatprep.mubr.f32.mxu0 0.0
        %398 = vmatmul.mubr.f32.gmra.mxu0 %v256
        %v399 = vpop.f32.mrf.mxu0
        %v400 = vadd.f32 0.0, %v399
        %v401 = vpop.f32.mrf.mxu0
        %402 = vmatprep.mubr.f32.mxu0 0.0
        %403 = vmatmul.mubr.f32.gmra.mxu0 %v259
        %v404 = vpop.f32.mrf.mxu0
        %v405 = vadd.f32 0.0, %v404
        %v406 = vpop.f32.mrf.mxu0
        %407 = vmatprep.mubr.f32.mxu0 0.0
        %408 = vmatmul.mubr.f32.gmra.mxu0 %v262
        %v409 = vpop.f32.mrf.mxu0
        %v410 = vadd.f32 0.0, %v409
        %v411 = vpop.f32.mrf.mxu0
        %412 = vmatprep.mubr.f32.mxu0 0.0
        %413 = vmatmul.mubr.f32.gmra.mxu0 %v265
        %v414 = vpop.f32.mrf.mxu0
        %v415 = vadd.f32 0.0, %v414
        %v416 = vpop.f32.mrf.mxu0
        %417 = vmatprep.mubr.f32.mxu0 0.0
        %418 = vmatmul.mubr.f32.gmra.mxu0 %v268
        %v419 = vpop.f32.mrf.mxu0
        %v420 = vadd.f32 0.0, %v419
        %v421 = vpop.f32.mrf.mxu0
        %422 = vmatprep.mubr.f32.mxu0 0.0
        %423 = vmatmul.mubr.f32.gmra.mxu0 %v271
        %v424 = vpop.f32.mrf.mxu0
        %v425 = vadd.f32 0.0, %v424
        %v426 = vpop.f32.mrf.mxu0
        %427 = vmatprep.mubr.f32.mxu0 0.0
        %428 = vmatmul.mubr.f32.gmra.mxu0 %v274
        %v429 = vpop.f32.mrf.mxu0
        %v430 = vadd.f32 0.0, %v429
        %v431 = vpop.f32.mrf.mxu0
        %432 = vmatprep.mubr.f32.mxu0 0.0
        %433 = vmatmul.mubr.f32.gmra.mxu0 %v277
        %v434 = vpop.f32.mrf.mxu0
        %v435 = vadd.f32 0.0, %v434
        %v436 = vpop.f32.mrf.mxu0
        %437 = vmatprep.mubr.f32.mxu0 0.0
        %438 = vmatmul.mubr.f32.gmra.mxu0 %v280
        %v439 = vpop.f32.mrf.mxu0
        %v440 = vadd.f32 0.0, %v439
        %v441 = vpop.f32.mrf.mxu0
        %442 = vmatprep.mubr.f32.mxu0 0.0
        %443 = vmatmul.mubr.f32.gmra.mxu0 %v283
        %v444 = vpop.f32.mrf.mxu0
        %v445 = vadd.f32 0.0, %v444
        %v446 = vpop.f32.mrf.mxu0
        %447 = vmatprep.mubr.f32.mxu0 0.0
        %448 = vmatmul.mubr.f32.gmra.mxu0 %v286
        %v449 = vpop.f32.mrf.mxu0
        %v450 = vadd.f32 0.0, %v449
        %v451 = vpop.f32.mrf.mxu0
        %452 = vmatprep.mubr.f32.mxu0 0.0
        %453 = vmatmul.mubr.f32.gmra.mxu0 %v289
        %v454 = vpop.f32.mrf.mxu0
        %v455 = vadd.f32 0.0, %v454
        %v456 = vpop.f32.mrf.mxu0
        %457 = vmatprep.mubr.f32.mxu0 0.0
        %458 = vmatmul.mubr.f32.gmra.mxu0 %v292
        %v459 = vpop.f32.mrf.mxu0
        %v460 = vadd.f32 0.0, %v459
        %v461 = vpop.f32.mrf.mxu0
        %462 = vmatprep.mubr.f32.mxu0 0.0
        %463 = vmatmul.mubr.f32.gmra.mxu0 %v295
        %v464 = vpop.f32.mrf.mxu0
        %v465 = vadd.f32 0.0, %v464
        %v466 = vpop.f32.mrf.mxu0
        %467 = vmatprep.mubr.f32.mxu0 0.0
        %468 = vmatmul.mubr.f32.gmra.mxu0 %v298
        %v469 = vpop.f32.mrf.mxu0
        %v470 = vadd.f32 0.0, %v469
        %v471 = vpop.f32.mrf.mxu0
        %472 = vmatprep.mubr.f32.mxu0 0.0
        %473 = vmatmul.mubr.f32.gmra.mxu0 %v301
        %v474 = vpop.f32.mrf.mxu0
        %v475 = vadd.f32 0.0, %v474
        %v476 = vpop.f32.mrf.mxu0
        %477 = vmatprep.mubr.f32.mxu0 0.0
        %478 = vmatmul.mubr.f32.gmra.mxu0 %v304
        %v479 = vpop.f32.mrf.mxu0
        %v480 = vadd.f32 0.0, %v479
        %v481 = vpop.f32.mrf.mxu0
        %482 = vmatprep.mubr.f32.mxu0 0.0
        %483 = vmatmul.mubr.f32.gmra.mxu0 %v307
        %v484 = vpop.f32.mrf.mxu0
        %v485 = vadd.f32 0.0, %v484
        %v486 = vpop.f32.mrf.mxu0
        %487 = vmatprep.mubr.f32.mxu0 0.0
        %488 = vmatmul.mubr.f32.gmra.mxu0 %v310
        %v489 = vpop.f32.mrf.mxu0
        %v490 = vadd.f32 0.0, %v489
        %v491 = vpop.f32.mrf.mxu0
        %492 = vmatprep.mubr.f32.mxu0 0.0
        %493 = vmatmul.mubr.f32.gmra.mxu0 %v313
        %v494 = vpop.f32.mrf.mxu0
        %v495 = vadd.f32 0.0, %v494
        %v496 = vpop.f32.mrf.mxu0
        %497 = vmatprep.mubr.f32.mxu0 0.0
        %498 = vmatmul.mubr.f32.gmra.mxu0 %v316
        %v499 = vpop.f32.mrf.mxu0
        %v500 = vadd.f32 0.0, %v499
        %v501 = vpop.f32.mrf.mxu0
        %502 = vdwg.mxu0
        %503 = vxpose.xlu0.b32.start [1/16] %v385, 128
        %504 = vxpose.xlu0.b32.cont [2/16] 0.0, 128
        %505 = vxpose.xlu0.b32.cont [3/16] 0.0, 128
        %506 = vxpose.xlu0.b32.cont [4/16] 0.0, 128
        %507 = vxpose.xlu0.b32.cont [5/16] 0.0, 128
        %508 = vxpose.xlu0.b32.cont [6/16] 0.0, 128
        %509 = vxpose.xlu0.b32.cont [7/16] 0.0, 128
        %510 = vxpose.xlu0.b32.cont [8/16] 0.0, 128
        %511 = vxpose.xlu0.b32.cont [9/16] 0.0, 128
        %512 = vxpose.xlu0.b32.cont [10/16] 0.0, 128
        %513 = vxpose.xlu0.b32.cont [11/16] 0.0, 128
        %514 = vxpose.xlu0.b32.cont [12/16] 0.0, 128
        %515 = vxpose.xlu0.b32.cont [13/16] 0.0, 128
        %516 = vxpose.xlu0.b32.cont [14/16] 0.0, 128
        %517 = vxpose.xlu0.b32.cont [15/16] 0.0, 128
        %518 = vxpose.xlu0.b32.end [16/16] 0.0, 128
        %v519 = vpop.trf.xlu0
        %v520 = vpop.trf.xlu0
        %v521 = vpop.trf.xlu0
        %v522 = vpop.trf.xlu0
        %v523 = vpop.trf.xlu0
        %v524 = vpop.trf.xlu0
        %v525 = vpop.trf.xlu0
        %v526 = vpop.trf.xlu0
        %v527 = vpop.trf.xlu0
        %v528 = vpop.trf.xlu0
        %v529 = vpop.trf.xlu0
        %v530 = vpop.trf.xlu0
        %v531 = vpop.trf.xlu0
        %v532 = vpop.trf.xlu0
        %v533 = vpop.trf.xlu0
        %v534 = vpop.trf.xlu0
        %vm535 = vcmask 64512
        %v537 = vsel %vm535, %v519, 0
        %v540 = vsel %vm535, %v520, 0
        %v543 = vsel %vm535, %v521, 0
        %v546 = vsel %vm535, %v522, 0
        %v549 = vsel %vm535, %v523, 0
        %v552 = vsel %vm535, %v524, 0
        %v555 = vsel %vm535, %v525, 0
        %v558 = vsel %vm535, %v526, 0
        %560 = vmatprep.subr.mxu0 0.0
        %561 = vmatpush1.msra.mxu0 0.0
        %562 = vmatprep.subr.mxu0 0.0
        %563 = vmatpush1.msra.mxu0 0.0
        %564 = vmatprep.subr.mxu0 0.0
        %565 = vmatpush1.msra.mxu0 0.0
        %566 = vmatprep.subr.mxu0 0.0
        %567 = vmatpush1.msra.mxu0 0.0
        %568 = vmatprep.subr.mxu0 0.0
        %569 = vmatpush1.msra.mxu0 0.0
        %570 = vmatprep.subr.mxu0 0.0
        %571 = vmatpush1.msra.mxu0 0.0
        %572 = vmatprep.subr.mxu0 0.0
        %573 = vmatpush1.msra.mxu0 0.0
        %574 = vmatprep.subr.mxu0 0.0
        %575 = vmatpush1.msra.mxu0 0.0
        %576 = vmatprep.subr.mxu0 0.0
        %577 = vmatpush1.msra.mxu0 0.0
        %578 = vmatprep.subr.mxu0 0.0
        %579 = vmatpush1.msra.mxu0 0.0
        %580 = vmatprep.subr.mxu0 0.0
        %581 = vmatpush1.msra.mxu0 0.0
        %582 = vmatprep.subr.mxu0 0.0
        %583 = vmatpush1.msra.mxu0 0.0
        %584 = vmatprep.subr.mxu0 0.0
        %585 = vmatpush1.msra.mxu0 0.0
        %586 = vmatprep.subr.mxu0 0.0
        %587 = vmatpush1.msra.mxu0 0.0
        %588 = vmatprep.subr.mxu0 0.0
        %589 = vmatpush1.msra.mxu0 0.0
        %590 = vmatprep.subr.mxu0 0.0
        %591 = vmatpush1.msra.mxu0 %v425
        %592 = vmatprep.subr.mxu0 0.0
        %593 = vmatpush2.msra.mxu0 0.0
        %594 = vmatprep.subr.mxu0 0.0
        %595 = vmatpush2.msra.mxu0 0.0
        %596 = vmatprep.subr.mxu0 0.0
        %597 = vmatpush2.msra.mxu0 0.0
        %598 = vmatprep.subr.mxu0 0.0
        %599 = vmatpush2.msra.mxu0 0.0
        %600 = vmatprep.subr.mxu0 0.0
        %601 = vmatpush2.msra.mxu0 0.0
        %602 = vmatprep.subr.mxu0 0.0
        %603 = vmatpush2.msra.mxu0 0.0
        %604 = vmatprep.subr.mxu0 0.0
        %605 = vmatpush2.msra.mxu0 0.0
        %606 = vmatprep.subr.mxu0 0.0
        %607 = vmatpush2.msra.mxu0 0.0
        %608 = vmatprep.subr.mxu0 0.0
        %609 = vmatpush2.msra.mxu0 0.0
        %610 = vmatprep.subr.mxu0 0.0
        %611 = vmatpush2.msra.mxu0 0.0
        %612 = vmatprep.subr.mxu0 0.0
        %613 = vmatpush2.msra.mxu0 0.0
        %614 = vmatprep.subr.mxu0 0.0
        %615 = vmatpush2.msra.mxu0 0.0
        %616 = vmatprep.subr.mxu0 0.0
        %617 = vmatpush2.msra.mxu0 0.0
        %618 = vmatprep.subr.mxu0 0.0
        %619 = vmatpush2.msra.mxu0 0.0
        %620 = vmatprep.subr.mxu0 0.0
        %621 = vmatpush2.msra.mxu0 0.0
        %622 = vmatprep.subr.mxu0 0.0
        %623 = vmatpush2.msra.mxu0 0.0
        %624 = vmatprep.mubr.f32.mxu0 0.0
        %625 = vmatmul.mubr.f32.gmra.mxu0 %v537
        %v626 = vpop.f32.mrf.mxu0
        %v627 = vadd.f32 0.0, %v626
        %v628 = vpop.f32.mrf.mxu0
        %629 = vmatprep.mubr.f32.mxu0 0.0
        %630 = vmatmul.mubr.f32.gmra.mxu0 %v540
        %v631 = vpop.f32.mrf.mxu0
        %v632 = vadd.f32 0.0, %v631
        %v633 = vpop.f32.mrf.mxu0
        %634 = vmatprep.mubr.f32.mxu0 0.0
        %635 = vmatmul.mubr.f32.gmra.mxu0 %v543
        %v636 = vpop.f32.mrf.mxu0
        %v637 = vadd.f32 0.0, %v636
        %v638 = vpop.f32.mrf.mxu0
        %639 = vmatprep.mubr.f32.mxu0 0.0
        %640 = vmatmul.mubr.f32.gmra.mxu0 %v546
        %v641 = vpop.f32.mrf.mxu0
        %v642 = vadd.f32 0.0, %v641
        %v643 = vpop.f32.mrf.mxu0
        %644 = vmatprep.mubr.f32.mxu0 0.0
        %645 = vmatmul.mubr.f32.gmra.mxu0 %v549
        %v646 = vpop.f32.mrf.mxu0
        %v647 = vadd.f32 0.0, %v646
        %v648 = vpop.f32.mrf.mxu0
        %649 = vmatprep.mubr.f32.mxu0 0.0
        %650 = vmatmul.mubr.f32.gmra.mxu0 %v552
        %v651 = vpop.f32.mrf.mxu0
        %v652 = vadd.f32 0.0, %v651
        %v653 = vpop.f32.mrf.mxu0
        %654 = vmatprep.mubr.f32.mxu0 0.0
        %655 = vmatmul.mubr.f32.gmra.mxu0 %v555
        %v656 = vpop.f32.mrf.mxu0
        %v657 = vadd.f32 0.0, %v656
        %v658 = vpop.f32.mrf.mxu0
        %659 = vmatprep.mubr.f32.mxu0 0.0
        %660 = vmatmul.mubr.f32.gmra.mxu0 %v558
        %v661 = vpop.f32.mrf.mxu0
        %v662 = vadd.f32 0.0, %v661
        %v663 = vpop.f32.mrf.mxu0
        %664 = vdwg.mxu0
        %665 = vxpose.xlu0.b32.start [1/16] %v390, 128
        %666 = vxpose.xlu0.b32.cont [2/16] 0.0, 128
        %667 = vxpose.xlu0.b32.cont [3/16] 0.0, 128
        %668 = vxpose.xlu0.b32.cont [4/16] 0.0, 128
        %669 = vxpose.xlu0.b32.cont [5/16] 0.0, 128
        %670 = vxpose.xlu0.b32.cont [6/16] 0.0, 128
        %671 = vxpose.xlu0.b32.cont [7/16] 0.0, 128
        %672 = vxpose.xlu0.b32.cont [8/16] 0.0, 128
        %673 = vxpose.xlu0.b32.cont [9/16] 0.0, 128
        %674 = vxpose.xlu0.b32.cont [10/16] 0.0, 128
        %675 = vxpose.xlu0.b32.cont [11/16] 0.0, 128
        %676 = vxpose.xlu0.b32.cont [12/16] 0.0, 128
        %677 = vxpose.xlu0.b32.cont [13/16] 0.0, 128
        %678 = vxpose.xlu0.b32.cont [14/16] 0.0, 128
        %679 = vxpose.xlu0.b32.cont [15/16] 0.0, 128
        %680 = vxpose.xlu0.b32.end [16/16] 0.0, 128
        %v681 = vpop.trf.xlu0
        %v682 = vpop.trf.xlu0
        %v683 = vpop.trf.xlu0
        %v684 = vpop.trf.xlu0
        %v685 = vpop.trf.xlu0
        %v686 = vpop.trf.xlu0
        %v687 = vpop.trf.xlu0
        %v688 = vpop.trf.xlu0
        %v689 = vpop.trf.xlu0
        %v690 = vpop.trf.xlu0
        %v691 = vpop.trf.xlu0
        %v692 = vpop.trf.xlu0
        %v693 = vpop.trf.xlu0
        %v694 = vpop.trf.xlu0
        %v695 = vpop.trf.xlu0
        %v696 = vpop.trf.xlu0
        %v698 = vsel %vm535, %v681, 0
        %v701 = vsel %vm535, %v682, 0
        %v704 = vsel %vm535, %v683, 0
        %v707 = vsel %vm535, %v684, 0
        %v710 = vsel %vm535, %v685, 0
        %v713 = vsel %vm535, %v686, 0
        %v716 = vsel %vm535, %v687, 0
        %v719 = vsel %vm535, %v688, 0
        %721 = vmatprep.subr.mxu0 0.0
        %722 = vmatpush1.msra.mxu0 0.0
        %723 = vmatprep.subr.mxu0 0.0
        %724 = vmatpush1.msra.mxu0 0.0
        %725 = vmatprep.subr.mxu0 0.0
        %726 = vmatpush1.msra.mxu0 0.0
        %727 = vmatprep.subr.mxu0 0.0
        %728 = vmatpush1.msra.mxu0 0.0
        %729 = vmatprep.subr.mxu0 0.0
        %730 = vmatpush1.msra.mxu0 0.0
        %731 = vmatprep.subr.mxu0 0.0
        %732 = vmatpush1.msra.mxu0 0.0
        %733 = vmatprep.subr.mxu0 0.0
        %734 = vmatpush1.msra.mxu0 0.0
        %735 = vmatprep.subr.mxu0 0.0
        %736 = vmatpush1.msra.mxu0 0.0
        %737 = vmatprep.subr.mxu0 0.0
        %738 = vmatpush1.msra.mxu0 0.0
        %739 = vmatprep.subr.mxu0 0.0
        %740 = vmatpush1.msra.mxu0 0.0
        %741 = vmatprep.subr.mxu0 0.0
        %742 = vmatpush1.msra.mxu0 0.0
        %743 = vmatprep.subr.mxu0 0.0
        %744 = vmatpush1.msra.mxu0 0.0
        %745 = vmatprep.subr.mxu0 0.0
        %746 = vmatpush1.msra.mxu0 0.0
        %747 = vmatprep.subr.mxu0 0.0
        %748 = vmatpush1.msra.mxu0 0.0
        %749 = vmatprep.subr.mxu0 0.0
        %750 = vmatpush1.msra.mxu0 0.0
        %751 = vmatprep.subr.mxu0 0.0
        %752 = vmatpush1.msra.mxu0 %v430
        %753 = vmatprep.subr.mxu0 0.0
        %754 = vmatpush2.msra.mxu0 0.0
        %755 = vmatprep.subr.mxu0 0.0
        %756 = vmatpush2.msra.mxu0 0.0
        %757 = vmatprep.subr.mxu0 0.0
        %758 = vmatpush2.msra.mxu0 0.0
        %759 = vmatprep.subr.mxu0 0.0
        %760 = vmatpush2.msra.mxu0 0.0
        %761 = vmatprep.subr.mxu0 0.0
        %762 = vmatpush2.msra.mxu0 0.0
        %763 = vmatprep.subr.mxu0 0.0
        %764 = vmatpush2.msra.mxu0 0.0
        %765 = vmatprep.subr.mxu0 0.0
        %766 = vmatpush2.msra.mxu0 0.0
        %767 = vmatprep.subr.mxu0 0.0
        %768 = vmatpush2.msra.mxu0 0.0
        %769 = vmatprep.subr.mxu0 0.0
        %770 = vmatpush2.msra.mxu0 0.0
        %771 = vmatprep.subr.mxu0 0.0
        %772 = vmatpush2.msra.mxu0 0.0
        %773 = vmatprep.subr.mxu0 0.0
        %774 = vmatpush2.msra.mxu0 0.0
        %775 = vmatprep.subr.mxu0 0.0
        %776 = vmatpush2.msra.mxu0 0.0
        %777 = vmatprep.subr.mxu0 0.0
        %778 = vmatpush2.msra.mxu0 0.0
        %779 = vmatprep.subr.mxu0 0.0
        %780 = vmatpush2.msra.mxu0 0.0
        %781 = vmatprep.subr.mxu0 0.0
        %782 = vmatpush2.msra.mxu0 0.0
        %783 = vmatprep.subr.mxu0 0.0
        %784 = vmatpush2.msra.mxu0 0.0
        %785 = vmatprep.mubr.f32.mxu0 0.0
        %786 = vmatmul.mubr.f32.gmra.mxu0 %v698
        %v787 = vpop.f32.mrf.mxu0
        %v788 = vadd.f32 0.0, %v787
        %v789 = vpop.f32.mrf.mxu0
        %790 = vmatprep.mubr.f32.mxu0 0.0
        %791 = vmatmul.mubr.f32.gmra.mxu0 %v701
        %v792 = vpop.f32.mrf.mxu0
        %v793 = vadd.f32 0.0, %v792
        %v794 = vpop.f32.mrf.mxu0
        %795 = vmatprep.mubr.f32.mxu0 0.0
        %796 = vmatmul.mubr.f32.gmra.mxu0 %v704
        %v797 = vpop.f32.mrf.mxu0
        %v798 = vadd.f32 0.0, %v797
        %v799 = vpop.f32.mrf.mxu0
        %800 = vmatprep.mubr.f32.mxu0 0.0
        %801 = vmatmul.mubr.f32.gmra.mxu0 %v707
        %v802 = vpop.f32.mrf.mxu0
        %v803 = vadd.f32 0.0, %v802
        %v804 = vpop.f32.mrf.mxu0
        %805 = vmatprep.mubr.f32.mxu0 0.0
        %806 = vmatmul.mubr.f32.gmra.mxu0 %v710
        %v807 = vpop.f32.mrf.mxu0
        %v808 = vadd.f32 0.0, %v807
        %v809 = vpop.f32.mrf.mxu0
        %810 = vmatprep.mubr.f32.mxu0 0.0
        %811 = vmatmul.mubr.f32.gmra.mxu0 %v713
        %v812 = vpop.f32.mrf.mxu0
        %v813 = vadd.f32 0.0, %v812
        %v814 = vpop.f32.mrf.mxu0
        %815 = vmatprep.mubr.f32.mxu0 0.0
        %816 = vmatmul.mubr.f32.gmra.mxu0 %v716
        %v817 = vpop.f32.mrf.mxu0
        %v818 = vadd.f32 0.0, %v817
        %v819 = vpop.f32.mrf.mxu0
        %820 = vmatprep.mubr.f32.mxu0 0.0
        %821 = vmatmul.mubr.f32.gmra.mxu0 %v719
        %v822 = vpop.f32.mrf.mxu0
        %v823 = vadd.f32 0.0, %v822
        %v824 = vpop.f32.mrf.mxu0
        %825 = vdwg.mxu0
        %826 = vxpose.xlu0.b32.start [1/16] %v395, 128
        %827 = vxpose.xlu0.b32.cont [2/16] 0.0, 128
        %828 = vxpose.xlu0.b32.cont [3/16] 0.0, 128
        %829 = vxpose.xlu0.b32.cont [4/16] 0.0, 128
        %830 = vxpose.xlu0.b32.cont [5/16] 0.0, 128
        %831 = vxpose.xlu0.b32.cont [6/16] 0.0, 128
        %832 = vxpose.xlu0.b32.cont [7/16] 0.0, 128
        %833 = vxpose.xlu0.b32.cont [8/16] 0.0, 128
        %834 = vxpose.xlu0.b32.cont [9/16] 0.0, 128
        %835 = vxpose.xlu0.b32.cont [10/16] 0.0, 128
        %836 = vxpose.xlu0.b32.cont [11/16] 0.0, 128
        %837 = vxpose.xlu0.b32.cont [12/16] 0.0, 128
        %838 = vxpose.xlu0.b32.cont [13/16] 0.0, 128
        %839 = vxpose.xlu0.b32.cont [14/16] 0.0, 128
        %840 = vxpose.xlu0.b32.cont [15/16] 0.0, 128
        %841 = vxpose.xlu0.b32.end [16/16] 0.0, 128
        %v842 = vpop.trf.xlu0
        %v843 = vpop.trf.xlu0
        %v844 = vpop.trf.xlu0
        %v845 = vpop.trf.xlu0
        %v846 = vpop.trf.xlu0
        %v847 = vpop.trf.xlu0
        %v848 = vpop.trf.xlu0
        %v849 = vpop.trf.xlu0
        %v850 = vpop.trf.xlu0
        %v851 = vpop.trf.xlu0
        %v852 = vpop.trf.xlu0
        %v853 = vpop.trf.xlu0
        %v854 = vpop.trf.xlu0
        %v855 = vpop.trf.xlu0
        %v856 = vpop.trf.xlu0
        %v857 = vpop.trf.xlu0
        %v859 = vsel %vm535, %v842, 0
        %v862 = vsel %vm535, %v843, 0
        %v865 = vsel %vm535, %v844, 0
        %v868 = vsel %vm535, %v845, 0
        %v871 = vsel %vm535, %v846, 0
        %v874 = vsel %vm535, %v847, 0
        %v877 = vsel %vm535, %v848, 0
        %v880 = vsel %vm535, %v849, 0
        %882 = vmatprep.subr.mxu0 0.0
        %883 = vmatpush1.msra.mxu0 0.0
        %884 = vmatprep.subr.mxu0 0.0
        %885 = vmatpush1.msra.mxu0 0.0
        %886 = vmatprep.subr.mxu0 0.0
        %887 = vmatpush1.msra.mxu0 0.0
        %888 = vmatprep.subr.mxu0 0.0
        %889 = vmatpush1.msra.mxu0 0.0
        %890 = vmatprep.subr.mxu0 0.0
        %891 = vmatpush1.msra.mxu0 0.0
        %892 = vmatprep.subr.mxu0 0.0
        %893 = vmatpush1.msra.mxu0 0.0
        %894 = vmatprep.subr.mxu0 0.0
        %895 = vmatpush1.msra.mxu0 0.0
        %896 = vmatprep.subr.mxu0 0.0
        %897 = vmatpush1.msra.mxu0 0.0
        %898 = vmatprep.subr.mxu0 0.0
        %899 = vmatpush1.msra.mxu0 0.0
        %900 = vmatprep.subr.mxu0 0.0
        %901 = vmatpush1.msra.mxu0 0.0
        %902 = vmatprep.subr.mxu0 0.0
        %903 = vmatpush1.msra.mxu0 0.0
        %904 = vmatprep.subr.mxu0 0.0
        %905 = vmatpush1.msra.mxu0 0.0
        %906 = vmatprep.subr.mxu0 0.0
        %907 = vmatpush1.msra.mxu0 0.0
        %908 = vmatprep.subr.mxu0 0.0
        %909 = vmatpush1.msra.mxu0 0.0
        %910 = vmatprep.subr.mxu0 0.0
        %911 = vmatpush1.msra.mxu0 0.0
        %912 = vmatprep.subr.mxu0 0.0
        %913 = vmatpush1.msra.mxu0 %v435
        %914 = vmatprep.subr.mxu0 0.0
        %915 = vmatpush2.msra.mxu0 0.0
        %916 = vmatprep.subr.mxu0 0.0
        %917 = vmatpush2.msra.mxu0 0.0
        %918 = vmatprep.subr.mxu0 0.0
        %919 = vmatpush2.msra.mxu0 0.0
        %920 = vmatprep.subr.mxu0 0.0
        %921 = vmatpush2.msra.mxu0 0.0
        %922 = vmatprep.subr.mxu0 0.0
        %923 = vmatpush2.msra.mxu0 0.0
        %924 = vmatprep.subr.mxu0 0.0
        %925 = vmatpush2.msra.mxu0 0.0
        %926 = vmatprep.subr.mxu0 0.0
        %927 = vmatpush2.msra.mxu0 0.0
        %928 = vmatprep.subr.mxu0 0.0
        %929 = vmatpush2.msra.mxu0 0.0
        %930 = vmatprep.subr.mxu0 0.0
        %931 = vmatpush2.msra.mxu0 0.0
        %932 = vmatprep.subr.mxu0 0.0
        %933 = vmatpush2.msra.mxu0 0.0
        %934 = vmatprep.subr.mxu0 0.0
        %935 = vmatpush2.msra.mxu0 0.0
        %936 = vmatprep.subr.mxu0 0.0
        %937 = vmatpush2.msra.mxu0 0.0
        %938 = vmatprep.subr.mxu0 0.0
        %939 = vmatpush2.msra.mxu0 0.0
        %940 = vmatprep.subr.mxu0 0.0
        %941 = vmatpush2.msra.mxu0 0.0
        %942 = vmatprep.subr.mxu0 0.0
        %943 = vmatpush2.msra.mxu0 0.0
        %944 = vmatprep.subr.mxu0 0.0
        %945 = vmatpush2.msra.mxu0 0.0
        %946 = vmatprep.mubr.f32.mxu0 0.0
        %947 = vmatmul.mubr.f32.gmra.mxu0 %v859
        %v948 = vpop.f32.mrf.mxu0
        %v949 = vadd.f32 0.0, %v948
        %v950 = vpop.f32.mrf.mxu0
        %951 = vmatprep.mubr.f32.mxu0 0.0
        %952 = vmatmul.mubr.f32.gmra.mxu0 %v862
        %v953 = vpop.f32.mrf.mxu0
        %v954 = vadd.f32 0.0, %v953
        %v955 = vpop.f32.mrf.mxu0
        %956 = vmatprep.mubr.f32.mxu0 0.0
        %957 = vmatmul.mubr.f32.gmra.mxu0 %v865
        %v958 = vpop.f32.mrf.mxu0
        %v959 = vadd.f32 0.0, %v958
        %v960 = vpop.f32.mrf.mxu0
        %961 = vmatprep.mubr.f32.mxu0 0.0
        %962 = vmatmul.mubr.f32.gmra.mxu0 %v868
        %v963 = vpop.f32.mrf.mxu0
        %v964 = vadd.f32 0.0, %v963
        %v965 = vpop.f32.mrf.mxu0
        %966 = vmatprep.mubr.f32.mxu0 0.0
        %967 = vmatmul.mubr.f32.gmra.mxu0 %v871
        %v968 = vpop.f32.mrf.mxu0
        %v969 = vadd.f32 0.0, %v968
        %v970 = vpop.f32.mrf.mxu0
        %971 = vmatprep.mubr.f32.mxu0 0.0
        %972 = vmatmul.mubr.f32.gmra.mxu0 %v874
        %v973 = vpop.f32.mrf.mxu0
        %v974 = vadd.f32 0.0, %v973
        %v975 = vpop.f32.mrf.mxu0
        %976 = vmatprep.mubr.f32.mxu0 0.0
        %977 = vmatmul.mubr.f32.gmra.mxu0 %v877
        %v978 = vpop.f32.mrf.mxu0
        %v979 = vadd.f32 0.0, %v978
        %v980 = vpop.f32.mrf.mxu0
        %981 = vmatprep.mubr.f32.mxu0 0.0
        %982 = vmatmul.mubr.f32.gmra.mxu0 %v880
        %v983 = vpop.f32.mrf.mxu0
        %v984 = vadd.f32 0.0, %v983
        %v985 = vpop.f32.mrf.mxu0
        %986 = vdwg.mxu0
        %987 = vxpose.xlu0.b32.start [1/16] %v400, 128
        %988 = vxpose.xlu0.b32.cont [2/16] 0.0, 128
        %989 = vxpose.xlu0.b32.cont [3/16] 0.0, 128
        %990 = vxpose.xlu0.b32.cont [4/16] 0.0, 128
        %991 = vxpose.xlu0.b32.cont [5/16] 0.0, 128
        %992 = vxpose.xlu0.b32.cont [6/16] 0.0, 128
        %993 = vxpose.xlu0.b32.cont [7/16] 0.0, 128
        %994 = vxpose.xlu0.b32.cont [8/16] 0.0, 128
        %995 = vxpose.xlu0.b32.cont [9/16] 0.0, 128
        %996 = vxpose.xlu0.b32.cont [10/16] 0.0, 128
        %997 = vxpose.xlu0.b32.cont [11/16] 0.0, 128
        %998 = vxpose.xlu0.b32.cont [12/16] 0.0, 128
        %999 = vxpose.xlu0.b32.cont [13/16] 0.0, 128
        %1000 = vxpose.xlu0.b32.cont [14/16] 0.0, 128
        %1001 = vxpose.xlu0.b32.cont [15/16] 0.0, 128
        %1002 = vxpose.xlu0.b32.end [16/16] 0.0, 128
        %v1003 = vpop.trf.xlu0
        %v1004 = vpop.trf.xlu0
        %v1005 = vpop.trf.xlu0
        %v1006 = vpop.trf.xlu0
        %v1007 = vpop.trf.xlu0
        %v1008 = vpop.trf.xlu0
        %v1009 = vpop.trf.xlu0
        %v1010 = vpop.trf.xlu0
        %v1011 = vpop.trf.xlu0
        %v1012 = vpop.trf.xlu0
        %v1013 = vpop.trf.xlu0
        %v1014 = vpop.trf.xlu0
        %v1015 = vpop.trf.xlu0
        %v1016 = vpop.trf.xlu0
        %v1017 = vpop.trf.xlu0
        %v1018 = vpop.trf.xlu0
        %v1020 = vsel %vm535, %v1003, 0
        %v1023 = vsel %vm535, %v1004, 0
        %v1026 = vsel %vm535, %v1005, 0
        %v1029 = vsel %vm535, %v1006, 0
        %v1032 = vsel %vm535, %v1007, 0
        %v1035 = vsel %vm535, %v1008, 0
        %v1038 = vsel %vm535, %v1009, 0
        %v1041 = vsel %vm535, %v1010, 0
        %1043 = vmatprep.subr.mxu0 0.0
        %1044 = vmatpush1.msra.mxu0 0.0
        %1045 = vmatprep.subr.mxu0 0.0
        %1046 = vmatpush1.msra.mxu0 0.0
        %1047 = vmatprep.subr.mxu0 0.0
        %1048 = vmatpush1.msra.mxu0 0.0
        %1049 = vmatprep.subr.mxu0 0.0
        %1050 = vmatpush1.msra.mxu0 0.0
        %1051 = vmatprep.subr.mxu0 0.0
        %1052 = vmatpush1.msra.mxu0 0.0
        %1053 = vmatprep.subr.mxu0 0.0
        %1054 = vmatpush1.msra.mxu0 0.0
        %1055 = vmatprep.subr.mxu0 0.0
        %1056 = vmatpush1.msra.mxu0 0.0
        %1057 = vmatprep.subr.mxu0 0.0
        %1058 = vmatpush1.msra.mxu0 0.0
        %1059 = vmatprep.subr.mxu0 0.0
        %1060 = vmatpush1.msra.mxu0 0.0
        %1061 = vmatprep.subr.mxu0 0.0
        %1062 = vmatpush1.msra.mxu0 0.0
        %1063 = vmatprep.subr.mxu0 0.0
        %1064 = vmatpush1.msra.mxu0 0.0
        %1065 = vmatprep.subr.mxu0 0.0
        %1066 = vmatpush1.msra.mxu0 0.0
        %1067 = vmatprep.subr.mxu0 0.0
        %1068 = vmatpush1.msra.mxu0 0.0
        %1069 = vmatprep.subr.mxu0 0.0
        %1070 = vmatpush1.msra.mxu0 0.0
        %1071 = vmatprep.subr.mxu0 0.0
        %1072 = vmatpush1.msra.mxu0 0.0
        %1073 = vmatprep.subr.mxu0 0.0
        %1074 = vmatpush1.msra.mxu0 %v440
        %1075 = vmatprep.subr.mxu0 0.0
        %1076 = vmatpush2.msra.mxu0 0.0
        %1077 = vmatprep.subr.mxu0 0.0
        %1078 = vmatpush2.msra.mxu0 0.0
        %1079 = vmatprep.subr.mxu0 0.0
        %1080 = vmatpush2.msra.mxu0 0.0
        %1081 = vmatprep.subr.mxu0 0.0
        %1082 = vmatpush2.msra.mxu0 0.0
        %1083 = vmatprep.subr.mxu0 0.0
        %1084 = vmatpush2.msra.mxu0 0.0
        %1085 = vmatprep.subr.mxu0 0.0
        %1086 = vmatpush2.msra.mxu0 0.0
        %1087 = vmatprep.subr.mxu0 0.0
        %1088 = vmatpush2.msra.mxu0 0.0
        %1089 = vmatprep.subr.mxu0 0.0
        %1090 = vmatpush2.msra.mxu0 0.0
        %1091 = vmatprep.subr.mxu0 0.0
        %1092 = vmatpush2.msra.mxu0 0.0
        %1093 = vmatprep.subr.mxu0 0.0
        %1094 = vmatpush2.msra.mxu0 0.0
        %1095 = vmatprep.subr.mxu0 0.0
        %1096 = vmatpush2.msra.mxu0 0.0
        %1097 = vmatprep.subr.mxu0 0.0
        %1098 = vmatpush2.msra.mxu0 0.0
        %1099 = vmatprep.subr.mxu0 0.0
        %1100 = vmatpush2.msra.mxu0 0.0
        %1101 = vmatprep.subr.mxu0 0.0
        %1102 = vmatpush2.msra.mxu0 0.0
        %1103 = vmatprep.subr.mxu0 0.0
        %1104 = vmatpush2.msra.mxu0 0.0
        %1105 = vmatprep.subr.mxu0 0.0
        %1106 = vmatpush2.msra.mxu0 0.0
        %1107 = vmatprep.mubr.f32.mxu0 0.0
        %1108 = vmatmul.mubr.f32.gmra.mxu0 %v1020
        %v1109 = vpop.f32.mrf.mxu0
        %v1110 = vadd.f32 0.0, %v1109
        %v1111 = vpop.f32.mrf.mxu0
        %1112 = vmatprep.mubr.f32.mxu0 0.0
        %1113 = vmatmul.mubr.f32.gmra.mxu0 %v1023
        %v1114 = vpop.f32.mrf.mxu0
        %v1115 = vadd.f32 0.0, %v1114
        %v1116 = vpop.f32.mrf.mxu0
        %1117 = vmatprep.mubr.f32.mxu0 0.0
        %1118 = vmatmul.mubr.f32.gmra.mxu0 %v1026
        %v1119 = vpop.f32.mrf.mxu0
        %v1120 = vadd.f32 0.0, %v1119
        %v1121 = vpop.f32.mrf.mxu0
        %1122 = vmatprep.mubr.f32.mxu0 0.0
        %1123 = vmatmul.mubr.f32.gmra.mxu0 %v1029
        %v1124 = vpop.f32.mrf.mxu0
        %v1125 = vadd.f32 0.0, %v1124
        %v1126 = vpop.f32.mrf.mxu0
        %1127 = vmatprep.mubr.f32.mxu0 0.0
        %1128 = vmatmul.mubr.f32.gmra.mxu0 %v1032
        %v1129 = vpop.f32.mrf.mxu0
        %v1130 = vadd.f32 0.0, %v1129
        %v1131 = vpop.f32.mrf.mxu0
        %1132 = vmatprep.mubr.f32.mxu0 0.0
        %1133 = vmatmul.mubr.f32.gmra.mxu0 %v1035
        %v1134 = vpop.f32.mrf.mxu0
        %v1135 = vadd.f32 0.0, %v1134
        %v1136 = vpop.f32.mrf.mxu0
        %1137 = vmatprep.mubr.f32.mxu0 0.0
        %1138 = vmatmul.mubr.f32.gmra.mxu0 %v1038
        %v1139 = vpop.f32.mrf.mxu0
        %v1140 = vadd.f32 0.0, %v1139
        %v1141 = vpop.f32.mrf.mxu0
        %1142 = vmatprep.mubr.f32.mxu0 0.0
        %1143 = vmatmul.mubr.f32.gmra.mxu0 %v1041
        %v1144 = vpop.f32.mrf.mxu0
        %v1145 = vadd.f32 0.0, %v1144
        %v1146 = vpop.f32.mrf.mxu0
        %1147 = vdwg.mxu0
        %1148 = vxpose.xlu0.b32.start [1/16] %v405, 128
        %1149 = vxpose.xlu0.b32.cont [2/16] 0.0, 128
        %1150 = vxpose.xlu0.b32.cont [3/16] 0.0, 128
        %1151 = vxpose.xlu0.b32.cont [4/16] 0.0, 128
        %1152 = vxpose.xlu0.b32.cont [5/16] 0.0, 128
        %1153 = vxpose.xlu0.b32.cont [6/16] 0.0, 128
        %1154 = vxpose.xlu0.b32.cont [7/16] 0.0, 128
        %1155 = vxpose.xlu0.b32.cont [8/16] 0.0, 128
        %1156 = vxpose.xlu0.b32.cont [9/16] 0.0, 128
        %1157 = vxpose.xlu0.b32.cont [10/16] 0.0, 128
        %1158 = vxpose.xlu0.b32.cont [11/16] 0.0, 128
        %1159 = vxpose.xlu0.b32.cont [12/16] 0.0, 128
        %1160 = vxpose.xlu0.b32.cont [13/16] 0.0, 128
        %1161 = vxpose.xlu0.b32.cont [14/16] 0.0, 128
        %1162 = vxpose.xlu0.b32.cont [15/16] 0.0, 128
        %1163 = vxpose.xlu0.b32.end [16/16] 0.0, 128
        %v1164 = vpop.trf.xlu0
        %v1165 = vpop.trf.xlu0
        %v1166 = vpop.trf.xlu0
        %v1167 = vpop.trf.xlu0
        %v1168 = vpop.trf.xlu0
        %v1169 = vpop.trf.xlu0
        %v1170 = vpop.trf.xlu0
        %v1171 = vpop.trf.xlu0
        %v1172 = vpop.trf.xlu0
        %v1173 = vpop.trf.xlu0
        %v1174 = vpop.trf.xlu0
        %v1175 = vpop.trf.xlu0
        %v1176 = vpop.trf.xlu0
        %v1177 = vpop.trf.xlu0
        %v1178 = vpop.trf.xlu0
        %v1179 = vpop.trf.xlu0
        %v1181 = vsel %vm535, %v1164, 0
        %v1184 = vsel %vm535, %v1165, 0
        %v1187 = vsel %vm535, %v1166, 0
        %v1190 = vsel %vm535, %v1167, 0
        %v1193 = vsel %vm535, %v1168, 0
        %v1196 = vsel %vm535, %v1169, 0
        %v1199 = vsel %vm535, %v1170, 0
        %v1202 = vsel %vm535, %v1171, 0
        %1204 = vmatprep.subr.mxu0 0.0
        %1205 = vmatpush1.msra.mxu0 0.0
        %1206 = vmatprep.subr.mxu0 0.0
        %1207 = vmatpush1.msra.mxu0 0.0
        %1208 = vmatprep.subr.mxu0 0.0
        %1209 = vmatpush1.msra.mxu0 0.0
        %1210 = vmatprep.subr.mxu0 0.0
        %1211 = vmatpush1.msra.mxu0 0.0
        %1212 = vmatprep.subr.mxu0 0.0
        %1213 = vmatpush1.msra.mxu0 0.0
        %1214 = vmatprep.subr.mxu0 0.0
        %1215 = vmatpush1.msra.mxu0 0.0
        %1216 = vmatprep.subr.mxu0 0.0
        %1217 = vmatpush1.msra.mxu0 0.0
        %1218 = vmatprep.subr.mxu0 0.0
        %1219 = vmatpush1.msra.mxu0 0.0
        %1220 = vmatprep.subr.mxu0 0.0
        %1221 = vmatpush1.msra.mxu0 0.0
        %1222 = vmatprep.subr.mxu0 0.0
        %1223 = vmatpush1.msra.mxu0 0.0
        %1224 = vmatprep.subr.mxu0 0.0
        %1225 = vmatpush1.msra.mxu0 0.0
        %1226 = vmatprep.subr.mxu0 0.0
        %1227 = vmatpush1.msra.mxu0 0.0
        %1228 = vmatprep.subr.mxu0 0.0
        %1229 = vmatpush1.msra.mxu0 0.0
        %1230 = vmatprep.subr.mxu0 0.0
        %1231 = vmatpush1.msra.mxu0 0.0
        %1232 = vmatprep.subr.mxu0 0.0
        %1233 = vmatpush1.msra.mxu0 0.0
        %1234 = vmatprep.subr.mxu0 0.0
        %1235 = vmatpush1.msra.mxu0 %v445
        %1236 = vmatprep.subr.mxu0 0.0
        %1237 = vmatpush2.msra.mxu0 0.0
        %1238 = vmatprep.subr.mxu0 0.0
        %1239 = vmatpush2.msra.mxu0 0.0
        %1240 = vmatprep.subr.mxu0 0.0
        %1241 = vmatpush2.msra.mxu0 0.0
        %1242 = vmatprep.subr.mxu0 0.0
        %1243 = vmatpush2.msra.mxu0 0.0
        %1244 = vmatprep.subr.mxu0 0.0
        %1245 = vmatpush2.msra.mxu0 0.0
        %1246 = vmatprep.subr.mxu0 0.0
        %1247 = vmatpush2.msra.mxu0 0.0
        %1248 = vmatprep.subr.mxu0 0.0
        %1249 = vmatpush2.msra.mxu0 0.0
        %1250 = vmatprep.subr.mxu0 0.0
        %1251 = vmatpush2.msra.mxu0 0.0
        %1252 = vmatprep.subr.mxu0 0.0
        %1253 = vmatpush2.msra.mxu0 0.0
        %1254 = vmatprep.subr.mxu0 0.0
        %1255 = vmatpush2.msra.mxu0 0.0
        %1256 = vmatprep.subr.mxu0 0.0
        %1257 = vmatpush2.msra.mxu0 0.0
        %1258 = vmatprep.subr.mxu0 0.0
        %1259 = vmatpush2.msra.mxu0 0.0
        %1260 = vmatprep.subr.mxu0 0.0
        %1261 = vmatpush2.msra.mxu0 0.0
        %1262 = vmatprep.subr.mxu0 0.0
        %1263 = vmatpush2.msra.mxu0 0.0
        %1264 = vmatprep.subr.mxu0 0.0
        %1265 = vmatpush2.msra.mxu0 0.0
        %1266 = vmatprep.subr.mxu0 0.0
        %1267 = vmatpush2.msra.mxu0 0.0
        %1268 = vmatprep.mubr.f32.mxu0 0.0
        %1269 = vmatmul.mubr.f32.gmra.mxu0 %v1181
        %v1270 = vpop.f32.mrf.mxu0
        %v1271 = vadd.f32 0.0, %v1270
        %v1272 = vpop.f32.mrf.mxu0
        %1273 = vmatprep.mubr.f32.mxu0 0.0
        %1274 = vmatmul.mubr.f32.gmra.mxu0 %v1184
        %v1275 = vpop.f32.mrf.mxu0
        %v1276 = vadd.f32 0.0, %v1275
        %v1277 = vpop.f32.mrf.mxu0
        %1278 = vmatprep.mubr.f32.mxu0 0.0
        %1279 = vmatmul.mubr.f32.gmra.mxu0 %v1187
        %v1280 = vpop.f32.mrf.mxu0
        %v1281 = vadd.f32 0.0, %v1280
        %v1282 = vpop.f32.mrf.mxu0
        %1283 = vmatprep.mubr.f32.mxu0 0.0
        %1284 = vmatmul.mubr.f32.gmra.mxu0 %v1190
        %v1285 = vpop.f32.mrf.mxu0
        %v1286 = vadd.f32 0.0, %v1285
        %v1287 = vpop.f32.mrf.mxu0
        %1288 = vmatprep.mubr.f32.mxu0 0.0
        %1289 = vmatmul.mubr.f32.gmra.mxu0 %v1193
        %v1290 = vpop.f32.mrf.mxu0
        %v1291 = vadd.f32 0.0, %v1290
        %v1292 = vpop.f32.mrf.mxu0
        %1293 = vmatprep.mubr.f32.mxu0 0.0
        %1294 = vmatmul.mubr.f32.gmra.mxu0 %v1196
        %v1295 = vpop.f32.mrf.mxu0
        %v1296 = vadd.f32 0.0, %v1295
        %v1297 = vpop.f32.mrf.mxu0
        %1298 = vmatprep.mubr.f32.mxu0 0.0
        %1299 = vmatmul.mubr.f32.gmra.mxu0 %v1199
        %v1300 = vpop.f32.mrf.mxu0
        %v1301 = vadd.f32 0.0, %v1300
        %v1302 = vpop.f32.mrf.mxu0
        %1303 = vmatprep.mubr.f32.mxu0 0.0
        %1304 = vmatmul.mubr.f32.gmra.mxu0 %v1202
        %v1305 = vpop.f32.mrf.mxu0
        %v1306 = vadd.f32 0.0, %v1305
        %v1307 = vpop.f32.mrf.mxu0
        %1308 = vdwg.mxu0
        %1309 = vxpose.xlu0.b32.start [1/16] %v410, 128
        %1310 = vxpose.xlu0.b32.cont [2/16] 0.0, 128
        %1311 = vxpose.xlu0.b32.cont [3/16] 0.0, 128
        %1312 = vxpose.xlu0.b32.cont [4/16] 0.0, 128
        %1313 = vxpose.xlu0.b32.cont [5/16] 0.0, 128
        %1314 = vxpose.xlu0.b32.cont [6/16] 0.0, 128
        %1315 = vxpose.xlu0.b32.cont [7/16] 0.0, 128
        %1316 = vxpose.xlu0.b32.cont [8/16] 0.0, 128
        %1317 = vxpose.xlu0.b32.cont [9/16] 0.0, 128
        %1318 = vxpose.xlu0.b32.cont [10/16] 0.0, 128
        %1319 = vxpose.xlu0.b32.cont [11/16] 0.0, 128
        %1320 = vxpose.xlu0.b32.cont [12/16] 0.0, 128
        %1321 = vxpose.xlu0.b32.cont [13/16] 0.0, 128
        %1322 = vxpose.xlu0.b32.cont [14/16] 0.0, 128
        %1323 = vxpose.xlu0.b32.cont [15/16] 0.0, 128
        %1324 = vxpose.xlu0.b32.end [16/16] 0.0, 128
        %v1325 = vpop.trf.xlu0
        %v1326 = vpop.trf.xlu0
        %v1327 = vpop.trf.xlu0
        %v1328 = vpop.trf.xlu0
        %v1329 = vpop.trf.xlu0
        %v1330 = vpop.trf.xlu0
        %v1331 = vpop.trf.xlu0
        %v1332 = vpop.trf.xlu0
        %v1333 = vpop.trf.xlu0
        %v1334 = vpop.trf.xlu0
        %v1335 = vpop.trf.xlu0
        %v1336 = vpop.trf.xlu0
        %v1337 = vpop.trf.xlu0
        %v1338 = vpop.trf.xlu0
        %v1339 = vpop.trf.xlu0
        %v1340 = vpop.trf.xlu0
        %v1342 = vsel %vm535, %v1325, 0
        %v1345 = vsel %vm535, %v1326, 0
        %v1348 = vsel %vm535, %v1327, 0
        %v1351 = vsel %vm535, %v1328, 0
        %v1354 = vsel %vm535, %v1329, 0
        %v1357 = vsel %vm535, %v1330, 0
        %v1360 = vsel %vm535, %v1331, 0
        %v1363 = vsel %vm535, %v1332, 0
        %1365 = vmatprep.subr.mxu0 0.0
        %1366 = vmatpush1.msra.mxu0 0.0
        %1367 = vmatprep.subr.mxu0 0.0
        %1368 = vmatpush1.msra.mxu0 0.0
        %1369 = vmatprep.subr.mxu0 0.0
        %1370 = vmatpush1.msra.mxu0 0.0
        %1371 = vmatprep.subr.mxu0 0.0
        %1372 = vmatpush1.msra.mxu0 0.0
        %1373 = vmatprep.subr.mxu0 0.0
        %1374 = vmatpush1.msra.mxu0 0.0
        %1375 = vmatprep.subr.mxu0 0.0
        %1376 = vmatpush1.msra.mxu0 0.0
        %1377 = vmatprep.subr.mxu0 0.0
        %1378 = vmatpush1.msra.mxu0 0.0
        %1379 = vmatprep.subr.mxu0 0.0
        %1380 = vmatpush1.msra.mxu0 0.0
        %1381 = vmatprep.subr.mxu0 0.0
        %1382 = vmatpush1.msra.mxu0 0.0
        %1383 = vmatprep.subr.mxu0 0.0
        %1384 = vmatpush1.msra.mxu0 0.0
        %1385 = vmatprep.subr.mxu0 0.0
        %1386 = vmatpush1.msra.mxu0 0.0
        %1387 = vmatprep.subr.mxu0 0.0
        %1388 = vmatpush1.msra.mxu0 0.0
        %1389 = vmatprep.subr.mxu0 0.0
        %1390 = vmatpush1.msra.mxu0 0.0
        %1391 = vmatprep.subr.mxu0 0.0
        %1392 = vmatpush1.msra.mxu0 0.0
        %1393 = vmatprep.subr.mxu0 0.0
        %1394 = vmatpush1.msra.mxu0 0.0
        %1395 = vmatprep.subr.mxu0 0.0
        %1396 = vmatpush1.msra.mxu0 %v450
        %1397 = vmatprep.subr.mxu0 0.0
        %1398 = vmatpush2.msra.mxu0 0.0
        %1399 = vmatprep.subr.mxu0 0.0
        %1400 = vmatpush2.msra.mxu0 0.0
        %1401 = vmatprep.subr.mxu0 0.0
        %1402 = vmatpush2.msra.mxu0 0.0
        %1403 = vmatprep.subr.mxu0 0.0
        %1404 = vmatpush2.msra.mxu0 0.0
        %1405 = vmatprep.subr.mxu0 0.0
        %1406 = vmatpush2.msra.mxu0 0.0
        %1407 = vmatprep.subr.mxu0 0.0
        %1408 = vmatpush2.msra.mxu0 0.0
        %1409 = vmatprep.subr.mxu0 0.0
        %1410 = vmatpush2.msra.mxu0 0.0
        %1411 = vmatprep.subr.mxu0 0.0
        %1412 = vmatpush2.msra.mxu0 0.0
        %1413 = vmatprep.subr.mxu0 0.0
        %1414 = vmatpush2.msra.mxu0 0.0
        %1415 = vmatprep.subr.mxu0 0.0
        %1416 = vmatpush2.msra.mxu0 0.0
        %1417 = vmatprep.subr.mxu0 0.0
        %1418 = vmatpush2.msra.mxu0 0.0
        %1419 = vmatprep.subr.mxu0 0.0
        %1420 = vmatpush2.msra.mxu0 0.0
        %1421 = vmatprep.subr.mxu0 0.0
        %1422 = vmatpush2.msra.mxu0 0.0
        %1423 = vmatprep.subr.mxu0 0.0
        %1424 = vmatpush2.msra.mxu0 0.0
        %1425 = vmatprep.subr.mxu0 0.0
        %1426 = vmatpush2.msra.mxu0 0.0
        %1427 = vmatprep.subr.mxu0 0.0
        %1428 = vmatpush2.msra.mxu0 0.0
        %1429 = vmatprep.mubr.f32.mxu0 0.0
        %1430 = vmatmul.mubr.f32.gmra.mxu0 %v1342
        %v1431 = vpop.f32.mrf.mxu0
        %v1432 = vadd.f32 0.0, %v1431
        %v1433 = vpop.f32.mrf.mxu0
        %1434 = vmatprep.mubr.f32.mxu0 0.0
        %1435 = vmatmul.mubr.f32.gmra.mxu0 %v1345
        %v1436 = vpop.f32.mrf.mxu0
        %v1437 = vadd.f32 0.0, %v1436
        %v1438 = vpop.f32.mrf.mxu0
        %1439 = vmatprep.mubr.f32.mxu0 0.0
        %1440 = vmatmul.mubr.f32.gmra.mxu0 %v1348
        %v1441 = vpop.f32.mrf.mxu0
        %v1442 = vadd.f32 0.0, %v1441
        %v1443 = vpop.f32.mrf.mxu0
        %1444 = vmatprep.mubr.f32.mxu0 0.0
        %1445 = vmatmul.mubr.f32.gmra.mxu0 %v1351
        %v1446 = vpop.f32.mrf.mxu0
        %v1447 = vadd.f32 0.0, %v1446
        %v1448 = vpop.f32.mrf.mxu0
        %1449 = vmatprep.mubr.f32.mxu0 0.0
        %1450 = vmatmul.mubr.f32.gmra.mxu0 %v1354
        %v1451 = vpop.f32.mrf.mxu0
        %v1452 = vadd.f32 0.0, %v1451
        %v1453 = vpop.f32.mrf.mxu0
        %1454 = vmatprep.mubr.f32.mxu0 0.0
        %1455 = vmatmul.mubr.f32.gmra.mxu0 %v1357
        %v1456 = vpop.f32.mrf.mxu0
        %v1457 = vadd.f32 0.0, %v1456
        %v1458 = vpop.f32.mrf.mxu0
        %1459 = vmatprep.mubr.f32.mxu0 0.0
        %1460 = vmatmul.mubr.f32.gmra.mxu0 %v1360
        %v1461 = vpop.f32.mrf.mxu0
        %v1462 = vadd.f32 0.0, %v1461
        %v1463 = vpop.f32.mrf.mxu0
        %1464 = vmatprep.mubr.f32.mxu0 0.0
        %1465 = vmatmul.mubr.f32.gmra.mxu0 %v1363
        %v1466 = vpop.f32.mrf.mxu0
        %v1467 = vadd.f32 0.0, %v1466
        %v1468 = vpop.f32.mrf.mxu0
        %1469 = vdwg.mxu0
        %1470 = vxpose.xlu0.b32.start [1/16] %v415, 128
        %1471 = vxpose.xlu0.b32.cont [2/16] 0.0, 128
        %1472 = vxpose.xlu0.b32.cont [3/16] 0.0, 128
        %1473 = vxpose.xlu0.b32.cont [4/16] 0.0, 128
        %1474 = vxpose.xlu0.b32.cont [5/16] 0.0, 128
        %1475 = vxpose.xlu0.b32.cont [6/16] 0.0, 128
        %1476 = vxpose.xlu0.b32.cont [7/16] 0.0, 128
        %1477 = vxpose.xlu0.b32.cont [8/16] 0.0, 128
        %1478 = vxpose.xlu0.b32.cont [9/16] 0.0, 128
        %1479 = vxpose.xlu0.b32.cont [10/16] 0.0, 128
        %1480 = vxpose.xlu0.b32.cont [11/16] 0.0, 128
        %1481 = vxpose.xlu0.b32.cont [12/16] 0.0, 128
        %1482 = vxpose.xlu0.b32.cont [13/16] 0.0, 128
        %1483 = vxpose.xlu0.b32.cont [14/16] 0.0, 128
        %1484 = vxpose.xlu0.b32.cont [15/16] 0.0, 128
        %1485 = vxpose.xlu0.b32.end [16/16] 0.0, 128
        %v1486 = vpop.trf.xlu0
        %v1487 = vpop.trf.xlu0
        %v1488 = vpop.trf.xlu0
        %v1489 = vpop.trf.xlu0
        %v1490 = vpop.trf.xlu0
        %v1491 = vpop.trf.xlu0
        %v1492 = vpop.trf.xlu0
        %v1493 = vpop.trf.xlu0
        %v1494 = vpop.trf.xlu0
        %v1495 = vpop.trf.xlu0
        %v1496 = vpop.trf.xlu0
        %v1497 = vpop.trf.xlu0
        %v1498 = vpop.trf.xlu0
        %v1499 = vpop.trf.xlu0
        %v1500 = vpop.trf.xlu0
        %v1501 = vpop.trf.xlu0
        %v1503 = vsel %vm535, %v1486, 0
        %v1506 = vsel %vm535, %v1487, 0
        %v1509 = vsel %vm535, %v1488, 0
        %v1512 = vsel %vm535, %v1489, 0
        %v1515 = vsel %vm535, %v1490, 0
        %v1518 = vsel %vm535, %v1491, 0
        %v1521 = vsel %vm535, %v1492, 0
        %v1524 = vsel %vm535, %v1493, 0
        %1526 = vmatprep.subr.mxu0 0.0
        %1527 = vmatpush1.msra.mxu0 0.0
        %1528 = vmatprep.subr.mxu0 0.0
        %1529 = vmatpush1.msra.mxu0 0.0
        %1530 = vmatprep.subr.mxu0 0.0
        %1531 = vmatpush1.msra.mxu0 0.0
        %1532 = vmatprep.subr.mxu0 0.0
        %1533 = vmatpush1.msra.mxu0 0.0
        %1534 = vmatprep.subr.mxu0 0.0
        %1535 = vmatpush1.msra.mxu0 0.0
        %1536 = vmatprep.subr.mxu0 0.0
        %1537 = vmatpush1.msra.mxu0 0.0
        %1538 = vmatprep.subr.mxu0 0.0
        %1539 = vmatpush1.msra.mxu0 0.0
        %1540 = vmatprep.subr.mxu0 0.0
        %1541 = vmatpush1.msra.mxu0 0.0
        %1542 = vmatprep.subr.mxu0 0.0
        %1543 = vmatpush1.msra.mxu0 0.0
        %1544 = vmatprep.subr.mxu0 0.0
        %1545 = vmatpush1.msra.mxu0 0.0
        %1546 = vmatprep.subr.mxu0 0.0
        %1547 = vmatpush1.msra.mxu0 0.0
        %1548 = vmatprep.subr.mxu0 0.0
        %1549 = vmatpush1.msra.mxu0 0.0
        %1550 = vmatprep.subr.mxu0 0.0
        %1551 = vmatpush1.msra.mxu0 0.0
        %1552 = vmatprep.subr.mxu0 0.0
        %1553 = vmatpush1.msra.mxu0 0.0
        %1554 = vmatprep.subr.mxu0 0.0
        %1555 = vmatpush1.msra.mxu0 0.0
        %1556 = vmatprep.subr.mxu0 0.0
        %1557 = vmatpush1.msra.mxu0 %v455
        %1558 = vmatprep.subr.mxu0 0.0
        %1559 = vmatpush2.msra.mxu0 0.0
        %1560 = vmatprep.subr.mxu0 0.0
        %1561 = vmatpush2.msra.mxu0 0.0
        %1562 = vmatprep.subr.mxu0 0.0
        %1563 = vmatpush2.msra.mxu0 0.0
        %1564 = vmatprep.subr.mxu0 0.0
        %1565 = vmatpush2.msra.mxu0 0.0
        %1566 = vmatprep.subr.mxu0 0.0
        %1567 = vmatpush2.msra.mxu0 0.0
        %1568 = vmatprep.subr.mxu0 0.0
        %1569 = vmatpush2.msra.mxu0 0.0
        %1570 = vmatprep.subr.mxu0 0.0
        %1571 = vmatpush2.msra.mxu0 0.0
        %1572 = vmatprep.subr.mxu0 0.0
        %1573 = vmatpush2.msra.mxu0 0.0
        %1574 = vmatprep.subr.mxu0 0.0
        %1575 = vmatpush2.msra.mxu0 0.0
        %1576 = vmatprep.subr.mxu0 0.0
        %1577 = vmatpush2.msra.mxu0 0.0
        %1578 = vmatprep.subr.mxu0 0.0
        %1579 = vmatpush2.msra.mxu0 0.0
        %1580 = vmatprep.subr.mxu0 0.0
        %1581 = vmatpush2.msra.mxu0 0.0
        %1582 = vmatprep.subr.mxu0 0.0
        %1583 = vmatpush2.msra.mxu0 0.0
        %1584 = vmatprep.subr.mxu0 0.0
        %1585 = vmatpush2.msra.mxu0 0.0
        %1586 = vmatprep.subr.mxu0 0.0
        %1587 = vmatpush2.msra.mxu0 0.0
        %1588 = vmatprep.subr.mxu0 0.0
        %1589 = vmatpush2.msra.mxu0 0.0
        %1590 = vmatprep.mubr.f32.mxu0 0.0
        %1591 = vmatmul.mubr.f32.gmra.mxu0 %v1503
        %v1592 = vpop.f32.mrf.mxu0
        %v1593 = vadd.f32 0.0, %v1592
        %v1594 = vpop.f32.mrf.mxu0
        %1595 = vmatprep.mubr.f32.mxu0 0.0
        %1596 = vmatmul.mubr.f32.gmra.mxu0 %v1506
        %v1597 = vpop.f32.mrf.mxu0
        %v1598 = vadd.f32 0.0, %v1597
        %v1599 = vpop.f32.mrf.mxu0
        %1600 = vmatprep.mubr.f32.mxu0 0.0
        %1601 = vmatmul.mubr.f32.gmra.mxu0 %v1509
        %v1602 = vpop.f32.mrf.mxu0
        %v1603 = vadd.f32 0.0, %v1602
        %v1604 = vpop.f32.mrf.mxu0
        %1605 = vmatprep.mubr.f32.mxu0 0.0
        %1606 = vmatmul.mubr.f32.gmra.mxu0 %v1512
        %v1607 = vpop.f32.mrf.mxu0
        %v1608 = vadd.f32 0.0, %v1607
        %v1609 = vpop.f32.mrf.mxu0
        %1610 = vmatprep.mubr.f32.mxu0 0.0
        %1611 = vmatmul.mubr.f32.gmra.mxu0 %v1515
        %v1612 = vpop.f32.mrf.mxu0
        %v1613 = vadd.f32 0.0, %v1612
        %v1614 = vpop.f32.mrf.mxu0
        %1615 = vmatprep.mubr.f32.mxu0 0.0
        %1616 = vmatmul.mubr.f32.gmra.mxu0 %v1518
        %v1617 = vpop.f32.mrf.mxu0
        %v1618 = vadd.f32 0.0, %v1617
        %v1619 = vpop.f32.mrf.mxu0
        %1620 = vmatprep.mubr.f32.mxu0 0.0
        %1621 = vmatmul.mubr.f32.gmra.mxu0 %v1521
        %v1622 = vpop.f32.mrf.mxu0
        %v1623 = vadd.f32 0.0, %v1622
        %v1624 = vpop.f32.mrf.mxu0
        %1625 = vmatprep.mubr.f32.mxu0 0.0
        %1626 = vmatmul.mubr.f32.gmra.mxu0 %v1524
        %v1627 = vpop.f32.mrf.mxu0
        %v1628 = vadd.f32 0.0, %v1627
        %v1629 = vpop.f32.mrf.mxu0
        %1630 = vdwg.mxu0
        %1631 = vxpose.xlu0.b32.start [1/16] %v420, 128
        %1632 = vxpose.xlu0.b32.cont [2/16] 0.0, 128
        %1633 = vxpose.xlu0.b32.cont [3/16] 0.0, 128
        %1634 = vxpose.xlu0.b32.cont [4/16] 0.0, 128
        %1635 = vxpose.xlu0.b32.cont [5/16] 0.0, 128
        %1636 = vxpose.xlu0.b32.cont [6/16] 0.0, 128
        %1637 = vxpose.xlu0.b32.cont [7/16] 0.0, 128
        %1638 = vxpose.xlu0.b32.cont [8/16] 0.0, 128
        %1639 = vxpose.xlu0.b32.cont [9/16] 0.0, 128
        %1640 = vxpose.xlu0.b32.cont [10/16] 0.0, 128
        %1641 = vxpose.xlu0.b32.cont [11/16] 0.0, 128
        %1642 = vxpose.xlu0.b32.cont [12/16] 0.0, 128
        %1643 = vxpose.xlu0.b32.cont [13/16] 0.0, 128
        %1644 = vxpose.xlu0.b32.cont [14/16] 0.0, 128
        %1645 = vxpose.xlu0.b32.cont [15/16] 0.0, 128
        %1646 = vxpose.xlu0.b32.end [16/16] 0.0, 128
        %v1647 = vpop.trf.xlu0
        %v1648 = vpop.trf.xlu0
        %v1649 = vpop.trf.xlu0
        %v1650 = vpop.trf.xlu0
        %v1651 = vpop.trf.xlu0
        %v1652 = vpop.trf.xlu0
        %v1653 = vpop.trf.xlu0
        %v1654 = vpop.trf.xlu0
        %v1655 = vpop.trf.xlu0
        %v1656 = vpop.trf.xlu0
        %v1657 = vpop.trf.xlu0
        %v1658 = vpop.trf.xlu0
        %v1659 = vpop.trf.xlu0
        %v1660 = vpop.trf.xlu0
        %v1661 = vpop.trf.xlu0
        %v1662 = vpop.trf.xlu0
        %v1664 = vsel %vm535, %v1647, 0
        %v1667 = vsel %vm535, %v1648, 0
        %v1670 = vsel %vm535, %v1649, 0
        %v1673 = vsel %vm535, %v1650, 0
        %v1676 = vsel %vm535, %v1651, 0
        %v1679 = vsel %vm535, %v1652, 0
        %v1682 = vsel %vm535, %v1653, 0
        %v1685 = vsel %vm535, %v1654, 0
        %1687 = vmatprep.subr.mxu0 0.0
        %1688 = vmatpush1.msra.mxu0 0.0
        %1689 = vmatprep.subr.mxu0 0.0
        %1690 = vmatpush1.msra.mxu0 0.0
        %1691 = vmatprep.subr.mxu0 0.0
        %1692 = vmatpush1.msra.mxu0 0.0
        %1693 = vmatprep.subr.mxu0 0.0
        %1694 = vmatpush1.msra.mxu0 0.0
        %1695 = vmatprep.subr.mxu0 0.0
        %1696 = vmatpush1.msra.mxu0 0.0
        %1697 = vmatprep.subr.mxu0 0.0
        %1698 = vmatpush1.msra.mxu0 0.0
        %1699 = vmatprep.subr.mxu0 0.0
        %1700 = vmatpush1.msra.mxu0 0.0
        %1701 = vmatprep.subr.mxu0 0.0
        %1702 = vmatpush1.msra.mxu0 0.0
        %1703 = vmatprep.subr.mxu0 0.0
        %1704 = vmatpush1.msra.mxu0 0.0
        %1705 = vmatprep.subr.mxu0 0.0
        %1706 = vmatpush1.msra.mxu0 0.0
        %1707 = vmatprep.subr.mxu0 0.0
        %1708 = vmatpush1.msra.mxu0 0.0
        %1709 = vmatprep.subr.mxu0 0.0
        %1710 = vmatpush1.msra.mxu0 0.0
        %1711 = vmatprep.subr.mxu0 0.0
        %1712 = vmatpush1.msra.mxu0 0.0
        %1713 = vmatprep.subr.mxu0 0.0
        %1714 = vmatpush1.msra.mxu0 0.0
        %1715 = vmatprep.subr.mxu0 0.0
        %1716 = vmatpush1.msra.mxu0 0.0
        %1717 = vmatprep.subr.mxu0 0.0
        %1718 = vmatpush1.msra.mxu0 %v460
        %1719 = vmatprep.subr.mxu0 0.0
        %1720 = vmatpush2.msra.mxu0 0.0
        %1721 = vmatprep.subr.mxu0 0.0
        %1722 = vmatpush2.msra.mxu0 0.0
        %1723 = vmatprep.subr.mxu0 0.0
        %1724 = vmatpush2.msra.mxu0 0.0
        %1725 = vmatprep.subr.mxu0 0.0
        %1726 = vmatpush2.msra.mxu0 0.0
        %1727 = vmatprep.subr.mxu0 0.0
        %1728 = vmatpush2.msra.mxu0 0.0
        %1729 = vmatprep.subr.mxu0 0.0
        %1730 = vmatpush2.msra.mxu0 0.0
        %1731 = vmatprep.subr.mxu0 0.0
        %1732 = vmatpush2.msra.mxu0 0.0
        %1733 = vmatprep.subr.mxu0 0.0
        %1734 = vmatpush2.msra.mxu0 0.0
        %1735 = vmatprep.subr.mxu0 0.0
        %1736 = vmatpush2.msra.mxu0 0.0
        %1737 = vmatprep.subr.mxu0 0.0
        %1738 = vmatpush2.msra.mxu0 0.0
        %1739 = vmatprep.subr.mxu0 0.0
        %1740 = vmatpush2.msra.mxu0 0.0
        %1741 = vmatprep.subr.mxu0 0.0
        %1742 = vmatpush2.msra.mxu0 0.0
        %1743 = vmatprep.subr.mxu0 0.0
        %1744 = vmatpush2.msra.mxu0 0.0
        %1745 = vmatprep.subr.mxu0 0.0
        %1746 = vmatpush2.msra.mxu0 0.0
        %1747 = vmatprep.subr.mxu0 0.0
        %1748 = vmatpush2.msra.mxu0 0.0
        %1749 = vmatprep.subr.mxu0 0.0
        %1750 = vmatpush2.msra.mxu0 0.0
        %1751 = vmatprep.mubr.f32.mxu0 0.0
        %1752 = vmatmul.mubr.f32.gmra.mxu0 %v1664
        %v1753 = vpop.f32.mrf.mxu0
        %v1754 = vadd.f32 0.0, %v1753
        %v1755 = vpop.f32.mrf.mxu0
        %1756 = vmatprep.mubr.f32.mxu0 0.0
        %1757 = vmatmul.mubr.f32.gmra.mxu0 %v1667
        %v1758 = vpop.f32.mrf.mxu0
        %v1759 = vadd.f32 0.0, %v1758
        %v1760 = vpop.f32.mrf.mxu0
        %1761 = vmatprep.mubr.f32.mxu0 0.0
        %1762 = vmatmul.mubr.f32.gmra.mxu0 %v1670
        %v1763 = vpop.f32.mrf.mxu0
        %v1764 = vadd.f32 0.0, %v1763
        %v1765 = vpop.f32.mrf.mxu0
        %1766 = vmatprep.mubr.f32.mxu0 0.0
        %1767 = vmatmul.mubr.f32.gmra.mxu0 %v1673
        %v1768 = vpop.f32.mrf.mxu0
        %v1769 = vadd.f32 0.0, %v1768
        %v1770 = vpop.f32.mrf.mxu0
        %1771 = vmatprep.mubr.f32.mxu0 0.0
        %1772 = vmatmul.mubr.f32.gmra.mxu0 %v1676
        %v1773 = vpop.f32.mrf.mxu0
        %v1774 = vadd.f32 0.0, %v1773
        %v1775 = vpop.f32.mrf.mxu0
        %1776 = vmatprep.mubr.f32.mxu0 0.0
        %1777 = vmatmul.mubr.f32.gmra.mxu0 %v1679
        %v1778 = vpop.f32.mrf.mxu0
        %v1779 = vadd.f32 0.0, %v1778
        %v1780 = vpop.f32.mrf.mxu0
        %1781 = vmatprep.mubr.f32.mxu0 0.0
        %1782 = vmatmul.mubr.f32.gmra.mxu0 %v1682
        %v1783 = vpop.f32.mrf.mxu0
        %v1784 = vadd.f32 0.0, %v1783
        %v1785 = vpop.f32.mrf.mxu0
        %1786 = vmatprep.mubr.f32.mxu0 0.0
        %1787 = vmatmul.mubr.f32.gmra.mxu0 %v1685
        %v1788 = vpop.f32.mrf.mxu0
        %v1789 = vadd.f32 0.0, %v1788
        %v1790 = vpop.f32.mrf.mxu0
        %1791 = vdwg.mxu0
        %v1792 = vsel %vm245, %v627, -inf
        %1793 = vmax.xlane.f32.xlu0 %v1792
        %v1794 = vpop.xlane.xlu0 %1793
        %v1795 = vsel %vm245, %v632, -inf
        %1796 = vmax.xlane.f32.xlu0 %v1795
        %v1797 = vpop.xlane.xlu0 %1796
        %v1798 = vsel %vm245, %v637, -inf
        %1799 = vmax.xlane.f32.xlu0 %v1798
        %v1800 = vpop.xlane.xlu0 %1799
        %v1801 = vsel %vm245, %v642, -inf
        %1802 = vmax.xlane.f32.xlu0 %v1801
        %v1803 = vpop.xlane.xlu0 %1802
        %v1804 = vsel %vm245, %v647, -inf
        %1805 = vmax.xlane.f32.xlu0 %v1804
        %v1806 = vpop.xlane.xlu0 %1805
        %v1807 = vsel %vm245, %v652, -inf
        %1808 = vmax.xlane.f32.xlu0 %v1807
        %v1809 = vpop.xlane.xlu0 %1808
        %v1810 = vsel %vm245, %v657, -inf
        %1811 = vmax.xlane.f32.xlu0 %v1810
        %v1812 = vpop.xlane.xlu0 %1811
        %v1813 = vsel %vm245, %v662, -inf
        %1814 = vmax.xlane.f32.xlu0 %v1813
        %v1815 = vpop.xlane.xlu0 %1814
        %v1816 = vsel %vm245, %v788, -inf
        %1817 = vmax.xlane.f32.xlu0 %v1816
        %v1818 = vpop.xlane.xlu0 %1817
        %v1819 = vsel %vm245, %v793, -inf
        %1820 = vmax.xlane.f32.xlu0 %v1819
        %v1821 = vpop.xlane.xlu0 %1820
        %v1822 = vsel %vm245, %v798, -inf
        %1823 = vmax.xlane.f32.xlu0 %v1822
        %v1824 = vpop.xlane.xlu0 %1823
        %v1825 = vsel %vm245, %v803, -inf
        %1826 = vmax.xlane.f32.xlu0 %v1825
        %v1827 = vpop.xlane.xlu0 %1826
        %v1828 = vsel %vm245, %v808, -inf
        %1829 = vmax.xlane.f32.xlu0 %v1828
        %v1830 = vpop.xlane.xlu0 %1829
        %v1831 = vsel %vm245, %v813, -inf
        %1832 = vmax.xlane.f32.xlu0 %v1831
        %v1833 = vpop.xlane.xlu0 %1832
        %v1834 = vsel %vm245, %v818, -inf
        %1835 = vmax.xlane.f32.xlu0 %v1834
        %v1836 = vpop.xlane.xlu0 %1835
        %v1837 = vsel %vm245, %v823, -inf
        %1838 = vmax.xlane.f32.xlu0 %v1837
        %v1839 = vpop.xlane.xlu0 %1838
        %v1840 = vsel %vm245, %v949, -inf
        %1841 = vmax.xlane.f32.xlu0 %v1840
        %v1842 = vpop.xlane.xlu0 %1841
        %v1843 = vsel %vm245, %v954, -inf
        %1844 = vmax.xlane.f32.xlu0 %v1843
        %v1845 = vpop.xlane.xlu0 %1844
        %v1846 = vsel %vm245, %v959, -inf
        %1847 = vmax.xlane.f32.xlu0 %v1846
        %v1848 = vpop.xlane.xlu0 %1847
        %v1849 = vsel %vm245, %v964, -inf
        %1850 = vmax.xlane.f32.xlu0 %v1849
        %v1851 = vpop.xlane.xlu0 %1850
        %v1852 = vsel %vm245, %v969, -inf
        %1853 = vmax.xlane.f32.xlu0 %v1852
        %v1854 = vpop.xlane.xlu0 %1853
        %v1855 = vsel %vm245, %v974, -inf
        %1856 = vmax.xlane.f32.xlu0 %v1855
        %v1857 = vpop.xlane.xlu0 %1856
        %v1858 = vsel %vm245, %v979, -inf
        %1859 = vmax.xlane.f32.xlu0 %v1858
        %v1860 = vpop.xlane.xlu0 %1859
        %v1861 = vsel %vm245, %v984, -inf
        %1862 = vmax.xlane.f32.xlu0 %v1861
        %v1863 = vpop.xlane.xlu0 %1862
        %v1864 = vsel %vm245, %v1110, -inf
        %1865 = vmax.xlane.f32.xlu0 %v1864
        %v1866 = vpop.xlane.xlu0 %1865
        %v1867 = vsel %vm245, %v1115, -inf
        %1868 = vmax.xlane.f32.xlu0 %v1867
        %v1869 = vpop.xlane.xlu0 %1868
        %v1870 = vsel %vm245, %v1120, -inf
        %1871 = vmax.xlane.f32.xlu0 %v1870
        %v1872 = vpop.xlane.xlu0 %1871
        %v1873 = vsel %vm245, %v1125, -inf
        %1874 = vmax.xlane.f32.xlu0 %v1873
        %v1875 = vpop.xlane.xlu0 %1874
        %v1876 = vsel %vm245, %v1130, -inf
        %1877 = vmax.xlane.f32.xlu0 %v1876
        %v1878 = vpop.xlane.xlu0 %1877
        %v1879 = vsel %vm245, %v1135, -inf
        %1880 = vmax.xlane.f32.xlu0 %v1879
        %v1881 = vpop.xlane.xlu0 %1880
        %v1882 = vsel %vm245, %v1140, -inf
        %1883 = vmax.xlane.f32.xlu0 %v1882
        %v1884 = vpop.xlane.xlu0 %1883
        %v1885 = vsel %vm245, %v1145, -inf
        %1886 = vmax.xlane.f32.xlu0 %v1885
        %v1887 = vpop.xlane.xlu0 %1886
        %v1888 = vsel %vm245, %v1271, -inf
        %1889 = vmax.xlane.f32.xlu0 %v1888
        %v1890 = vpop.xlane.xlu0 %1889
        %v1891 = vsel %vm245, %v1276, -inf
        %1892 = vmax.xlane.f32.xlu0 %v1891
        %v1893 = vpop.xlane.xlu0 %1892
        %v1894 = vsel %vm245, %v1281, -inf
        %1895 = vmax.xlane.f32.xlu0 %v1894
        %v1896 = vpop.xlane.xlu0 %1895
        %v1897 = vsel %vm245, %v1286, -inf
        %1898 = vmax.xlane.f32.xlu0 %v1897
        %v1899 = vpop.xlane.xlu0 %1898
        %v1900 = vsel %vm245, %v1291, -inf
        %1901 = vmax.xlane.f32.xlu0 %v1900
        %v1902 = vpop.xlane.xlu0 %1901
        %v1903 = vsel %vm245, %v1296, -inf
        %1904 = vmax.xlane.f32.xlu0 %v1903
        %v1905 = vpop.xlane.xlu0 %1904
        %v1906 = vsel %vm245, %v1301, -inf
        %1907 = vmax.xlane.f32.xlu0 %v1906
        %v1908 = vpop.xlane.xlu0 %1907
        %v1909 = vsel %vm245, %v1306, -inf
        %1910 = vmax.xlane.f32.xlu0 %v1909
        %v1911 = vpop.xlane.xlu0 %1910
        %v1912 = vsel %vm245, %v1432, -inf
        %1913 = vmax.xlane.f32.xlu0 %v1912
        %v1914 = vpop.xlane.xlu0 %1913
        %v1915 = vsel %vm245, %v1437, -inf
        %1916 = vmax.xlane.f32.xlu0 %v1915
        %v1917 = vpop.xlane.xlu0 %1916
        %v1918 = vsel %vm245, %v1442, -inf
        %1919 = vmax.xlane.f32.xlu0 %v1918
        %v1920 = vpop.xlane.xlu0 %1919
        %v1921 = vsel %vm245, %v1447, -inf
        %1922 = vmax.xlane.f32.xlu0 %v1921
        %v1923 = vpop.xlane.xlu0 %1922
        %v1924 = vsel %vm245, %v1452, -inf
        %1925 = vmax.xlane.f32.xlu0 %v1924
        %v1926 = vpop.xlane.xlu0 %1925
        %v1927 = vsel %vm245, %v1457, -inf
        %1928 = vmax.xlane.f32.xlu0 %v1927
        %v1929 = vpop.xlane.xlu0 %1928
        %v1930 = vsel %vm245, %v1462, -inf
        %1931 = vmax.xlane.f32.xlu0 %v1930
        %v1932 = vpop.xlane.xlu0 %1931
        %v1933 = vsel %vm245, %v1467, -inf
        %1934 = vmax.xlane.f32.xlu0 %v1933
        %v1935 = vpop.xlane.xlu0 %1934
        %v1936 = vsel %vm245, %v1593, -inf
        %1937 = vmax.xlane.f32.xlu0 %v1936
        %v1938 = vpop.xlane.xlu0 %1937
        %v1939 = vsel %vm245, %v1598, -inf
        %1940 = vmax.xlane.f32.xlu0 %v1939
        %v1941 = vpop.xlane.xlu0 %1940
        %v1942 = vsel %vm245, %v1603, -inf
        %1943 = vmax.xlane.f32.xlu0 %v1942
        %v1944 = vpop.xlane.xlu0 %1943
        %v1945 = vsel %vm245, %v1608, -inf
        %1946 = vmax.xlane.f32.xlu0 %v1945
        %v1947 = vpop.xlane.xlu0 %1946
        %v1948 = vsel %vm245, %v1613, -inf
        %1949 = vmax.xlane.f32.xlu0 %v1948
        %v1950 = vpop.xlane.xlu0 %1949
        %v1951 = vsel %vm245, %v1618, -inf
        %1952 = vmax.xlane.f32.xlu0 %v1951
        %v1953 = vpop.xlane.xlu0 %1952
        %v1954 = vsel %vm245, %v1623, -inf
        %1955 = vmax.xlane.f32.xlu0 %v1954
        %v1956 = vpop.xlane.xlu0 %1955
        %v1957 = vsel %vm245, %v1628, -inf
        %1958 = vmax.xlane.f32.xlu0 %v1957
        %v1959 = vpop.xlane.xlu0 %1958
        %v1960 = vsel %vm245, %v1754, -inf
        %1961 = vmax.xlane.f32.xlu0 %v1960
        %v1962 = vpop.xlane.xlu0 %1961
        %v1963 = vsel %vm245, %v1759, -inf
        %1964 = vmax.xlane.f32.xlu0 %v1963
        %v1965 = vpop.xlane.xlu0 %1964
        %v1966 = vsel %vm245, %v1764, -inf
        %1967 = vmax.xlane.f32.xlu0 %v1966
        %v1968 = vpop.xlane.xlu0 %1967
        %v1969 = vsel %vm245, %v1769, -inf
        %1970 = vmax.xlane.f32.xlu0 %v1969
        %v1971 = vpop.xlane.xlu0 %1970
        %v1972 = vsel %vm245, %v1774, -inf
        %1973 = vmax.xlane.f32.xlu0 %v1972
        %v1974 = vpop.xlane.xlu0 %1973
        %v1975 = vsel %vm245, %v1779, -inf
        %1976 = vmax.xlane.f32.xlu0 %v1975
        %v1977 = vpop.xlane.xlu0 %1976
        %v1978 = vsel %vm245, %v1784, -inf
        %1979 = vmax.xlane.f32.xlu0 %v1978
        %v1980 = vpop.xlane.xlu0 %1979
        %v1981 = vsel %vm245, %v1789, -inf
        %1982 = vmax.xlane.f32.xlu0 %v1981
        %v1983 = vpop.xlane.xlu0 %1982
        %v1984 = vsub.f32 %v627, %v1794
        %v1985 = vsub.f32 %v632, %v1797
        %v1986 = vsub.f32 %v637, %v1800
        %v1987 = vsub.f32 %v642, %v1803
        %v1988 = vsub.f32 %v647, %v1806
        %v1989 = vsub.f32 %v652, %v1809
        %v1990 = vsub.f32 %v657, %v1812
        %v1991 = vsub.f32 %v662, %v1815
        %v1992 = vsub.f32 %v788, %v1818
        %v1993 = vsub.f32 %v793, %v1821
        %v1994 = vsub.f32 %v798, %v1824
        %v1995 = vsub.f32 %v803, %v1827
        %v1996 = vsub.f32 %v808, %v1830
        %v1997 = vsub.f32 %v813, %v1833
        %v1998 = vsub.f32 %v818, %v1836
        %v1999 = vsub.f32 %v823, %v1839
        %v2000 = vsub.f32 %v949, %v1842
        %v2001 = vsub.f32 %v954, %v1845
        %v2002 = vsub.f32 %v959, %v1848
        %v2003 = vsub.f32 %v964, %v1851
        %v2004 = vsub.f32 %v969, %v1854
        %v2005 = vsub.f32 %v974, %v1857
        %v2006 = vsub.f32 %v979, %v1860
        %v2007 = vsub.f32 %v984, %v1863
        %v2008 = vsub.f32 %v1110, %v1866
        %v2009 = vsub.f32 %v1115, %v1869
        %v2010 = vsub.f32 %v1120, %v1872
        %v2011 = vsub.f32 %v1125, %v1875
        %v2012 = vsub.f32 %v1130, %v1878
        %v2013 = vsub.f32 %v1135, %v1881
        %v2014 = vsub.f32 %v1140, %v1884
        %v2015 = vsub.f32 %v1145, %v1887
        %v2016 = vsub.f32 %v1271, %v1890
        %v2017 = vsub.f32 %v1276, %v1893
        %v2018 = vsub.f32 %v1281, %v1896
        %v2019 = vsub.f32 %v1286, %v1899
        %v2020 = vsub.f32 %v1291, %v1902
        %v2021 = vsub.f32 %v1296, %v1905
        %v2022 = vsub.f32 %v1301, %v1908
        %v2023 = vsub.f32 %v1306, %v1911
        %v2024 = vsub.f32 %v1432, %v1914
        %v2025 = vsub.f32 %v1437, %v1917
        %v2026 = vsub.f32 %v1442, %v1920
        %v2027 = vsub.f32 %v1447, %v1923
        %v2028 = vsub.f32 %v1452, %v1926
        %v2029 = vsub.f32 %v1457, %v1929
        %v2030 = vsub.f32 %v1462, %v1932
        %v2031 = vsub.f32 %v1467, %v1935
        %v2032 = vsub.f32 %v1593, %v1938
        %v2033 = vsub.f32 %v1598, %v1941
        %v2034 = vsub.f32 %v1603, %v1944
        %v2035 = vsub.f32 %v1608, %v1947
        %v2036 = vsub.f32 %v1613, %v1950
        %v2037 = vsub.f32 %v1618, %v1953
        %v2038 = vsub.f32 %v1623, %v1956
        %v2039 = vsub.f32 %v1628, %v1959
        %v2040 = vsub.f32 %v1754, %v1962
        %v2041 = vsub.f32 %v1759, %v1965
        %v2042 = vsub.f32 %v1764, %v1968
        %v2043 = vsub.f32 %v1769, %v1971
        %v2044 = vsub.f32 %v1774, %v1974
        %v2045 = vsub.f32 %v1779, %v1977
        %v2046 = vsub.f32 %v1784, %v1980
        %v2047 = vsub.f32 %v1789, %v1983
        %v2048 = vmul.f32 %v1984, 1.442695
        %v2049 = vpow.pop %v2048
        %v2050 = vmul.f32 %v1985, 1.442695
        %v2051 = vpow.pop %v2050
        %v2052 = vmul.f32 %v1986, 1.442695
        %v2053 = vpow.pop %v2052
        %v2054 = vmul.f32 %v1987, 1.442695
        %v2055 = vpow.pop %v2054
        %v2056 = vmul.f32 %v1988, 1.442695
        %v2057 = vpow.pop %v2056
        %v2058 = vmul.f32 %v1989, 1.442695
        %v2059 = vpow.pop %v2058
        %v2060 = vmul.f32 %v1990, 1.442695
        %v2061 = vpow.pop %v2060
        %v2062 = vmul.f32 %v1991, 1.442695
        %v2063 = vpow.pop %v2062
        %v2064 = vmul.f32 %v1992, 1.442695
        %v2065 = vpow.pop %v2064
        %v2066 = vmul.f32 %v1993, 1.442695
        %v2067 = vpow.pop %v2066
        %v2068 = vmul.f32 %v1994, 1.442695
        %v2069 = vpow.pop %v2068
        %v2070 = vmul.f32 %v1995, 1.442695
        %v2071 = vpow.pop %v2070
        %v2072 = vmul.f32 %v1996, 1.442695
        %v2073 = vpow.pop %v2072
        %v2074 = vmul.f32 %v1997, 1.442695
        %v2075 = vpow.pop %v2074
        %v2076 = vmul.f32 %v1998, 1.442695
        %v2077 = vpow.pop %v2076
        %v2078 = vmul.f32 %v1999, 1.442695
        %v2079 = vpow.pop %v2078
        %v2080 = vmul.f32 %v2000, 1.442695
        %v2081 = vpow.pop %v2080
        %v2082 = vmul.f32 %v2001, 1.442695
        %v2083 = vpow.pop %v2082
        %v2084 = vmul.f32 %v2002, 1.442695
        %v2085 = vpow.pop %v2084
        %v2086 = vmul.f32 %v2003, 1.442695
        %v2087 = vpow.pop %v2086
        %v2088 = vmul.f32 %v2004, 1.442695
        %v2089 = vpow.pop %v2088
        %v2090 = vmul.f32 %v2005, 1.442695
        %v2091 = vpow.pop %v2090
        %v2092 = vmul.f32 %v2006, 1.442695
        %v2093 = vpow.pop %v2092
        %v2094 = vmul.f32 %v2007, 1.442695
        %v2095 = vpow.pop %v2094
        %v2096 = vmul.f32 %v2008, 1.442695
        %v2097 = vpow.pop %v2096
        %v2098 = vmul.f32 %v2009, 1.442695
        %v2099 = vpow.pop %v2098
        %v2100 = vmul.f32 %v2010, 1.442695
        %v2101 = vpow.pop %v2100
        %v2102 = vmul.f32 %v2011, 1.442695
        %v2103 = vpow.pop %v2102
        %v2104 = vmul.f32 %v2012, 1.442695
        %v2105 = vpow.pop %v2104
        %v2106 = vmul.f32 %v2013, 1.442695
        %v2107 = vpow.pop %v2106
        %v2108 = vmul.f32 %v2014, 1.442695
        %v2109 = vpow.pop %v2108
        %v2110 = vmul.f32 %v2015, 1.442695
        %v2111 = vpow.pop %v2110
        %v2112 = vmul.f32 %v2016, 1.442695
        %v2113 = vpow.pop %v2112
        %v2114 = vmul.f32 %v2017, 1.442695
        %v2115 = vpow.pop %v2114
        %v2116 = vmul.f32 %v2018, 1.442695
        %v2117 = vpow.pop %v2116
        %v2118 = vmul.f32 %v2019, 1.442695
        %v2119 = vpow.pop %v2118
        %v2120 = vmul.f32 %v2020, 1.442695
        %v2121 = vpow.pop %v2120
        %v2122 = vmul.f32 %v2021, 1.442695
        %v2123 = vpow.pop %v2122
        %v2124 = vmul.f32 %v2022, 1.442695
        %v2125 = vpow.pop %v2124
        %v2126 = vmul.f32 %v2023, 1.442695
        %v2127 = vpow.pop %v2126
        %v2128 = vmul.f32 %v2024, 1.442695
        %v2129 = vpow.pop %v2128
        %v2130 = vmul.f32 %v2025, 1.442695
        %v2131 = vpow.pop %v2130
        %v2132 = vmul.f32 %v2026, 1.442695
        %v2133 = vpow.pop %v2132
        %v2134 = vmul.f32 %v2027, 1.442695
        %v2135 = vpow.pop %v2134
        %v2136 = vmul.f32 %v2028, 1.442695
        %v2137 = vpow.pop %v2136
        %v2138 = vmul.f32 %v2029, 1.442695
        %v2139 = vpow.pop %v2138
        %v2140 = vmul.f32 %v2030, 1.442695
        %v2141 = vpow.pop %v2140
        %v2142 = vmul.f32 %v2031, 1.442695
        %v2143 = vpow.pop %v2142
        %v2144 = vmul.f32 %v2032, 1.442695
        %v2145 = vpow.pop %v2144
        %v2146 = vmul.f32 %v2033, 1.442695
        %v2147 = vpow.pop %v2146
        %v2148 = vmul.f32 %v2034, 1.442695
        %v2149 = vpow.pop %v2148
        %v2150 = vmul.f32 %v2035, 1.442695
        %v2151 = vpow.pop %v2150
        %v2152 = vmul.f32 %v2036, 1.442695
        %v2153 = vpow.pop %v2152
        %v2154 = vmul.f32 %v2037, 1.442695
        %v2155 = vpow.pop %v2154
        %v2156 = vmul.f32 %v2038, 1.442695
        %v2157 = vpow.pop %v2156
        %v2158 = vmul.f32 %v2039, 1.442695
        %v2159 = vpow.pop %v2158
        %v2160 = vmul.f32 %v2040, 1.442695
        %v2161 = vpow.pop %v2160
        %v2162 = vmul.f32 %v2041, 1.442695
        %v2163 = vpow.pop %v2162
        %v2164 = vmul.f32 %v2042, 1.442695
        %v2165 = vpow.pop %v2164
        %v2166 = vmul.f32 %v2043, 1.442695
        %v2167 = vpow.pop %v2166
        %v2168 = vmul.f32 %v2044, 1.442695
        %v2169 = vpow.pop %v2168
        %v2170 = vmul.f32 %v2045, 1.442695
        %v2171 = vpow.pop %v2170
        %v2172 = vmul.f32 %v2046, 1.442695
        %v2173 = vpow.pop %v2172
        %v2174 = vmul.f32 %v2047, 1.442695
        %v2175 = vpow.pop %v2174
        %v2176 = vsel %vm245, %v2049, 0.0
        %2177 = vadd.xlane.f32.xlu0 %v2176
        %v2178 = vpop.xlane.xlu0 %2177
        %v2179 = vsel %vm245, %v2051, 0.0
        %2180 = vadd.xlane.f32.xlu0 %v2179
        %v2181 = vpop.xlane.xlu0 %2180
        %v2182 = vsel %vm245, %v2053, 0.0
        %2183 = vadd.xlane.f32.xlu0 %v2182
        %v2184 = vpop.xlane.xlu0 %2183
        %v2185 = vsel %vm245, %v2055, 0.0
        %2186 = vadd.xlane.f32.xlu0 %v2185
        %v2187 = vpop.xlane.xlu0 %2186
        %v2188 = vsel %vm245, %v2057, 0.0
        %2189 = vadd.xlane.f32.xlu0 %v2188
        %v2190 = vpop.xlane.xlu0 %2189
        %v2191 = vsel %vm245, %v2059, 0.0
        %2192 = vadd.xlane.f32.xlu0 %v2191
        %v2193 = vpop.xlane.xlu0 %2192
        %v2194 = vsel %vm245, %v2061, 0.0
        %2195 = vadd.xlane.f32.xlu0 %v2194
        %v2196 = vpop.xlane.xlu0 %2195
        %v2197 = vsel %vm245, %v2063, 0.0
        %2198 = vadd.xlane.f32.xlu0 %v2197
        %v2199 = vpop.xlane.xlu0 %2198
        %v2200 = vsel %vm245, %v2065, 0.0
        %2201 = vadd.xlane.f32.xlu0 %v2200
        %v2202 = vpop.xlane.xlu0 %2201
        %v2203 = vsel %vm245, %v2067, 0.0
        %2204 = vadd.xlane.f32.xlu0 %v2203
        %v2205 = vpop.xlane.xlu0 %2204
        %v2206 = vsel %vm245, %v2069, 0.0
        %2207 = vadd.xlane.f32.xlu0 %v2206
        %v2208 = vpop.xlane.xlu0 %2207
        %v2209 = vsel %vm245, %v2071, 0.0
        %2210 = vadd.xlane.f32.xlu0 %v2209
        %v2211 = vpop.xlane.xlu0 %2210
        %v2212 = vsel %vm245, %v2073, 0.0
        %2213 = vadd.xlane.f32.xlu0 %v2212
        %v2214 = vpop.xlane.xlu0 %2213
        %v2215 = vsel %vm245, %v2075, 0.0
        %2216 = vadd.xlane.f32.xlu0 %v2215
        %v2217 = vpop.xlane.xlu0 %2216
        %v2218 = vsel %vm245, %v2077, 0.0
        %2219 = vadd.xlane.f32.xlu0 %v2218
        %v2220 = vpop.xlane.xlu0 %2219
        %v2221 = vsel %vm245, %v2079, 0.0
        %2222 = vadd.xlane.f32.xlu0 %v2221
        %v2223 = vpop.xlane.xlu0 %2222
        %v2224 = vsel %vm245, %v2081, 0.0
        %2225 = vadd.xlane.f32.xlu0 %v2224
        %v2226 = vpop.xlane.xlu0 %2225
        %v2227 = vsel %vm245, %v2083, 0.0
        %2228 = vadd.xlane.f32.xlu0 %v2227
        %v2229 = vpop.xlane.xlu0 %2228
        %v2230 = vsel %vm245, %v2085, 0.0
        %2231 = vadd.xlane.f32.xlu0 %v2230
        %v2232 = vpop.xlane.xlu0 %2231
        %v2233 = vsel %vm245, %v2087, 0.0
        %2234 = vadd.xlane.f32.xlu0 %v2233
        %v2235 = vpop.xlane.xlu0 %2234
        %v2236 = vsel %vm245, %v2089, 0.0
        %2237 = vadd.xlane.f32.xlu0 %v2236
        %v2238 = vpop.xlane.xlu0 %2237
        %v2239 = vsel %vm245, %v2091, 0.0
        %2240 = vadd.xlane.f32.xlu0 %v2239
        %v2241 = vpop.xlane.xlu0 %2240
        %v2242 = vsel %vm245, %v2093, 0.0
        %2243 = vadd.xlane.f32.xlu0 %v2242
        %v2244 = vpop.xlane.xlu0 %2243
        %v2245 = vsel %vm245, %v2095, 0.0
        %2246 = vadd.xlane.f32.xlu0 %v2245
        %v2247 = vpop.xlane.xlu0 %2246
        %v2248 = vsel %vm245, %v2097, 0.0
        %2249 = vadd.xlane.f32.xlu0 %v2248
        %v2250 = vpop.xlane.xlu0 %2249
        %v2251 = vsel %vm245, %v2099, 0.0
        %2252 = vadd.xlane.f32.xlu0 %v2251
        %v2253 = vpop.xlane.xlu0 %2252
        %v2254 = vsel %vm245, %v2101, 0.0
        %2255 = vadd.xlane.f32.xlu0 %v2254
        %v2256 = vpop.xlane.xlu0 %2255
        %v2257 = vsel %vm245, %v2103, 0.0
        %2258 = vadd.xlane.f32.xlu0 %v2257
        %v2259 = vpop.xlane.xlu0 %2258
        %v2260 = vsel %vm245, %v2105, 0.0
        %2261 = vadd.xlane.f32.xlu0 %v2260
        %v2262 = vpop.xlane.xlu0 %2261
        %v2263 = vsel %vm245, %v2107, 0.0
        %2264 = vadd.xlane.f32.xlu0 %v2263
        %v2265 = vpop.xlane.xlu0 %2264
        %v2266 = vsel %vm245, %v2109, 0.0
        %2267 = vadd.xlane.f32.xlu0 %v2266
        %v2268 = vpop.xlane.xlu0 %2267
        %v2269 = vsel %vm245, %v2111, 0.0
        %2270 = vadd.xlane.f32.xlu0 %v2269
        %v2271 = vpop.xlane.xlu0 %2270
        %v2272 = vsel %vm245, %v2113, 0.0
        %2273 = vadd.xlane.f32.xlu0 %v2272
        %v2274 = vpop.xlane.xlu0 %2273
        %v2275 = vsel %vm245, %v2115, 0.0
        %2276 = vadd.xlane.f32.xlu0 %v2275
        %v2277 = vpop.xlane.xlu0 %2276
        %v2278 = vsel %vm245, %v2117, 0.0
        %2279 = vadd.xlane.f32.xlu0 %v2278
        %v2280 = vpop.xlane.xlu0 %2279
        %v2281 = vsel %vm245, %v2119, 0.0
        %2282 = vadd.xlane.f32.xlu0 %v2281
        %v2283 = vpop.xlane.xlu0 %2282
        %v2284 = vsel %vm245, %v2121, 0.0
        %2285 = vadd.xlane.f32.xlu0 %v2284
        %v2286 = vpop.xlane.xlu0 %2285
        %v2287 = vsel %vm245, %v2123, 0.0
        %2288 = vadd.xlane.f32.xlu0 %v2287
        %v2289 = vpop.xlane.xlu0 %2288
        %v2290 = vsel %vm245, %v2125, 0.0
        %2291 = vadd.xlane.f32.xlu0 %v2290
        %v2292 = vpop.xlane.xlu0 %2291
        %v2293 = vsel %vm245, %v2127, 0.0
        %2294 = vadd.xlane.f32.xlu0 %v2293
        %v2295 = vpop.xlane.xlu0 %2294
        %v2296 = vsel %vm245, %v2129, 0.0
        %2297 = vadd.xlane.f32.xlu0 %v2296
        %v2298 = vpop.xlane.xlu0 %2297
        %v2299 = vsel %vm245, %v2131, 0.0
        %2300 = vadd.xlane.f32.xlu0 %v2299
        %v2301 = vpop.xlane.xlu0 %2300
        %v2302 = vsel %vm245, %v2133, 0.0
        %2303 = vadd.xlane.f32.xlu0 %v2302
        %v2304 = vpop.xlane.xlu0 %2303
        %v2305 = vsel %vm245, %v2135, 0.0
        %2306 = vadd.xlane.f32.xlu0 %v2305
        %v2307 = vpop.xlane.xlu0 %2306
        %v2308 = vsel %vm245, %v2137, 0.0
        %2309 = vadd.xlane.f32.xlu0 %v2308
        %v2310 = vpop.xlane.xlu0 %2309
        %v2311 = vsel %vm245, %v2139, 0.0
        %2312 = vadd.xlane.f32.xlu0 %v2311
        %v2313 = vpop.xlane.xlu0 %2312
        %v2314 = vsel %vm245, %v2141, 0.0
        %2315 = vadd.xlane.f32.xlu0 %v2314
        %v2316 = vpop.xlane.xlu0 %2315
        %v2317 = vsel %vm245, %v2143, 0.0
        %2318 = vadd.xlane.f32.xlu0 %v2317
        %v2319 = vpop.xlane.xlu0 %2318
        %v2320 = vsel %vm245, %v2145, 0.0
        %2321 = vadd.xlane.f32.xlu0 %v2320
        %v2322 = vpop.xlane.xlu0 %2321
        %v2323 = vsel %vm245, %v2147, 0.0
        %2324 = vadd.xlane.f32.xlu0 %v2323
        %v2325 = vpop.xlane.xlu0 %2324
        %v2326 = vsel %vm245, %v2149, 0.0
        %2327 = vadd.xlane.f32.xlu0 %v2326
        %v2328 = vpop.xlane.xlu0 %2327
        %v2329 = vsel %vm245, %v2151, 0.0
        %2330 = vadd.xlane.f32.xlu0 %v2329
        %v2331 = vpop.xlane.xlu0 %2330
        %v2332 = vsel %vm245, %v2153, 0.0
        %2333 = vadd.xlane.f32.xlu0 %v2332
        %v2334 = vpop.xlane.xlu0 %2333
        %v2335 = vsel %vm245, %v2155, 0.0
        %2336 = vadd.xlane.f32.xlu0 %v2335
        %v2337 = vpop.xlane.xlu0 %2336
        %v2338 = vsel %vm245, %v2157, 0.0
        %2339 = vadd.xlane.f32.xlu0 %v2338
        %v2340 = vpop.xlane.xlu0 %2339
        %v2341 = vsel %vm245, %v2159, 0.0
        %2342 = vadd.xlane.f32.xlu0 %v2341
        %v2343 = vpop.xlane.xlu0 %2342
        %v2344 = vsel %vm245, %v2161, 0.0
        %2345 = vadd.xlane.f32.xlu0 %v2344
        %v2346 = vpop.xlane.xlu0 %2345
        %v2347 = vsel %vm245, %v2163, 0.0
        %2348 = vadd.xlane.f32.xlu0 %v2347
        %v2349 = vpop.xlane.xlu0 %2348
        %v2350 = vsel %vm245, %v2165, 0.0
        %2351 = vadd.xlane.f32.xlu0 %v2350
        %v2352 = vpop.xlane.xlu0 %2351
        %v2353 = vsel %vm245, %v2167, 0.0
        %2354 = vadd.xlane.f32.xlu0 %v2353
        %v2355 = vpop.xlane.xlu0 %2354
        %v2356 = vsel %vm245, %v2169, 0.0
        %2357 = vadd.xlane.f32.xlu0 %v2356
        %v2358 = vpop.xlane.xlu0 %2357
        %v2359 = vsel %vm245, %v2171, 0.0
        %2360 = vadd.xlane.f32.xlu0 %v2359
        %v2361 = vpop.xlane.xlu0 %2360
        %v2362 = vsel %vm245, %v2173, 0.0
        %2363 = vadd.xlane.f32.xlu0 %v2362
        %v2364 = vpop.xlane.xlu0 %2363
        %v2365 = vsel %vm245, %v2175, 0.0
        %2366 = vadd.xlane.f32.xlu0 %v2365
        %v2367 = vpop.xlane.xlu0 %2366
        %v2368 = vrcp.pop %v2178
        %v2369 = vrcp.pop %v2181
        %v2370 = vrcp.pop %v2184
        %v2371 = vrcp.pop %v2187
        %v2372 = vrcp.pop %v2190
        %v2373 = vrcp.pop %v2193
        %v2374 = vrcp.pop %v2196
        %v2375 = vrcp.pop %v2199
        %v2376 = vrcp.pop %v2202
        %v2377 = vrcp.pop %v2205
        %v2378 = vrcp.pop %v2208
        %v2379 = vrcp.pop %v2211
        %v2380 = vrcp.pop %v2214
        %v2381 = vrcp.pop %v2217
        %v2382 = vrcp.pop %v2220
        %v2383 = vrcp.pop %v2223
        %v2384 = vrcp.pop %v2226
        %v2385 = vrcp.pop %v2229
        %v2386 = vrcp.pop %v2232
        %v2387 = vrcp.pop %v2235
        %v2388 = vrcp.pop %v2238
        %v2389 = vrcp.pop %v2241
        %v2390 = vrcp.pop %v2244
        %v2391 = vrcp.pop %v2247
        %v2392 = vrcp.pop %v2250
        %v2393 = vrcp.pop %v2253
        %v2394 = vrcp.pop %v2256
        %v2395 = vrcp.pop %v2259
        %v2396 = vrcp.pop %v2262
        %v2397 = vrcp.pop %v2265
        %v2398 = vrcp.pop %v2268
        %v2399 = vrcp.pop %v2271
        %v2400 = vrcp.pop %v2274
        %v2401 = vrcp.pop %v2277
        %v2402 = vrcp.pop %v2280
        %v2403 = vrcp.pop %v2283
        %v2404 = vrcp.pop %v2286
        %v2405 = vrcp.pop %v2289
        %v2406 = vrcp.pop %v2292
        %v2407 = vrcp.pop %v2295
        %v2408 = vrcp.pop %v2298
        %v2409 = vrcp.pop %v2301
        %v2410 = vrcp.pop %v2304
        %v2411 = vrcp.pop %v2307
        %v2412 = vrcp.pop %v2310
        %v2413 = vrcp.pop %v2313
        %v2414 = vrcp.pop %v2316
        %v2415 = vrcp.pop %v2319
        %v2416 = vrcp.pop %v2322
        %v2417 = vrcp.pop %v2325
        %v2418 = vrcp.pop %v2328
        %v2419 = vrcp.pop %v2331
        %v2420 = vrcp.pop %v2334
        %v2421 = vrcp.pop %v2337
        %v2422 = vrcp.pop %v2340
        %v2423 = vrcp.pop %v2343
        %v2424 = vrcp.pop %v2346
        %v2425 = vrcp.pop %v2349
        %v2426 = vrcp.pop %v2352
        %v2427 = vrcp.pop %v2355
        %v2428 = vrcp.pop %v2358
        %v2429 = vrcp.pop %v2361
        %v2430 = vrcp.pop %v2364
        %v2431 = vrcp.pop %v2367
        %v2432 = vmul.f32 %v2049, %v2368
        %v2433 = vmul.f32 %v2051, %v2369
        %v2434 = vmul.f32 %v2053, %v2370
        %v2435 = vmul.f32 %v2055, %v2371
        %v2436 = vmul.f32 %v2057, %v2372
        %v2437 = vmul.f32 %v2059, %v2373
        %v2438 = vmul.f32 %v2061, %v2374
        %v2439 = vmul.f32 %v2063, %v2375
        %v2440 = vmul.f32 %v2065, %v2376
        %v2441 = vmul.f32 %v2067, %v2377
        %v2442 = vmul.f32 %v2069, %v2378
        %v2443 = vmul.f32 %v2071, %v2379
        %v2444 = vmul.f32 %v2073, %v2380
        %v2445 = vmul.f32 %v2075, %v2381
        %v2446 = vmul.f32 %v2077, %v2382
        %v2447 = vmul.f32 %v2079, %v2383
        %v2448 = vmul.f32 %v2081, %v2384
        %v2449 = vmul.f32 %v2083, %v2385
        %v2450 = vmul.f32 %v2085, %v2386
        %v2451 = vmul.f32 %v2087, %v2387
        %v2452 = vmul.f32 %v2089, %v2388
        %v2453 = vmul.f32 %v2091, %v2389
        %v2454 = vmul.f32 %v2093, %v2390
        %v2455 = vmul.f32 %v2095, %v2391
        %v2456 = vmul.f32 %v2097, %v2392
        %v2457 = vmul.f32 %v2099, %v2393
        %v2458 = vmul.f32 %v2101, %v2394
        %v2459 = vmul.f32 %v2103, %v2395
        %v2460 = vmul.f32 %v2105, %v2396
        %v2461 = vmul.f32 %v2107, %v2397
        %v2462 = vmul.f32 %v2109, %v2398
        %v2463 = vmul.f32 %v2111, %v2399
        %v2464 = vmul.f32 %v2113, %v2400
        %v2465 = vmul.f32 %v2115, %v2401
        %v2466 = vmul.f32 %v2117, %v2402
        %v2467 = vmul.f32 %v2119, %v2403
        %v2468 = vmul.f32 %v2121, %v2404
        %v2469 = vmul.f32 %v2123, %v2405
        %v2470 = vmul.f32 %v2125, %v2406
        %v2471 = vmul.f32 %v2127, %v2407
        %v2472 = vmul.f32 %v2129, %v2408
        %v2473 = vmul.f32 %v2131, %v2409
        %v2474 = vmul.f32 %v2133, %v2410
        %v2475 = vmul.f32 %v2135, %v2411
        %v2476 = vmul.f32 %v2137, %v2412
        %v2477 = vmul.f32 %v2139, %v2413
        %v2478 = vmul.f32 %v2141, %v2414
        %v2479 = vmul.f32 %v2143, %v2415
        %v2480 = vmul.f32 %v2145, %v2416
        %v2481 = vmul.f32 %v2147, %v2417
        %v2482 = vmul.f32 %v2149, %v2418
        %v2483 = vmul.f32 %v2151, %v2419
        %v2484 = vmul.f32 %v2153, %v2420
        %v2485 = vmul.f32 %v2155, %v2421
        %v2486 = vmul.f32 %v2157, %v2422
        %v2487 = vmul.f32 %v2159, %v2423
        %v2488 = vmul.f32 %v2161, %v2424
        %v2489 = vmul.f32 %v2163, %v2425
        %v2490 = vmul.f32 %v2165, %v2426
        %v2491 = vmul.f32 %v2167, %v2427
        %v2492 = vmul.f32 %v2169, %v2428
        %v2493 = vmul.f32 %v2171, %v2429
        %v2494 = vmul.f32 %v2173, %v2430
        %v2495 = vmul.f32 %v2175, %v2431
        %v2497 = vsel %vm245, %v465, 0
        %v2500 = vsel %vm245, %v2432, 0
        %v2503 = vsel %vm245, %v2433, 0
        %v2506 = vsel %vm245, %v2434, 0
        %v2509 = vsel %vm245, %v2435, 0
        %v2512 = vsel %vm245, %v2436, 0
        %v2515 = vsel %vm245, %v2437, 0
        %v2518 = vsel %vm245, %v2438, 0
        %v2521 = vsel %vm245, %v2439, 0
        %2523 = vmatprep.subr.mxu0 0.0
        %2524 = vmatpush1.xpose.msra.mxu0 0.0
        %2525 = vmatprep.subr.mxu0 0.0
        %2526 = vmatpush1.xpose.msra.mxu0 0.0
        %2527 = vmatprep.subr.mxu0 0.0
        %2528 = vmatpush1.xpose.msra.mxu0 0.0
        %2529 = vmatprep.subr.mxu0 0.0
        %2530 = vmatpush1.xpose.msra.mxu0 0.0
        %2531 = vmatprep.subr.mxu0 0.0
        %2532 = vmatpush1.xpose.msra.mxu0 0.0
        %2533 = vmatprep.subr.mxu0 0.0
        %2534 = vmatpush1.xpose.msra.mxu0 0.0
        %2535 = vmatprep.subr.mxu0 0.0
        %2536 = vmatpush1.xpose.msra.mxu0 0.0
        %2537 = vmatprep.subr.mxu0 0.0
        %2538 = vmatpush1.xpose.msra.mxu0 0.0
        %2539 = vmatprep.subr.mxu0 0.0
        %2540 = vmatpush1.xpose.msra.mxu0 %v2521
        %2541 = vmatprep.subr.mxu0 0.0
        %2542 = vmatpush1.xpose.msra.mxu0 %v2518
        %2543 = vmatprep.subr.mxu0 0.0
        %2544 = vmatpush1.xpose.msra.mxu0 %v2515
        %2545 = vmatprep.subr.mxu0 0.0
        %2546 = vmatpush1.xpose.msra.mxu0 %v2512
        %2547 = vmatprep.subr.mxu0 0.0
        %2548 = vmatpush1.xpose.msra.mxu0 %v2509
        %2549 = vmatprep.subr.mxu0 0.0
        %2550 = vmatpush1.xpose.msra.mxu0 %v2506
        %2551 = vmatprep.subr.mxu0 0.0
        %2552 = vmatpush1.xpose.msra.mxu0 %v2503
        %2553 = vmatprep.subr.mxu0 0.0
        %2554 = vmatpush1.xpose.msra.mxu0 %v2500
        %2555 = vmatprep.subr.mxu0 0.0
        %2556 = vmatpush2.xpose.msra.mxu0 0.0
        %2557 = vmatprep.subr.mxu0 0.0
        %2558 = vmatpush2.xpose.msra.mxu0 0.0
        %2559 = vmatprep.subr.mxu0 0.0
        %2560 = vmatpush2.xpose.msra.mxu0 0.0
        %2561 = vmatprep.subr.mxu0 0.0
        %2562 = vmatpush2.xpose.msra.mxu0 0.0
        %2563 = vmatprep.subr.mxu0 0.0
        %2564 = vmatpush2.xpose.msra.mxu0 0.0
        %2565 = vmatprep.subr.mxu0 0.0
        %2566 = vmatpush2.xpose.msra.mxu0 0.0
        %2567 = vmatprep.subr.mxu0 0.0
        %2568 = vmatpush2.xpose.msra.mxu0 0.0
        %2569 = vmatprep.subr.mxu0 0.0
        %2570 = vmatpush2.xpose.msra.mxu0 0.0
        %2571 = vmatprep.subr.mxu0 0.0
        %2572 = vmatpush2.xpose.msra.mxu0 0.0
        %2573 = vmatprep.subr.mxu0 0.0
        %2574 = vmatpush2.xpose.msra.mxu0 0.0
        %2575 = vmatprep.subr.mxu0 0.0
        %2576 = vmatpush2.xpose.msra.mxu0 0.0
        %2577 = vmatprep.subr.mxu0 0.0
        %2578 = vmatpush2.xpose.msra.mxu0 0.0
        %2579 = vmatprep.subr.mxu0 0.0
        %2580 = vmatpush2.xpose.msra.mxu0 0.0
        %2581 = vmatprep.subr.mxu0 0.0
        %2582 = vmatpush2.xpose.msra.mxu0 0.0
        %2583 = vmatprep.subr.mxu0 0.0
        %2584 = vmatpush2.xpose.msra.mxu0 0.0
        %2585 = vmatprep.subr.mxu0 0.0
        %2586 = vmatpush2.xpose.msra.mxu0 0.0
        %2587 = vmatprep.mubr.f32.mxu0 0.0
        %2588 = vmatmul.mubr.f32.gmra.mxu0 %v2497
        %v2589 = vpop.f32.mrf.mxu0
        %v2590 = vadd.f32 0.0, %v2589
        %v2591 = vpop.f32.mrf.mxu0
        %2592 = vdwg.mxu0
        %v2594 = vsel %vm245, %v470, 0
        %v2597 = vsel %vm245, %v2440, 0
        %v2600 = vsel %vm245, %v2441, 0
        %v2603 = vsel %vm245, %v2442, 0
        %v2606 = vsel %vm245, %v2443, 0
        %v2609 = vsel %vm245, %v2444, 0
        %v2612 = vsel %vm245, %v2445, 0
        %v2615 = vsel %vm245, %v2446, 0
        %v2618 = vsel %vm245, %v2447, 0
        %2620 = vmatprep.subr.mxu0 0.0
        %2621 = vmatpush1.xpose.msra.mxu0 0.0
        %2622 = vmatprep.subr.mxu0 0.0
        %2623 = vmatpush1.xpose.msra.mxu0 0.0
        %2624 = vmatprep.subr.mxu0 0.0
        %2625 = vmatpush1.xpose.msra.mxu0 0.0
        %2626 = vmatprep.subr.mxu0 0.0
        %2627 = vmatpush1.xpose.msra.mxu0 0.0
        %2628 = vmatprep.subr.mxu0 0.0
        %2629 = vmatpush1.xpose.msra.mxu0 0.0
        %2630 = vmatprep.subr.mxu0 0.0
        %2631 = vmatpush1.xpose.msra.mxu0 0.0
        %2632 = vmatprep.subr.mxu0 0.0
        %2633 = vmatpush1.xpose.msra.mxu0 0.0
        %2634 = vmatprep.subr.mxu0 0.0
        %2635 = vmatpush1.xpose.msra.mxu0 0.0
        %2636 = vmatprep.subr.mxu0 0.0
        %2637 = vmatpush1.xpose.msra.mxu0 %v2618
        %2638 = vmatprep.subr.mxu0 0.0
        %2639 = vmatpush1.xpose.msra.mxu0 %v2615
        %2640 = vmatprep.subr.mxu0 0.0
        %2641 = vmatpush1.xpose.msra.mxu0 %v2612
        %2642 = vmatprep.subr.mxu0 0.0
        %2643 = vmatpush1.xpose.msra.mxu0 %v2609
        %2644 = vmatprep.subr.mxu0 0.0
        %2645 = vmatpush1.xpose.msra.mxu0 %v2606
        %2646 = vmatprep.subr.mxu0 0.0
        %2647 = vmatpush1.xpose.msra.mxu0 %v2603
        %2648 = vmatprep.subr.mxu0 0.0
        %2649 = vmatpush1.xpose.msra.mxu0 %v2600
        %2650 = vmatprep.subr.mxu0 0.0
        %2651 = vmatpush1.xpose.msra.mxu0 %v2597
        %2652 = vmatprep.subr.mxu0 0.0
        %2653 = vmatpush2.xpose.msra.mxu0 0.0
        %2654 = vmatprep.subr.mxu0 0.0
        %2655 = vmatpush2.xpose.msra.mxu0 0.0
        %2656 = vmatprep.subr.mxu0 0.0
        %2657 = vmatpush2.xpose.msra.mxu0 0.0
        %2658 = vmatprep.subr.mxu0 0.0
        %2659 = vmatpush2.xpose.msra.mxu0 0.0
        %2660 = vmatprep.subr.mxu0 0.0
        %2661 = vmatpush2.xpose.msra.mxu0 0.0
        %2662 = vmatprep.subr.mxu0 0.0
        %2663 = vmatpush2.xpose.msra.mxu0 0.0
        %2664 = vmatprep.subr.mxu0 0.0
        %2665 = vmatpush2.xpose.msra.mxu0 0.0
        %2666 = vmatprep.subr.mxu0 0.0
        %2667 = vmatpush2.xpose.msra.mxu0 0.0
        %2668 = vmatprep.subr.mxu0 0.0
        %2669 = vmatpush2.xpose.msra.mxu0 0.0
        %2670 = vmatprep.subr.mxu0 0.0
        %2671 = vmatpush2.xpose.msra.mxu0 0.0
        %2672 = vmatprep.subr.mxu0 0.0
        %2673 = vmatpush2.xpose.msra.mxu0 0.0
        %2674 = vmatprep.subr.mxu0 0.0
        %2675 = vmatpush2.xpose.msra.mxu0 0.0
        %2676 = vmatprep.subr.mxu0 0.0
        %2677 = vmatpush2.xpose.msra.mxu0 0.0
        %2678 = vmatprep.subr.mxu0 0.0
        %2679 = vmatpush2.xpose.msra.mxu0 0.0
        %2680 = vmatprep.subr.mxu0 0.0
        %2681 = vmatpush2.xpose.msra.mxu0 0.0
        %2682 = vmatprep.subr.mxu0 0.0
        %2683 = vmatpush2.xpose.msra.mxu0 0.0
        %2684 = vmatprep.mubr.f32.mxu0 0.0
        %2685 = vmatmul.mubr.f32.gmra.mxu0 %v2594
        %v2686 = vpop.f32.mrf.mxu0
        %v2687 = vadd.f32 0.0, %v2686
        %v2688 = vpop.f32.mrf.mxu0
        %2689 = vdwg.mxu0
        %v2691 = vsel %vm245, %v475, 0
        %v2694 = vsel %vm245, %v2448, 0
        %v2697 = vsel %vm245, %v2449, 0
        %v2700 = vsel %vm245, %v2450, 0
        %v2703 = vsel %vm245, %v2451, 0
        %v2706 = vsel %vm245, %v2452, 0
        %v2709 = vsel %vm245, %v2453, 0
        %v2712 = vsel %vm245, %v2454, 0
        %v2715 = vsel %vm245, %v2455, 0
        %2717 = vmatprep.subr.mxu0 0.0
        %2718 = vmatpush1.xpose.msra.mxu0 0.0
        %2719 = vmatprep.subr.mxu0 0.0
        %2720 = vmatpush1.xpose.msra.mxu0 0.0
        %2721 = vmatprep.subr.mxu0 0.0
        %2722 = vmatpush1.xpose.msra.mxu0 0.0
        %2723 = vmatprep.subr.mxu0 0.0
        %2724 = vmatpush1.xpose.msra.mxu0 0.0
        %2725 = vmatprep.subr.mxu0 0.0
        %2726 = vmatpush1.xpose.msra.mxu0 0.0
        %2727 = vmatprep.subr.mxu0 0.0
        %2728 = vmatpush1.xpose.msra.mxu0 0.0
        %2729 = vmatprep.subr.mxu0 0.0
        %2730 = vmatpush1.xpose.msra.mxu0 0.0
        %2731 = vmatprep.subr.mxu0 0.0
        %2732 = vmatpush1.xpose.msra.mxu0 0.0
        %2733 = vmatprep.subr.mxu0 0.0
        %2734 = vmatpush1.xpose.msra.mxu0 %v2715
        %2735 = vmatprep.subr.mxu0 0.0
        %2736 = vmatpush1.xpose.msra.mxu0 %v2712
        %2737 = vmatprep.subr.mxu0 0.0
        %2738 = vmatpush1.xpose.msra.mxu0 %v2709
        %2739 = vmatprep.subr.mxu0 0.0
        %2740 = vmatpush1.xpose.msra.mxu0 %v2706
        %2741 = vmatprep.subr.mxu0 0.0
        %2742 = vmatpush1.xpose.msra.mxu0 %v2703
        %2743 = vmatprep.subr.mxu0 0.0
        %2744 = vmatpush1.xpose.msra.mxu0 %v2700
        %2745 = vmatprep.subr.mxu0 0.0
        %2746 = vmatpush1.xpose.msra.mxu0 %v2697
        %2747 = vmatprep.subr.mxu0 0.0
        %2748 = vmatpush1.xpose.msra.mxu0 %v2694
        %2749 = vmatprep.subr.mxu0 0.0
        %2750 = vmatpush2.xpose.msra.mxu0 0.0
        %2751 = vmatprep.subr.mxu0 0.0
        %2752 = vmatpush2.xpose.msra.mxu0 0.0
        %2753 = vmatprep.subr.mxu0 0.0
        %2754 = vmatpush2.xpose.msra.mxu0 0.0
        %2755 = vmatprep.subr.mxu0 0.0
        %2756 = vmatpush2.xpose.msra.mxu0 0.0
        %2757 = vmatprep.subr.mxu0 0.0
        %2758 = vmatpush2.xpose.msra.mxu0 0.0
        %2759 = vmatprep.subr.mxu0 0.0
        %2760 = vmatpush2.xpose.msra.mxu0 0.0
        %2761 = vmatprep.subr.mxu0 0.0
        %2762 = vmatpush2.xpose.msra.mxu0 0.0
        %2763 = vmatprep.subr.mxu0 0.0
        %2764 = vmatpush2.xpose.msra.mxu0 0.0
        %2765 = vmatprep.subr.mxu0 0.0
        %2766 = vmatpush2.xpose.msra.mxu0 0.0
        %2767 = vmatprep.subr.mxu0 0.0
        %2768 = vmatpush2.xpose.msra.mxu0 0.0
        %2769 = vmatprep.subr.mxu0 0.0
        %2770 = vmatpush2.xpose.msra.mxu0 0.0
        %2771 = vmatprep.subr.mxu0 0.0
        %2772 = vmatpush2.xpose.msra.mxu0 0.0
        %2773 = vmatprep.subr.mxu0 0.0
        %2774 = vmatpush2.xpose.msra.mxu0 0.0
        %2775 = vmatprep.subr.mxu0 0.0
        %2776 = vmatpush2.xpose.msra.mxu0 0.0
        %2777 = vmatprep.subr.mxu0 0.0
        %2778 = vmatpush2.xpose.msra.mxu0 0.0
        %2779 = vmatprep.subr.mxu0 0.0
        %2780 = vmatpush2.xpose.msra.mxu0 0.0
        %2781 = vmatprep.mubr.f32.mxu0 0.0
        %2782 = vmatmul.mubr.f32.gmra.mxu0 %v2691
        %v2783 = vpop.f32.mrf.mxu0
        %v2784 = vadd.f32 0.0, %v2783
        %v2785 = vpop.f32.mrf.mxu0
        %2786 = vdwg.mxu0
        %v2788 = vsel %vm245, %v480, 0
        %v2791 = vsel %vm245, %v2456, 0
        %v2794 = vsel %vm245, %v2457, 0
        %v2797 = vsel %vm245, %v2458, 0
        %v2800 = vsel %vm245, %v2459, 0
        %v2803 = vsel %vm245, %v2460, 0
        %v2806 = vsel %vm245, %v2461, 0
        %v2809 = vsel %vm245, %v2462, 0
        %v2812 = vsel %vm245, %v2463, 0
        %2814 = vmatprep.subr.mxu0 0.0
        %2815 = vmatpush1.xpose.msra.mxu0 0.0
        %2816 = vmatprep.subr.mxu0 0.0
        %2817 = vmatpush1.xpose.msra.mxu0 0.0
        %2818 = vmatprep.subr.mxu0 0.0
        %2819 = vmatpush1.xpose.msra.mxu0 0.0
        %2820 = vmatprep.subr.mxu0 0.0
        %2821 = vmatpush1.xpose.msra.mxu0 0.0
        %2822 = vmatprep.subr.mxu0 0.0
        %2823 = vmatpush1.xpose.msra.mxu0 0.0
        %2824 = vmatprep.subr.mxu0 0.0
        %2825 = vmatpush1.xpose.msra.mxu0 0.0
        %2826 = vmatprep.subr.mxu0 0.0
        %2827 = vmatpush1.xpose.msra.mxu0 0.0
        %2828 = vmatprep.subr.mxu0 0.0
        %2829 = vmatpush1.xpose.msra.mxu0 0.0
        %2830 = vmatprep.subr.mxu0 0.0
        %2831 = vmatpush1.xpose.msra.mxu0 %v2812
        %2832 = vmatprep.subr.mxu0 0.0
        %2833 = vmatpush1.xpose.msra.mxu0 %v2809
        %2834 = vmatprep.subr.mxu0 0.0
        %2835 = vmatpush1.xpose.msra.mxu0 %v2806
        %2836 = vmatprep.subr.mxu0 0.0
        %2837 = vmatpush1.xpose.msra.mxu0 %v2803
        %2838 = vmatprep.subr.mxu0 0.0
        %2839 = vmatpush1.xpose.msra.mxu0 %v2800
        %2840 = vmatprep.subr.mxu0 0.0
        %2841 = vmatpush1.xpose.msra.mxu0 %v2797
        %2842 = vmatprep.subr.mxu0 0.0
        %2843 = vmatpush1.xpose.msra.mxu0 %v2794
        %2844 = vmatprep.subr.mxu0 0.0
        %2845 = vmatpush1.xpose.msra.mxu0 %v2791
        %2846 = vmatprep.subr.mxu0 0.0
        %2847 = vmatpush2.xpose.msra.mxu0 0.0
        %2848 = vmatprep.subr.mxu0 0.0
        %2849 = vmatpush2.xpose.msra.mxu0 0.0
        %2850 = vmatprep.subr.mxu0 0.0
        %2851 = vmatpush2.xpose.msra.mxu0 0.0
        %2852 = vmatprep.subr.mxu0 0.0
        %2853 = vmatpush2.xpose.msra.mxu0 0.0
        %2854 = vmatprep.subr.mxu0 0.0
        %2855 = vmatpush2.xpose.msra.mxu0 0.0
        %2856 = vmatprep.subr.mxu0 0.0
        %2857 = vmatpush2.xpose.msra.mxu0 0.0
        %2858 = vmatprep.subr.mxu0 0.0
        %2859 = vmatpush2.xpose.msra.mxu0 0.0
        %2860 = vmatprep.subr.mxu0 0.0
        %2861 = vmatpush2.xpose.msra.mxu0 0.0
        %2862 = vmatprep.subr.mxu0 0.0
        %2863 = vmatpush2.xpose.msra.mxu0 0.0
        %2864 = vmatprep.subr.mxu0 0.0
        %2865 = vmatpush2.xpose.msra.mxu0 0.0
        %2866 = vmatprep.subr.mxu0 0.0
        %2867 = vmatpush2.xpose.msra.mxu0 0.0
        %2868 = vmatprep.subr.mxu0 0.0
        %2869 = vmatpush2.xpose.msra.mxu0 0.0
        %2870 = vmatprep.subr.mxu0 0.0
        %2871 = vmatpush2.xpose.msra.mxu0 0.0
        %2872 = vmatprep.subr.mxu0 0.0
        %2873 = vmatpush2.xpose.msra.mxu0 0.0
        %2874 = vmatprep.subr.mxu0 0.0
        %2875 = vmatpush2.xpose.msra.mxu0 0.0
        %2876 = vmatprep.subr.mxu0 0.0
        %2877 = vmatpush2.xpose.msra.mxu0 0.0
        %2878 = vmatprep.mubr.f32.mxu0 0.0
        %2879 = vmatmul.mubr.f32.gmra.mxu0 %v2788
        %v2880 = vpop.f32.mrf.mxu0
        %v2881 = vadd.f32 0.0, %v2880
        %v2882 = vpop.f32.mrf.mxu0
        %2883 = vdwg.mxu0
        %v2885 = vsel %vm245, %v485, 0
        %v2888 = vsel %vm245, %v2464, 0
        %v2891 = vsel %vm245, %v2465, 0
        %v2894 = vsel %vm245, %v2466, 0
        %v2897 = vsel %vm245, %v2467, 0
        %v2900 = vsel %vm245, %v2468, 0
        %v2903 = vsel %vm245, %v2469, 0
        %v2906 = vsel %vm245, %v2470, 0
        %v2909 = vsel %vm245, %v2471, 0
        %2911 = vmatprep.subr.mxu0 0.0
        %2912 = vmatpush1.xpose.msra.mxu0 0.0
        %2913 = vmatprep.subr.mxu0 0.0
        %2914 = vmatpush1.xpose.msra.mxu0 0.0
        %2915 = vmatprep.subr.mxu0 0.0
        %2916 = vmatpush1.xpose.msra.mxu0 0.0
        %2917 = vmatprep.subr.mxu0 0.0
        %2918 = vmatpush1.xpose.msra.mxu0 0.0
        %2919 = vmatprep.subr.mxu0 0.0
        %2920 = vmatpush1.xpose.msra.mxu0 0.0
        %2921 = vmatprep.subr.mxu0 0.0
        %2922 = vmatpush1.xpose.msra.mxu0 0.0
        %2923 = vmatprep.subr.mxu0 0.0
        %2924 = vmatpush1.xpose.msra.mxu0 0.0
        %2925 = vmatprep.subr.mxu0 0.0
        %2926 = vmatpush1.xpose.msra.mxu0 0.0
        %2927 = vmatprep.subr.mxu0 0.0
        %2928 = vmatpush1.xpose.msra.mxu0 %v2909
        %2929 = vmatprep.subr.mxu0 0.0
        %2930 = vmatpush1.xpose.msra.mxu0 %v2906
        %2931 = vmatprep.subr.mxu0 0.0
        %2932 = vmatpush1.xpose.msra.mxu0 %v2903
        %2933 = vmatprep.subr.mxu0 0.0
        %2934 = vmatpush1.xpose.msra.mxu0 %v2900
        %2935 = vmatprep.subr.mxu0 0.0
        %2936 = vmatpush1.xpose.msra.mxu0 %v2897
        %2937 = vmatprep.subr.mxu0 0.0
        %2938 = vmatpush1.xpose.msra.mxu0 %v2894
        %2939 = vmatprep.subr.mxu0 0.0
        %2940 = vmatpush1.xpose.msra.mxu0 %v2891
        %2941 = vmatprep.subr.mxu0 0.0
        %2942 = vmatpush1.xpose.msra.mxu0 %v2888
        %2943 = vmatprep.subr.mxu0 0.0
        %2944 = vmatpush2.xpose.msra.mxu0 0.0
        %2945 = vmatprep.subr.mxu0 0.0
        %2946 = vmatpush2.xpose.msra.mxu0 0.0
        %2947 = vmatprep.subr.mxu0 0.0
        %2948 = vmatpush2.xpose.msra.mxu0 0.0
        %2949 = vmatprep.subr.mxu0 0.0
        %2950 = vmatpush2.xpose.msra.mxu0 0.0
        %2951 = vmatprep.subr.mxu0 0.0
        %2952 = vmatpush2.xpose.msra.mxu0 0.0
        %2953 = vmatprep.subr.mxu0 0.0
        %2954 = vmatpush2.xpose.msra.mxu0 0.0
        %2955 = vmatprep.subr.mxu0 0.0
        %2956 = vmatpush2.xpose.msra.mxu0 0.0
        %2957 = vmatprep.subr.mxu0 0.0
        %2958 = vmatpush2.xpose.msra.mxu0 0.0
        %2959 = vmatprep.subr.mxu0 0.0
        %2960 = vmatpush2.xpose.msra.mxu0 0.0
        %2961 = vmatprep.subr.mxu0 0.0
        %2962 = vmatpush2.xpose.msra.mxu0 0.0
        %2963 = vmatprep.subr.mxu0 0.0
        %2964 = vmatpush2.xpose.msra.mxu0 0.0
        %2965 = vmatprep.subr.mxu0 0.0
        %2966 = vmatpush2.xpose.msra.mxu0 0.0
        %2967 = vmatprep.subr.mxu0 0.0
        %2968 = vmatpush2.xpose.msra.mxu0 0.0
        %2969 = vmatprep.subr.mxu0 0.0
        %2970 = vmatpush2.xpose.msra.mxu0 0.0
        %2971 = vmatprep.subr.mxu0 0.0
        %2972 = vmatpush2.xpose.msra.mxu0 0.0
        %2973 = vmatprep.subr.mxu0 0.0
        %2974 = vmatpush2.xpose.msra.mxu0 0.0
        %2975 = vmatprep.mubr.f32.mxu0 0.0
        %2976 = vmatmul.mubr.f32.gmra.mxu0 %v2885
        %v2977 = vpop.f32.mrf.mxu0
        %v2978 = vadd.f32 0.0, %v2977
        %v2979 = vpop.f32.mrf.mxu0
        %2980 = vdwg.mxu0
        %v2982 = vsel %vm245, %v490, 0
        %v2985 = vsel %vm245, %v2472, 0
        %v2988 = vsel %vm245, %v2473, 0
        %v2991 = vsel %vm245, %v2474, 0
        %v2994 = vsel %vm245, %v2475, 0
        %v2997 = vsel %vm245, %v2476, 0
        %v3000 = vsel %vm245, %v2477, 0
        %v3003 = vsel %vm245, %v2478, 0
        %v3006 = vsel %vm245, %v2479, 0
        %3008 = vmatprep.subr.mxu0 0.0
        %3009 = vmatpush1.xpose.msra.mxu0 0.0
        %3010 = vmatprep.subr.mxu0 0.0
        %3011 = vmatpush1.xpose.msra.mxu0 0.0
        %3012 = vmatprep.subr.mxu0 0.0
        %3013 = vmatpush1.xpose.msra.mxu0 0.0
        %3014 = vmatprep.subr.mxu0 0.0
        %3015 = vmatpush1.xpose.msra.mxu0 0.0
        %3016 = vmatprep.subr.mxu0 0.0
        %3017 = vmatpush1.xpose.msra.mxu0 0.0
        %3018 = vmatprep.subr.mxu0 0.0
        %3019 = vmatpush1.xpose.msra.mxu0 0.0
        %3020 = vmatprep.subr.mxu0 0.0
        %3021 = vmatpush1.xpose.msra.mxu0 0.0
        %3022 = vmatprep.subr.mxu0 0.0
        %3023 = vmatpush1.xpose.msra.mxu0 0.0
        %3024 = vmatprep.subr.mxu0 0.0
        %3025 = vmatpush1.xpose.msra.mxu0 %v3006
        %3026 = vmatprep.subr.mxu0 0.0
        %3027 = vmatpush1.xpose.msra.mxu0 %v3003
        %3028 = vmatprep.subr.mxu0 0.0
        %3029 = vmatpush1.xpose.msra.mxu0 %v3000
        %3030 = vmatprep.subr.mxu0 0.0
        %3031 = vmatpush1.xpose.msra.mxu0 %v2997
        %3032 = vmatprep.subr.mxu0 0.0
        %3033 = vmatpush1.xpose.msra.mxu0 %v2994
        %3034 = vmatprep.subr.mxu0 0.0
        %3035 = vmatpush1.xpose.msra.mxu0 %v2991
        %3036 = vmatprep.subr.mxu0 0.0
        %3037 = vmatpush1.xpose.msra.mxu0 %v2988
        %3038 = vmatprep.subr.mxu0 0.0
        %3039 = vmatpush1.xpose.msra.mxu0 %v2985
        %3040 = vmatprep.subr.mxu0 0.0
        %3041 = vmatpush2.xpose.msra.mxu0 0.0
        %3042 = vmatprep.subr.mxu0 0.0
        %3043 = vmatpush2.xpose.msra.mxu0 0.0
        %3044 = vmatprep.subr.mxu0 0.0
        %3045 = vmatpush2.xpose.msra.mxu0 0.0
        %3046 = vmatprep.subr.mxu0 0.0
        %3047 = vmatpush2.xpose.msra.mxu0 0.0
        %3048 = vmatprep.subr.mxu0 0.0
        %3049 = vmatpush2.xpose.msra.mxu0 0.0
        %3050 = vmatprep.subr.mxu0 0.0
        %3051 = vmatpush2.xpose.msra.mxu0 0.0
        %3052 = vmatprep.subr.mxu0 0.0
        %3053 = vmatpush2.xpose.msra.mxu0 0.0
        %3054 = vmatprep.subr.mxu0 0.0
        %3055 = vmatpush2.xpose.msra.mxu0 0.0
        %3056 = vmatprep.subr.mxu0 0.0
        %3057 = vmatpush2.xpose.msra.mxu0 0.0
        %3058 = vmatprep.subr.mxu0 0.0
        %3059 = vmatpush2.xpose.msra.mxu0 0.0
        %3060 = vmatprep.subr.mxu0 0.0
        %3061 = vmatpush2.xpose.msra.mxu0 0.0
        %3062 = vmatprep.subr.mxu0 0.0
        %3063 = vmatpush2.xpose.msra.mxu0 0.0
        %3064 = vmatprep.subr.mxu0 0.0
        %3065 = vmatpush2.xpose.msra.mxu0 0.0
        %3066 = vmatprep.subr.mxu0 0.0
        %3067 = vmatpush2.xpose.msra.mxu0 0.0
        %3068 = vmatprep.subr.mxu0 0.0
        %3069 = vmatpush2.xpose.msra.mxu0 0.0
        %3070 = vmatprep.subr.mxu0 0.0
        %3071 = vmatpush2.xpose.msra.mxu0 0.0
        %3072 = vmatprep.mubr.f32.mxu0 0.0
        %3073 = vmatmul.mubr.f32.gmra.mxu0 %v2982
        %v3074 = vpop.f32.mrf.mxu0
        %v3075 = vadd.f32 0.0, %v3074
        %v3076 = vpop.f32.mrf.mxu0
        %3077 = vdwg.mxu0
        %v3079 = vsel %vm245, %v495, 0
        %v3082 = vsel %vm245, %v2480, 0
        %v3085 = vsel %vm245, %v2481, 0
        %v3088 = vsel %vm245, %v2482, 0
        %v3091 = vsel %vm245, %v2483, 0
        %v3094 = vsel %vm245, %v2484, 0
        %v3097 = vsel %vm245, %v2485, 0
        %v3100 = vsel %vm245, %v2486, 0
        %v3103 = vsel %vm245, %v2487, 0
        %3105 = vmatprep.subr.mxu0 0.0
        %3106 = vmatpush1.xpose.msra.mxu0 0.0
        %3107 = vmatprep.subr.mxu0 0.0
        %3108 = vmatpush1.xpose.msra.mxu0 0.0
        %3109 = vmatprep.subr.mxu0 0.0
        %3110 = vmatpush1.xpose.msra.mxu0 0.0
        %3111 = vmatprep.subr.mxu0 0.0
        %3112 = vmatpush1.xpose.msra.mxu0 0.0
        %3113 = vmatprep.subr.mxu0 0.0
        %3114 = vmatpush1.xpose.msra.mxu0 0.0
        %3115 = vmatprep.subr.mxu0 0.0
        %3116 = vmatpush1.xpose.msra.mxu0 0.0
        %3117 = vmatprep.subr.mxu0 0.0
        %3118 = vmatpush1.xpose.msra.mxu0 0.0
        %3119 = vmatprep.subr.mxu0 0.0
        %3120 = vmatpush1.xpose.msra.mxu0 0.0
        %3121 = vmatprep.subr.mxu0 0.0
        %3122 = vmatpush1.xpose.msra.mxu0 %v3103
        %3123 = vmatprep.subr.mxu0 0.0
        %3124 = vmatpush1.xpose.msra.mxu0 %v3100
        %3125 = vmatprep.subr.mxu0 0.0
        %3126 = vmatpush1.xpose.msra.mxu0 %v3097
        %3127 = vmatprep.subr.mxu0 0.0
        %3128 = vmatpush1.xpose.msra.mxu0 %v3094
        %3129 = vmatprep.subr.mxu0 0.0
        %3130 = vmatpush1.xpose.msra.mxu0 %v3091
        %3131 = vmatprep.subr.mxu0 0.0
        %3132 = vmatpush1.xpose.msra.mxu0 %v3088
        %3133 = vmatprep.subr.mxu0 0.0
        %3134 = vmatpush1.xpose.msra.mxu0 %v3085
        %3135 = vmatprep.subr.mxu0 0.0
        %3136 = vmatpush1.xpose.msra.mxu0 %v3082
        %3137 = vmatprep.subr.mxu0 0.0
        %3138 = vmatpush2.xpose.msra.mxu0 0.0
        %3139 = vmatprep.subr.mxu0 0.0
        %3140 = vmatpush2.xpose.msra.mxu0 0.0
        %3141 = vmatprep.subr.mxu0 0.0
        %3142 = vmatpush2.xpose.msra.mxu0 0.0
        %3143 = vmatprep.subr.mxu0 0.0
        %3144 = vmatpush2.xpose.msra.mxu0 0.0
        %3145 = vmatprep.subr.mxu0 0.0
        %3146 = vmatpush2.xpose.msra.mxu0 0.0
        %3147 = vmatprep.subr.mxu0 0.0
        %3148 = vmatpush2.xpose.msra.mxu0 0.0
        %3149 = vmatprep.subr.mxu0 0.0
        %3150 = vmatpush2.xpose.msra.mxu0 0.0
        %3151 = vmatprep.subr.mxu0 0.0
        %3152 = vmatpush2.xpose.msra.mxu0 0.0
        %3153 = vmatprep.subr.mxu0 0.0
        %3154 = vmatpush2.xpose.msra.mxu0 0.0
        %3155 = vmatprep.subr.mxu0 0.0
        %3156 = vmatpush2.xpose.msra.mxu0 0.0
        %3157 = vmatprep.subr.mxu0 0.0
        %3158 = vmatpush2.xpose.msra.mxu0 0.0
        %3159 = vmatprep.subr.mxu0 0.0
        %3160 = vmatpush2.xpose.msra.mxu0 0.0
        %3161 = vmatprep.subr.mxu0 0.0
        %3162 = vmatpush2.xpose.msra.mxu0 0.0
        %3163 = vmatprep.subr.mxu0 0.0
        %3164 = vmatpush2.xpose.msra.mxu0 0.0
        %3165 = vmatprep.subr.mxu0 0.0
        %3166 = vmatpush2.xpose.msra.mxu0 0.0
        %3167 = vmatprep.subr.mxu0 0.0
        %3168 = vmatpush2.xpose.msra.mxu0 0.0
        %3169 = vmatprep.mubr.f32.mxu0 0.0
        %3170 = vmatmul.mubr.f32.gmra.mxu0 %v3079
        %v3171 = vpop.f32.mrf.mxu0
        %v3172 = vadd.f32 0.0, %v3171
        %v3173 = vpop.f32.mrf.mxu0
        %3174 = vdwg.mxu0
        %v3176 = vsel %vm245, %v500, 0
        %v3179 = vsel %vm245, %v2488, 0
        %v3182 = vsel %vm245, %v2489, 0
        %v3185 = vsel %vm245, %v2490, 0
        %v3188 = vsel %vm245, %v2491, 0
        %v3191 = vsel %vm245, %v2492, 0
        %v3194 = vsel %vm245, %v2493, 0
        %v3197 = vsel %vm245, %v2494, 0
        %v3200 = vsel %vm245, %v2495, 0
        %3202 = vmatprep.subr.mxu0 0.0
        %3203 = vmatpush1.xpose.msra.mxu0 0.0
        %3204 = vmatprep.subr.mxu0 0.0
        %3205 = vmatpush1.xpose.msra.mxu0 0.0
        %3206 = vmatprep.subr.mxu0 0.0
        %3207 = vmatpush1.xpose.msra.mxu0 0.0
        %3208 = vmatprep.subr.mxu0 0.0
        %3209 = vmatpush1.xpose.msra.mxu0 0.0
        %3210 = vmatprep.subr.mxu0 0.0
        %3211 = vmatpush1.xpose.msra.mxu0 0.0
        %3212 = vmatprep.subr.mxu0 0.0
        %3213 = vmatpush1.xpose.msra.mxu0 0.0
        %3214 = vmatprep.subr.mxu0 0.0
        %3215 = vmatpush1.xpose.msra.mxu0 0.0
        %3216 = vmatprep.subr.mxu0 0.0
        %3217 = vmatpush1.xpose.msra.mxu0 0.0
        %3218 = vmatprep.subr.mxu0 0.0
        %3219 = vmatpush1.xpose.msra.mxu0 %v3200
        %3220 = vmatprep.subr.mxu0 0.0
        %3221 = vmatpush1.xpose.msra.mxu0 %v3197
        %3222 = vmatprep.subr.mxu0 0.0
        %3223 = vmatpush1.xpose.msra.mxu0 %v3194
        %3224 = vmatprep.subr.mxu0 0.0
        %3225 = vmatpush1.xpose.msra.mxu0 %v3191
        %3226 = vmatprep.subr.mxu0 0.0
        %3227 = vmatpush1.xpose.msra.mxu0 %v3188
        %3228 = vmatprep.subr.mxu0 0.0
        %3229 = vmatpush1.xpose.msra.mxu0 %v3185
        %3230 = vmatprep.subr.mxu0 0.0
        %3231 = vmatpush1.xpose.msra.mxu0 %v3182
        %3232 = vmatprep.subr.mxu0 0.0
        %3233 = vmatpush1.xpose.msra.mxu0 %v3179
        %3234 = vmatprep.subr.mxu0 0.0
        %3235 = vmatpush2.xpose.msra.mxu0 0.0
        %3236 = vmatprep.subr.mxu0 0.0
        %3237 = vmatpush2.xpose.msra.mxu0 0.0
        %3238 = vmatprep.subr.mxu0 0.0
        %3239 = vmatpush2.xpose.msra.mxu0 0.0
        %3240 = vmatprep.subr.mxu0 0.0
        %3241 = vmatpush2.xpose.msra.mxu0 0.0
        %3242 = vmatprep.subr.mxu0 0.0
        %3243 = vmatpush2.xpose.msra.mxu0 0.0
        %3244 = vmatprep.subr.mxu0 0.0
        %3245 = vmatpush2.xpose.msra.mxu0 0.0
        %3246 = vmatprep.subr.mxu0 0.0
        %3247 = vmatpush2.xpose.msra.mxu0 0.0
        %3248 = vmatprep.subr.mxu0 0.0
        %3249 = vmatpush2.xpose.msra.mxu0 0.0
        %3250 = vmatprep.subr.mxu0 0.0
        %3251 = vmatpush2.xpose.msra.mxu0 0.0
        %3252 = vmatprep.subr.mxu0 0.0
        %3253 = vmatpush2.xpose.msra.mxu0 0.0
        %3254 = vmatprep.subr.mxu0 0.0
        %3255 = vmatpush2.xpose.msra.mxu0 0.0
        %3256 = vmatprep.subr.mxu0 0.0
        %3257 = vmatpush2.xpose.msra.mxu0 0.0
        %3258 = vmatprep.subr.mxu0 0.0
        %3259 = vmatpush2.xpose.msra.mxu0 0.0
        %3260 = vmatprep.subr.mxu0 0.0
        %3261 = vmatpush2.xpose.msra.mxu0 0.0
        %3262 = vmatprep.subr.mxu0 0.0
        %3263 = vmatpush2.xpose.msra.mxu0 0.0
        %3264 = vmatprep.subr.mxu0 0.0
        %3265 = vmatpush2.xpose.msra.mxu0 0.0
        %3266 = vmatprep.mubr.f32.mxu0 0.0
        %3267 = vmatmul.mubr.f32.gmra.mxu0 %v3176
        %v3268 = vpop.f32.mrf.mxu0
        %v3269 = vadd.f32 0.0, %v3268
        %v3270 = vpop.f32.mrf.mxu0
        %3271 = vdwg.mxu0
        %v3272 = vld [vmem:[#allocation2] sm:$0xff]
        %v3273 = vld [vmem:[#allocation2 + $0x8] sm:$0xff]
        %v3274 = vld [vmem:[#allocation2 + $0x10] sm:$0xff]
        %v3275 = vld [vmem:[#allocation2 + $0x18] sm:$0xff]
        %v3276 = vld [vmem:[#allocation2 + $0x20] sm:$0xff]
        %v3277 = vld [vmem:[#allocation2 + $0x28] sm:$0xff]
        %v3278 = vld [vmem:[#allocation2 + $0x30] sm:$0xff]
        %v3279 = vld [vmem:[#allocation2 + $0x38] sm:$0xff]
        %v3280 = vld [vmem:[%s3] sm:$0xff]
        %v3281 = vld [vmem:[%s3 + $0x8] sm:$0xff]
        %v3282 = vld [vmem:[%s3 + $0x10] sm:$0xff]
        %v3283 = vld [vmem:[%s3 + $0x18] sm:$0xff]
        %v3284 = vld [vmem:[%s3 + $0x20] sm:$0xff]
        %v3285 = vld [vmem:[%s3 + $0x28] sm:$0xff]
        %v3286 = vld [vmem:[%s3 + $0x30] sm:$0xff]
        %v3287 = vld [vmem:[%s3 + $0x38] sm:$0xff]
        %3289 = vset.pattern.permute.xlu0 0
        %3290 = vperm.xlu0 %3289, %v3280
        %v3291 = vpop.permute.xlu0 %3290
        %3294 = vset.pattern.permute.xlu0 0
        %3295 = vperm.xlu0 %3294, %v3281
        %v3296 = vpop.permute.xlu0 %3295
        %3299 = vset.pattern.permute.xlu0 0
        %3300 = vperm.xlu0 %3299, %v3282
        %v3301 = vpop.permute.xlu0 %3300
        %3304 = vset.pattern.permute.xlu0 0
        %3305 = vperm.xlu0 %3304, %v3283
        %v3306 = vpop.permute.xlu0 %3305
        %3309 = vset.pattern.permute.xlu0 0
        %3310 = vperm.xlu0 %3309, %v3284
        %v3311 = vpop.permute.xlu0 %3310
        %3314 = vset.pattern.permute.xlu0 0
        %3315 = vperm.xlu0 %3314, %v3285
        %v3316 = vpop.permute.xlu0 %3315
        %3319 = vset.pattern.permute.xlu0 0
        %3320 = vperm.xlu0 %3319, %v3286
        %v3321 = vpop.permute.xlu0 %3320
        %3324 = vset.pattern.permute.xlu0 0
        %3325 = vperm.xlu0 %3324, %v3287
        %v3326 = vpop.permute.xlu0 %3325
        %v3329 = vsel %vm245, %v3272, 0
        %v3332 = vsel %vm245, %v3273, 0
        %v3335 = vsel %vm245, %v3274, 0
        %v3338 = vsel %vm245, %v3275, 0
        %v3341 = vsel %vm245, %v3276, 0
        %v3344 = vsel %vm245, %v3277, 0
        %v3347 = vsel %vm245, %v3278, 0
        %v3350 = vsel %vm245, %v3279, 0
        %3352 = vmatprep.subr.mxu0 0.0
        %3353 = vmatpush1.msra.mxu0 0.0
        %3354 = vmatprep.subr.mxu0 0.0
        %3355 = vmatpush1.msra.mxu0 0.0
        %3356 = vmatprep.subr.mxu0 0.0
        %3357 = vmatpush1.msra.mxu0 0.0
        %3358 = vmatprep.subr.mxu0 0.0
        %3359 = vmatpush1.msra.mxu0 0.0
        %3360 = vmatprep.subr.mxu0 0.0
        %3361 = vmatpush1.msra.mxu0 0.0
        %3362 = vmatprep.subr.mxu0 0.0
        %3363 = vmatpush1.msra.mxu0 0.0
        %3364 = vmatprep.subr.mxu0 0.0
        %3365 = vmatpush1.msra.mxu0 0.0
        %3366 = vmatprep.subr.mxu0 0.0
        %3367 = vmatpush1.msra.mxu0 0.0
        %3368 = vmatprep.subr.mxu0 0.0
        %3369 = vmatpush1.msra.mxu0 %v3269
        %3370 = vmatprep.subr.mxu0 0.0
        %3371 = vmatpush1.msra.mxu0 %v3172
        %3372 = vmatprep.subr.mxu0 0.0
        %3373 = vmatpush1.msra.mxu0 %v3075
        %3374 = vmatprep.subr.mxu0 0.0
        %3375 = vmatpush1.msra.mxu0 %v2978
        %3376 = vmatprep.subr.mxu0 0.0
        %3377 = vmatpush1.msra.mxu0 %v2881
        %3378 = vmatprep.subr.mxu0 0.0
        %3379 = vmatpush1.msra.mxu0 %v2784
        %3380 = vmatprep.subr.mxu0 0.0
        %3381 = vmatpush1.msra.mxu0 %v2687
        %3382 = vmatprep.subr.mxu0 0.0
        %3383 = vmatpush1.msra.mxu0 %v2590
        %3384 = vmatprep.subr.mxu0 0.0
        %3385 = vmatpush2.msra.mxu0 0.0
        %3386 = vmatprep.subr.mxu0 0.0
        %3387 = vmatpush2.msra.mxu0 0.0
        %3388 = vmatprep.subr.mxu0 0.0
        %3389 = vmatpush2.msra.mxu0 0.0
        %3390 = vmatprep.subr.mxu0 0.0
        %3391 = vmatpush2.msra.mxu0 0.0
        %3392 = vmatprep.subr.mxu0 0.0
        %3393 = vmatpush2.msra.mxu0 0.0
        %3394 = vmatprep.subr.mxu0 0.0
        %3395 = vmatpush2.msra.mxu0 0.0
        %3396 = vmatprep.subr.mxu0 0.0
        %3397 = vmatpush2.msra.mxu0 0.0
        %3398 = vmatprep.subr.mxu0 0.0
        %3399 = vmatpush2.msra.mxu0 0.0
        %3400 = vmatprep.subr.mxu0 0.0
        %3401 = vmatpush2.msra.mxu0 0.0
        %3402 = vmatprep.subr.mxu0 0.0
        %3403 = vmatpush2.msra.mxu0 0.0
        %3404 = vmatprep.subr.mxu0 0.0
        %3405 = vmatpush2.msra.mxu0 0.0
        %3406 = vmatprep.subr.mxu0 0.0
        %3407 = vmatpush2.msra.mxu0 0.0
        %3408 = vmatprep.subr.mxu0 0.0
        %3409 = vmatpush2.msra.mxu0 0.0
        %3410 = vmatprep.subr.mxu0 0.0
        %3411 = vmatpush2.msra.mxu0 0.0
        %3412 = vmatprep.subr.mxu0 0.0
        %3413 = vmatpush2.msra.mxu0 0.0
        %3414 = vmatprep.subr.mxu0 0.0
        %3415 = vmatpush2.msra.mxu0 0.0
        %3416 = vmatprep.mubr.f32.mxu0 0.0
        %3417 = vmatmul.mubr.f32.gmra.mxu0 %v3329
        %v3418 = vpop.f32.mrf.mxu0
        %v3419 = vadd.f32 %v3291, %v3418
        %v3420 = vpop.f32.mrf.mxu0
        %3421 = vmatprep.mubr.f32.mxu0 0.0
        %3422 = vmatmul.mubr.f32.gmra.mxu0 %v3332
        %v3423 = vpop.f32.mrf.mxu0
        %v3424 = vadd.f32 %v3296, %v3423
        %v3425 = vpop.f32.mrf.mxu0
        %3426 = vmatprep.mubr.f32.mxu0 0.0
        %3427 = vmatmul.mubr.f32.gmra.mxu0 %v3335
        %v3428 = vpop.f32.mrf.mxu0
        %v3429 = vadd.f32 %v3301, %v3428
        %v3430 = vpop.f32.mrf.mxu0
        %3431 = vmatprep.mubr.f32.mxu0 0.0
        %3432 = vmatmul.mubr.f32.gmra.mxu0 %v3338
        %v3433 = vpop.f32.mrf.mxu0
        %v3434 = vadd.f32 %v3306, %v3433
        %v3435 = vpop.f32.mrf.mxu0
        %3436 = vmatprep.mubr.f32.mxu0 0.0
        %3437 = vmatmul.mubr.f32.gmra.mxu0 %v3341
        %v3438 = vpop.f32.mrf.mxu0
        %v3439 = vadd.f32 %v3311, %v3438
        %v3440 = vpop.f32.mrf.mxu0
        %3441 = vmatprep.mubr.f32.mxu0 0.0
        %3442 = vmatmul.mubr.f32.gmra.mxu0 %v3344
        %v3443 = vpop.f32.mrf.mxu0
        %v3444 = vadd.f32 %v3316, %v3443
        %v3445 = vpop.f32.mrf.mxu0
        %3446 = vmatprep.mubr.f32.mxu0 0.0
        %3447 = vmatmul.mubr.f32.gmra.mxu0 %v3347
        %v3448 = vpop.f32.mrf.mxu0
        %v3449 = vadd.f32 %v3321, %v3448
        %v3450 = vpop.f32.mrf.mxu0
        %3451 = vmatprep.mubr.f32.mxu0 0.0
        %3452 = vmatmul.mubr.f32.gmra.mxu0 %v3350
        %v3453 = vpop.f32.mrf.mxu0
        %v3454 = vadd.f32 %v3326, %v3453
        %v3455 = vpop.f32.mrf.mxu0
        %3456 = vdwg.mxu0
        %3457 = vst.msk [vmem:[%s212] sm:$0xff] %vm245, %v3419
        %3458 = vst.msk [vmem:[%s212 + $0x8] sm:$0xff] %vm245, %v3424
        %3459 = vst.msk [vmem:[%s212 + $0x10] sm:$0xff] %vm245, %v3429
        %3460 = vst.msk [vmem:[%s212 + $0x18] sm:$0xff] %vm245, %v3434
        %3461 = vst.msk [vmem:[%s212 + $0x20] sm:$0xff] %vm245, %v3439
        %3462 = vst.msk [vmem:[%s212 + $0x28] sm:$0xff] %vm245, %v3444
        %3463 = vst.msk [vmem:[%s212 + $0x30] sm:$0xff] %vm245, %v3449
        %3464 = vst.msk [vmem:[%s212 + $0x38] sm:$0xff] %vm245, %v3454
        %p3465 = scmp.lt.s32.totalorder %s16, 1
        %s3466 = scalar_select %p3465, %s16, 1
        %s3467 = smul.addr %s3466, 8
        %s3468 = smul.addr %s3467, 8
        %s3469 = scalar_lea.vmem %s4, %s3468
        // Predicated region
        $region41: #{attention.1} parent=35 // pred_check
          %p3470 = pneg %p123
        $region42: #{attention.1} parent=35 // pred_check_branch
          %3472 = sbr.rel (%p3470) target = $region44
        $region43: #{attention.1} parent=35 // pred_region
          _
        $region44: #{attention.1} parent=35 // pred_fallthru
          _
      $region36: #{attention.1} parent=5 // pred_fallthru
        _
      %p3473 = scmp.le.s32.totalorder 2, %s11
      // Predicated region
      $region45: #{attention.1} parent=5 // pred_check
        %p3474 = pneg %p3473
      $region46: #{attention.1} parent=5 // pred_check_branch
        %3476 = sbr.rel (%p3474) target = $region48
      $region47: #{attention.1} parent=5 // pred_region
        %s3477 = ssub.s32 %s11, 2
        // Predicated region
        $region49: #{attention.1} parent=47 // pred_check
          %p3478 = pneg %p129
        $region50: #{attention.1} parent=47 // pred_check_branch
          %3480 = sbr.rel (%p3478) target = $region52
        $region51: #{attention.1} parent=47 // pred_region
          %p3481 = scmp.lt.s32.totalorder %s17, 1
          %s3482 = scalar_select %p3481, %s17, 1
          %s3483 = smul.addr %s3482, 8
          %s3484 = smul.addr %s3483, 8
          %s3485 = scalar_lea.vmem %s4, %s3484
        $region52: #{attention.1} parent=47 // pred_fallthru
          _
      $region48: #{attention.1} parent=5 // pred_fallthru
        _
    $region6: #{attention.1} parent=1 // loop_footer
      %s15 = sadd.s32 1, %s11
    $region7: #{attention.1} parent=1 // loop_footer_branch
      %10 = sbr.rel target = $region3
    $region8: #{attention.1} parent=1 // loop_exit
      _
    %3486 = vsyncpa [#allocation3], 1
    %s3487 = scalar_lea.sflag [#allocation3], 1
    %3488 = vsyncpa %s3487, 1

</llo_original>
